<compile_context>
chip_gen: v7x
topology: tpu7x:2x2x1
jax: 0.10.0
libtpu: 0.0.40
codegen_flags: <defaults>
</compile_context>

<pallas_src>
import functools

import numpy as np
import jax
import jax.numpy as jnp
from jax import lax
from jax.experimental import pallas as pl
from jax.experimental.pallas import tpu as pltpu  # noqa: F401  (kept for TPU-specific extensions)

LN_EPS = 1e-5          # nn.LayerNorm default
NEG_BIAS = -1e30       # "masked" additive bias (finite: fully-masked rows give
                       #  uniform weights instead of PyTorch's NaN)


# ----------------------------------------------------------------------------
# In-kernel helpers
# ----------------------------------------------------------------------------
def _layernorm(x, gamma, beta):
    mu = jnp.mean(x, axis=-1, keepdims=True)
    xc = x - mu
    var = jnp.mean(xc * xc, axis=-1, keepdims=True)
    return xc * lax.rsqrt(var + LN_EPS) * gamma + beta


def _linear(x, w_ref, b_ref, compute_dtype):
    # x: (M, E) f32.  w_ref: (E, N), already pre-transposed to (in, out) and
    # pre-cast to compute_dtype by the wrapper; read here, at its single point
    # of use.  Contraction is (1, 0) -> no in-kernel weight transpose.
    y = lax.dot_general(x.astype(compute_dtype), w_ref[...],
                        (((1,), (0,)), ((), ())),
                        preferred_element_type=jnp.float32)
    return y + b_ref[...]


# ----------------------------------------------------------------------------
# Fused kernel: MHA(q=tgt[+qpos], k=(key|memory)[+pos], v=memory)
#               + residual + LayerNorm
# ----------------------------------------------------------------------------
def referring_cross_attn_kernel(*refs, nhead, normalize_before, has_key,
                                has_pos, has_qpos, has_bias, compute_dtype):
    (wq_ref, bq_ref, wk_ref, bk_ref, wv_ref, bv_ref,
     wo_ref, bo_ref, gamma_ref, beta_ref,
     identity_ref, tgt_ref, memory_ref) = refs[:13]
    rest = list(refs[13:])
    out_ref = rest.pop()                               # output ref is last
    key_ref = rest.pop(0) if has_key else None
    pos_ref = rest.pop(0) if has_pos else None
    qpos_ref = rest.pop(0) if has_qpos else None
    bias_ref = rest.pop(0) if has_bias else None

    B, Lq, E = tgt_ref.shape
    S = memory_ref.shape[1]
    H = nhead
    dh = E // H
    scale = 1.0 / float(dh) ** 0.5

    gamma = gamma_ref[...]                             # (1, E) f32
    beta = beta_ref[...]

    # ---- batch folded into the row dim: token-pointwise ops & projections ---
    tgt = tgt_ref[...].reshape(B * Lq, E)              # (B*Lq, E) f32
    mem = memory_ref[...].reshape(B * S, E)            # (B*S,  E) f32

    if normalize_before:                               # forward_pre
        tgt = _layernorm(tgt, gamma, beta)

    q_in = (tgt + qpos_ref[...].reshape(B * Lq, E)) if has_qpos else tgt
    k_src = key_ref[...].reshape(B * S, E) if has_key else mem
    k_in = (k_src + pos_ref[...].reshape(B * S, E)) if has_pos else k_src

    # One MXU pass per weight; 1/sqrt(dh) folded into q.
    q = _linear(q_in, wq_ref, bq_ref, compute_dtype) * scale   # (B*Lq, E) f32
    k = _linear(k_in, wk_ref, bk_ref, compute_dtype)           # (B*S,  E) f32
    v = _linear(mem, wv_ref, bv_ref, compute_dtype)            # (B*S,  E) f32

    # ---- head-major once: (B*H, L, dh) so both dots share batch-dim 0 -------
    qh = q.reshape(B, Lq, H, dh).transpose(0, 2, 1, 3).reshape(B * H, Lq, dh)
    kh = k.reshape(B, S, H, dh).transpose(0, 2, 1, 3).reshape(B * H, S, dh)
    vh = v.reshape(B, S, H, dh).transpose(0, 2, 1, 3).reshape(B * H, S, dh)

    s = lax.dot_general(qh.astype(compute_dtype), kh.astype(compute_dtype),
                        (((2,), (2,)), ((0,), (0,))),
                        preferred_element_type=jnp.float32)    # (B*H, Lq, S)
    if has_bias:
        s = (s.reshape(B, H, Lq, S)
             + bias_ref[...][:, None, :, :]).reshape(B * H, Lq, S)

    # Exact softmax in f32 (no approximate reciprocal).
    m = jnp.max(s, axis=-1, keepdims=True)
    e = jnp.exp(s - m)
    p = e / jnp.sum(e, axis=-1, keepdims=True)

    ctx = lax.dot_general(p.astype(compute_dtype), vh.astype(compute_dtype),
                          (((2,), (1,)), ((0,), (0,))),
                          preferred_element_type=jnp.float32)  # (B*H, Lq, dh)
    attn = ctx.reshape(B, H, Lq, dh).transpose(0, 2, 1, 3).reshape(B * Lq, E)

    o = _linear(attn, wo_ref, bo_ref, compute_dtype)           # (B*Lq, E)
    z = identity_ref[...].reshape(B * Lq, E) + o               # residual (dropout=0)
    if not normalize_before:                                   # forward_post
        z = _layernorm(z, gamma, beta)

    out_ref[...] = z.reshape(B, Lq, E).astype(out_ref.dtype)   # single dense store


# ----------------------------------------------------------------------------
# Mask -> additive bias (shared by kernel wrapper and reference)
# ----------------------------------------------------------------------------
def _build_attn_bias(memory_mask, memory_key_padding_mask, B, Lq, S):
    bias = None
    if memory_mask is not None:
        mm = jnp.asarray(memory_mask)
        assert mm.shape == (Lq, S), "only (Lq, S) memory_mask is supported"
        # TODO(synk): per-head (B*nhead, Lq, S) attn_mask variant not supported.
        if jnp.issubdtype(mm.dtype, jnp.bool_):
            mm = jnp.where(mm, jnp.float32(NEG_BIAS), jnp.float32(0.0))
        else:
            mm = mm.astype(jnp.float32)
        bias = jnp.broadcast_to(mm[None], (B, Lq, S))
    if memory_key_padding_mask is not None:
        kp = jnp.where(jnp.asarray(memory_key_padding_mask),
                       jnp.float32(NEG_BIAS), jnp.float32(0.0))     # (B, S)
        kp = jnp.broadcast_to(kp[:, None, :], (B, Lq, S))
        bias = kp if bias is None else bias + kp
    return bias


# ----------------------------------------------------------------------------
# Wrapper (batch-first layout: (B, L, E); transpose PyTorch's (L, B, E) inputs
# with x.transpose(1, 0, 2) before calling -- pure layout plumbing).
# ----------------------------------------------------------------------------
def referring_cross_attention_layer(params, identity, tgt, memory, *, nhead,
                                    key=None, pos=None, query_pos=None,
                                    memory_mask=None,
                                    memory_key_padding_mask=None,
                                    normalize_before=False,
                                    compute_dtype=jnp.bfloat16):
    """Pallas ReferringCrossAttentionLayer.forward (batch-first layout).

    identity, tgt, query_pos : (B, Lq, E)   memory, key, pos : (B, S, E)
    Returns float32 (B, Lq, E).
    """
    B, Lq, E = tgt.shape
    S = memory.shape[1]
    assert identity.shape == (B, Lq, E)
    assert memory.shape == (B, S, E)
    assert E % nhead == 0

    def wT(w):   # nn.Linear (out,in) -> (in,out), pre-cast for the MXU path
        return jnp.asarray(w).T.astype(compute_dtype)

    def b2(v):   # biases / LN params as lane-major (1, E) rows, f32
        return jnp.asarray(v).reshape(1, E).astype(jnp.float32)

    bias = _build_attn_bias(memory_mask, memory_key_padding_mask, B, Lq, S)

    inputs = [wT(params['wq']), b2(params['bq']),
              wT(params['wk']), b2(params['bk']),
              wT(params['wv']), b2(params['bv']),
              wT(params['wo']), b2(params['bo']),
              b2(params['ng']), b2(params['nb']),
              identity, tgt, memory]
    has_key = key is not None
    has_pos = pos is not None
    has_qpos = query_pos is not None
    has_bias = bias is not None
    if has_key:
        inputs.append(key)
    if has_pos:
        inputs.append(pos)
    if has_qpos:
        inputs.append(query_pos)
    if has_bias:
        inputs.append(bias)

    kernel = functools.partial(
        referring_cross_attn_kernel,
        nhead=nhead, normalize_before=normalize_before,
        has_key=has_key, has_pos=has_pos, has_qpos=has_qpos,
        has_bias=has_bias, compute_dtype=compute_dtype)

    # Single fused launch, all operands VMEM-resident (full-array blocks):
    # one HBM read per operand, one dense HBM write, no intermediates in HBM.
    return pl.pallas_call(
        kernel,
        out_shape=jax.ShapeDtypeStruct((B, Lq, E), jnp.float32),
    )(*inputs)


# ----------------------------------------------------------------------------
# Pure-JAX reference (mirrors the PyTorch module; batch-first layout)
# ----------------------------------------------------------------------------
def reference_forward(params, identity, tgt, memory, *, nhead, key=None,
                      pos=None, query_pos=None, memory_mask=None,
                      memory_key_padding_mask=None, normalize_before=False):
    P = lax.Precision.HIGHEST
    B, Lq, E = tgt.shape
    S = memory.shape[1]
    dh = E // nhead

    def linear(x, w, b):
        return jnp.einsum('ble,oe->blo', x, w, precision=P) + b

    def ln(x, g, b):
        mu = jnp.mean(x, -1, keepdims=True)
        var = jnp.mean((x - mu) ** 2, -1, keepdims=True)
        return (x - mu) / jnp.sqrt(var + LN_EPS) * g + b

    t = ln(tgt, params['ng'], params['nb']) if normalize_before else tgt
    q_in = t if query_pos is None else t + query_pos
    k_src = memory if key is None else key
    k_in = k_src if pos is None else k_src + pos
    q = linear(q_in, params['wq'], params['bq'])
    k = linear(k_in, params['wk'], params['bk'])
    v = linear(memory, params['wv'], params['bv'])
    qh = q.reshape(B, Lq, nhead, dh)
    kh = k.reshape(B, S, nhead, dh)
    vh = v.reshape(B, S, nhead, dh)
    s = jnp.einsum('blhd,bshd->bhls', qh, kh, precision=P) / jnp.sqrt(
        jnp.float32(dh))
    bias = _build_attn_bias(memory_mask, memory_key_padding_mask, B, Lq, S)
    if bias is not None:
        s = s + bias[:, None, :, :]
    p = jax.nn.softmax(s, axis=-1)
    ctx = jnp.einsum('bhls,bshd->blhd', p, vh, precision=P).reshape(B, Lq, E)
    o = jnp.einsum('ble,oe->blo', ctx, params['wo'], precision=P) + params['bo']
    z = identity + o
    return z if normalize_before else ln(z, params['ng'], params['nb'])


# ----------------------------------------------------------------------------
# Deterministic parameter init (shapes from the module __init__)
# ----------------------------------------------------------------------------
def init_params(rng, d_model):
    ks = jax.random.split(rng, 8)

    def xavier(k, shape):
        fan_out, fan_in = shape
        lim = (6.0 / (fan_in + fan_out)) ** 0.5
        return jax.random.uniform(k, shape, jnp.float32, -lim, lim)

    return {
        'wq': xavier(ks[0], (d_model, d_model)),
        'wk': xavier(ks[1], (d_model, d_model)),
        'wv': xavier(ks[2], (d_model, d_model)),
        'wo': xavier(ks[3], (d_model, d_model)),
        'bq': 0.02 * jax.random.normal(ks[4], (d_model,), jnp.float32),
        'bk': 0.02 * jax.random.normal(ks[5], (d_model,), jnp.float32),
        'bv': 0.02 * jax.random.normal(ks[6], (d_model,), jnp.float32),
        'bo': 0.02 * jax.random.normal(ks[7], (d_model,), jnp.float32),
        'ng': jnp.ones((d_model,), jnp.float32),
        'nb': jnp.zeros((d_model,), jnp.float32),
    }


# ----------------------------------------------------------------------------
if __name__ == "__main__":
    rng = jax.random.PRNGKey(0)

    B, Lq, S, C, NHEAD = 2, 8, 16, 32, 4   # batch, queries, memory len, d_model

    ks = jax.random.split(rng, 8)
    tgt = jax.random.normal(ks[0], (B, Lq, C), jnp.float32)
    identity = jax.random.normal(ks[1], (B, Lq, C), jnp.float32)
    memory = jax.random.normal(ks[2], (B, S, C), jnp.float32)
    query_pos = jax.random.normal(ks[3], (B, Lq, C), jnp.float32)
    pos = jax.random.normal(ks[4], (B, S, C), jnp.float32)
    key_alt = memory + 0.1 * jax.random.normal(ks[5], (B, S, C), jnp.float32)
    params = init_params(ks[6], C)
    kpm = jax.random.bernoulli(ks[7], 0.25, (B, S))
    kpm = kpm.at[:, 0].set(False)          # never fully mask a row

    common = dict(nhead=NHEAD, pos=pos, query_pos=query_pos)

    # f32 path (matches PyTorch numerics): forward_post, forward_pre,
    # and one call exercising a separate key + key_padding_mask.
    out_post = referring_cross_attention_layer(
        params, identity, tgt, memory, normalize_before=False,
        compute_dtype=jnp.float32, **common)
    out_pre = referring_cross_attention_layer(
        params, identity, tgt, memory, normalize_before=True,
        compute_dtype=jnp.float32, **common)
    out_mask = referring_cross_attention_layer(
        params, identity, tgt, memory, key=key_alt,
        memory_key_padding_mask=kpm, normalize_before=False,
        compute_dtype=jnp.float32, **common)
    # bf16 production path (weights pre-cast in the wrapper, f32 accumulation).
    out_bf16 = referring_cross_attention_layer(
        params, identity, tgt, memory, normalize_before=False,
        compute_dtype=jnp.bfloat16, **common)
    jax.block_until_ready((out_post, out_pre, out_mask, out_bf16))

    ref_post = reference_forward(params, identity, tgt, memory,
                                 normalize_before=False, **common)
    ref_pre = reference_forward(params, identity, tgt, memory,
                                normalize_before=True, **common)
    ref_mask = reference_forward(params, identity, tgt, memory, key=key_alt,
                                 memory_key_padding_mask=kpm,
                                 normalize_before=False, **common)

    # f32 tolerance tightened (was 5e-2); remaining slack only covers the
    # MXU's f32 matmul pass configuration, not any algorithmic approximation.
    np.testing.assert_allclose(np.asarray(out_post), np.asarray(ref_post),
                               rtol=5e-3, atol=5e-3)
    np.testing.assert_allclose(np.asarray(out_pre), np.asarray(ref_pre),
                               rtol=5e-3, atol=5e-3)
    np.testing.assert_allclose(np.asarray(out_mask), np.asarray(ref_mask),
                               rtol=5e-3, atol=5e-3)
    np.testing.assert_allclose(np.asarray(out_bf16), np.asarray(ref_post),
                               rtol=5e-2, atol=5e-2)

    print("KERNEL_OK")
</pallas_src>

<mosaic_0001>
module attributes {stable_mosaic.version = 11 : i64} {
  func.func @referring_cross_attn_kernel(%arg0: memref<32x32xf32, #tpu.memory_space<vmem>>, %arg1: memref<1x32xf32, #tpu.memory_space<vmem>>, %arg2: memref<32x32xf32, #tpu.memory_space<vmem>>, %arg3: memref<1x32xf32, #tpu.memory_space<vmem>>, %arg4: memref<32x32xf32, #tpu.memory_space<vmem>>, %arg5: memref<1x32xf32, #tpu.memory_space<vmem>>, %arg6: memref<32x32xf32, #tpu.memory_space<vmem>>, %arg7: memref<1x32xf32, #tpu.memory_space<vmem>>, %arg8: memref<1x32xf32, #tpu.memory_space<vmem>>, %arg9: memref<1x32xf32, #tpu.memory_space<vmem>>, %arg10: memref<2x8x32xf32, #tpu.memory_space<vmem>>, %arg11: memref<2x8x32xf32, #tpu.memory_space<vmem>>, %arg12: memref<2x16x32xf32, #tpu.memory_space<vmem>>, %arg13: memref<2x16x32xf32, #tpu.memory_space<vmem>>, %arg14: memref<2x8x32xf32, #tpu.memory_space<vmem>>, %arg15: memref<2x8x32xf32, #tpu.memory_space<vmem>>) attributes {dimension_semantics = [], scalar_prefetch = 0 : i64, scratch_operands = 0 : i64, tpu.core_type = #tpu.core_type<tc>} {
    %c0 = arith.constant 0 : index
    %c0_0 = arith.constant 0 : index
    %0 = vector.load %arg8[%c0, %c0_0] : memref<1x32xf32, #tpu.memory_space<vmem>>, vector<1x32xf32>
    %c0_1 = arith.constant 0 : index
    %c0_2 = arith.constant 0 : index
    %1 = vector.load %arg9[%c0_1, %c0_2] : memref<1x32xf32, #tpu.memory_space<vmem>>, vector<1x32xf32>
    %c0_3 = arith.constant 0 : index
    %c0_4 = arith.constant 0 : index
    %c0_5 = arith.constant 0 : index
    %2 = vector.load %arg11[%c0_3, %c0_4, %c0_5] : memref<2x8x32xf32, #tpu.memory_space<vmem>>, vector<2x8x32xf32>
    %3 = vector.shape_cast %2 : vector<2x8x32xf32> to vector<16x32xf32>
    %c0_6 = arith.constant 0 : index
    %c0_7 = arith.constant 0 : index
    %c0_8 = arith.constant 0 : index
    %4 = vector.load %arg12[%c0_6, %c0_7, %c0_8] : memref<2x16x32xf32, #tpu.memory_space<vmem>>, vector<2x16x32xf32>
    %5 = vector.shape_cast %4 : vector<2x16x32xf32> to vector<32x32xf32>
    %c0_9 = arith.constant 0 : index
    %c0_10 = arith.constant 0 : index
    %c0_11 = arith.constant 0 : index
    %6 = vector.load %arg14[%c0_9, %c0_10, %c0_11] : memref<2x8x32xf32, #tpu.memory_space<vmem>>, vector<2x8x32xf32>
    %7 = vector.shape_cast %6 : vector<2x8x32xf32> to vector<16x32xf32>
    %8 = arith.addf %3, %7 : vector<16x32xf32>
    %c0_12 = arith.constant 0 : index
    %c0_13 = arith.constant 0 : index
    %c0_14 = arith.constant 0 : index
    %9 = vector.load %arg13[%c0_12, %c0_13, %c0_14] : memref<2x16x32xf32, #tpu.memory_space<vmem>>, vector<2x16x32xf32>
    %10 = vector.shape_cast %9 : vector<2x16x32xf32> to vector<32x32xf32>
    %11 = arith.addf %5, %10 : vector<32x32xf32>
    %c0_15 = arith.constant 0 : index
    %c0_16 = arith.constant 0 : index
    %12 = vector.load %arg0[%c0_15, %c0_16] : memref<32x32xf32, #tpu.memory_space<vmem>>, vector<32x32xf32>
    %cst = arith.constant dense<0.000000e+00> : vector<16x32xf32>
    %13 = tpu.matmul %8, %12, %cst {dimension_numbers = #tpu.dot_dimension_numbers<[1], [0], [0], [1], [0, 0, 1, 1], [], []>} : vector<16x32xf32>, vector<32x32xf32>, vector<16x32xf32> -> vector<16x32xf32>
    %c0_17 = arith.constant 0 : index
    %c0_18 = arith.constant 0 : index
    %14 = vector.load %arg1[%c0_17, %c0_18] : memref<1x32xf32, #tpu.memory_space<vmem>>, vector<1x32xf32>
    %15 = vector.broadcast %14 : vector<1x32xf32> to vector<16x32xf32>
    %16 = arith.addf %13, %15 : vector<16x32xf32>
    %cst_19 = arith.constant 0.353553385 : f32
    %17 = vector.broadcast %cst_19 : f32 to vector<16x32xf32>
    %18 = arith.mulf %16, %17 : vector<16x32xf32>
    %c0_20 = arith.constant 0 : index
    %c0_21 = arith.constant 0 : index
    %19 = vector.load %arg2[%c0_20, %c0_21] : memref<32x32xf32, #tpu.memory_space<vmem>>, vector<32x32xf32>
    %cst_22 = arith.constant dense<0.000000e+00> : vector<32x32xf32>
    %20 = tpu.matmul %11, %19, %cst_22 {dimension_numbers = #tpu.dot_dimension_numbers<[1], [0], [0], [1], [0, 0, 1, 1], [], []>} : vector<32x32xf32>, vector<32x32xf32>, vector<32x32xf32> -> vector<32x32xf32>
    %c0_23 = arith.constant 0 : index
    %c0_24 = arith.constant 0 : index
    %21 = vector.load %arg3[%c0_23, %c0_24] : memref<1x32xf32, #tpu.memory_space<vmem>>, vector<1x32xf32>
    %22 = vector.broadcast %21 : vector<1x32xf32> to vector<32x32xf32>
    %23 = arith.addf %20, %22 : vector<32x32xf32>
    %c0_25 = arith.constant 0 : index
    %c0_26 = arith.constant 0 : index
    %24 = vector.load %arg4[%c0_25, %c0_26] : memref<32x32xf32, #tpu.memory_space<vmem>>, vector<32x32xf32>
    %cst_27 = arith.constant dense<0.000000e+00> : vector<32x32xf32>
    %25 = tpu.matmul %5, %24, %cst_27 {dimension_numbers = #tpu.dot_dimension_numbers<[1], [0], [0], [1], [0, 0, 1, 1], [], []>} : vector<32x32xf32>, vector<32x32xf32>, vector<32x32xf32> -> vector<32x32xf32>
    %c0_28 = arith.constant 0 : index
    %c0_29 = arith.constant 0 : index
    %26 = vector.load %arg5[%c0_28, %c0_29] : memref<1x32xf32, #tpu.memory_space<vmem>>, vector<1x32xf32>
    %27 = vector.broadcast %26 : vector<1x32xf32> to vector<32x32xf32>
    %28 = arith.addf %25, %27 : vector<32x32xf32>
    %29 = vector.shape_cast %18 : vector<16x32xf32> to vector<2x8x4x8xf32>
    %30 = tpu.transpose %29, [0, 2, 1, 3] : vector<2x8x4x8xf32> -> vector<2x4x8x8xf32>
    %31 = vector.shape_cast %30 : vector<2x4x8x8xf32> to vector<8x8x8xf32>
    %32 = vector.shape_cast %23 : vector<32x32xf32> to vector<2x16x4x8xf32>
    %33 = tpu.transpose %32, [0, 2, 1, 3] : vector<2x16x4x8xf32> -> vector<2x4x16x8xf32>
    %34 = vector.shape_cast %33 : vector<2x4x16x8xf32> to vector<8x16x8xf32>
    %35 = vector.shape_cast %28 : vector<32x32xf32> to vector<2x16x4x8xf32>
    %36 = tpu.transpose %35, [0, 2, 1, 3] : vector<2x16x4x8xf32> -> vector<2x4x16x8xf32>
    %37 = vector.shape_cast %36 : vector<2x4x16x8xf32> to vector<8x16x8xf32>
    %cst_30 = arith.constant dense<0.000000e+00> : vector<8x8x16xf32>
    %38 = tpu.matmul %31, %34, %cst_30 {dimension_numbers = #tpu.dot_dimension_numbers<[2], [2], [1], [1], [0, 0, 0, 1, 1, 1], [0], [0]>} : vector<8x8x8xf32>, vector<8x16x8xf32>, vector<8x8x16xf32> -> vector<8x8x16xf32>
    %cst_31 = arith.constant dense<0xFF800000> : vector<8x8xf32>
    %39 = vector.multi_reduction <maximumf>, %38, %cst_31 [2] : vector<8x8x16xf32> to vector<8x8xf32>
    %40 = vector.shape_cast %39 : vector<8x8xf32> to vector<8x8x1xf32>
    %41 = vector.broadcast %40 : vector<8x8x1xf32> to vector<8x8x16xf32>
    %42 = arith.subf %38, %41 : vector<8x8x16xf32>
    %43 = math.exp %42 : vector<8x8x16xf32>
    %cst_32 = arith.constant dense<0.000000e+00> : vector<8x8xf32>
    %44 = vector.multi_reduction <add>, %43, %cst_32 [2] : vector<8x8x16xf32> to vector<8x8xf32>
    %45 = vector.shape_cast %44 : vector<8x8xf32> to vector<8x8x1xf32>
    %46 = vector.broadcast %45 : vector<8x8x1xf32> to vector<8x8x16xf32>
    %47 = arith.divf %43, %46 : vector<8x8x16xf32>
    %cst_33 = arith.constant dense<0.000000e+00> : vector<8x8x8xf32>
    %48 = tpu.matmul %47, %37, %cst_33 {dimension_numbers = #tpu.dot_dimension_numbers<[2], [1], [1], [2], [0, 0, 0, 1, 1, 2], [0], [0]>} : vector<8x8x16xf32>, vector<8x16x8xf32>, vector<8x8x8xf32> -> vector<8x8x8xf32>
    %49 = vector.shape_cast %48 : vector<8x8x8xf32> to vector<2x4x8x8xf32>
    %50 = tpu.transpose %49, [0, 2, 1, 3] : vector<2x4x8x8xf32> -> vector<2x8x4x8xf32>
    %51 = vector.shape_cast %50 : vector<2x8x4x8xf32> to vector<16x32xf32>
    %c0_34 = arith.constant 0 : index
    %c0_35 = arith.constant 0 : index
    %52 = vector.load %arg6[%c0_34, %c0_35] : memref<32x32xf32, #tpu.memory_space<vmem>>, vector<32x32xf32>
    %cst_36 = arith.constant dense<0.000000e+00> : vector<16x32xf32>
    %53 = tpu.matmul %51, %52, %cst_36 {dimension_numbers = #tpu.dot_dimension_numbers<[1], [0], [0], [1], [0, 0, 1, 1], [], []>} : vector<16x32xf32>, vector<32x32xf32>, vector<16x32xf32> -> vector<16x32xf32>
    %c0_37 = arith.constant 0 : index
    %c0_38 = arith.constant 0 : index
    %54 = vector.load %arg7[%c0_37, %c0_38] : memref<1x32xf32, #tpu.memory_space<vmem>>, vector<1x32xf32>
    %55 = vector.broadcast %54 : vector<1x32xf32> to vector<16x32xf32>
    %56 = arith.addf %53, %55 : vector<16x32xf32>
    %c0_39 = arith.constant 0 : index
    %c0_40 = arith.constant 0 : index
    %c0_41 = arith.constant 0 : index
    %57 = vector.load %arg10[%c0_39, %c0_40, %c0_41] : memref<2x8x32xf32, #tpu.memory_space<vmem>>, vector<2x8x32xf32>
    %58 = vector.shape_cast %57 : vector<2x8x32xf32> to vector<16x32xf32>
    %59 = arith.addf %58, %56 : vector<16x32xf32>
    %cst_42 = arith.constant dense<0.000000e+00> : vector<16xf32>
    %60 = vector.multi_reduction <add>, %59, %cst_42 [1] : vector<16x32xf32> to vector<16xf32>
    %61 = vector.shape_cast %60 : vector<16xf32> to vector<16x1xf32>
    %cst_43 = arith.constant 3.200000e+01 : f32
    %62 = vector.broadcast %cst_43 : f32 to vector<16x1xf32>
    %63 = arith.divf %61, %62 : vector<16x1xf32>
    %64 = vector.broadcast %63 : vector<16x1xf32> to vector<16x32xf32>
    %65 = arith.subf %59, %64 : vector<16x32xf32>
    %66 = arith.mulf %65, %65 : vector<16x32xf32>
    %cst_44 = arith.constant dense<0.000000e+00> : vector<16xf32>
    %67 = vector.multi_reduction <add>, %66, %cst_44 [1] : vector<16x32xf32> to vector<16xf32>
    %68 = vector.shape_cast %67 : vector<16xf32> to vector<16x1xf32>
    %cst_45 = arith.constant 3.200000e+01 : f32
    %69 = vector.broadcast %cst_45 : f32 to vector<16x1xf32>
    %70 = arith.divf %68, %69 : vector<16x1xf32>
    %cst_46 = arith.constant 9.99999974E-6 : f32
    %71 = vector.broadcast %cst_46 : f32 to vector<16x1xf32>
    %72 = arith.addf %70, %71 : vector<16x1xf32>
    %73 = math.rsqrt %72 : vector<16x1xf32>
    %74 = vector.broadcast %73 : vector<16x1xf32> to vector<16x32xf32>
    %75 = arith.mulf %65, %74 : vector<16x32xf32>
    %76 = vector.broadcast %0 : vector<1x32xf32> to vector<16x32xf32>
    %77 = arith.mulf %75, %76 : vector<16x32xf32>
    %78 = vector.broadcast %1 : vector<1x32xf32> to vector<16x32xf32>
    %79 = arith.addf %77, %78 : vector<16x32xf32>
    %80 = vector.shape_cast %79 : vector<16x32xf32> to vector<2x8x32xf32>
    %c0_47 = arith.constant 0 : index
    %c0_48 = arith.constant 0 : index
    %c0_49 = arith.constant 0 : index
    %81 = vector.load %arg15[%c0_47, %c0_48, %c0_49] : memref<2x8x32xf32, #tpu.memory_space<vmem>>, vector<2x8x32xf32>
    tpu.vector_store %arg15[%c0_47, %c0_48, %c0_49], %80 {strides = array<i32>} : memref<2x8x32xf32, #tpu.memory_space<vmem>>, vector<2x8x32xf32>,
    return
  }
}

</mosaic_0001>

<llo_original>
// kernel: tpu_custom_call.1
$region0: #{tpu_custom_call.1}
  #allocation0 [shape = 'u32[]', space=smem, size = 0x4, offset = 0x4, fixed_abs, tag = 'smem constant byte address 0x4 - core index']
  #allocation1 [shape = 'u32[144,128]{1,0:T(1,128)}', space=vmem, size = 0x12000, scoped, tag = 'internal scratch']
  %s0 = inlined_call_operand.hbm [shape: f32[32,32], index: 0, kind: input, shape index: {}]
  %s1 = inlined_call_operand.vmem [shape: f32[1,32], index: 1, kind: input, shape index: {}]
  %s2 = inlined_call_operand.hbm [shape: f32[32,32], index: 2, kind: input, shape index: {}]
  %s3 = inlined_call_operand.hbm [shape: f32[1,32], index: 3, kind: input, shape index: {}]
  %s4 = inlined_call_operand.hbm [shape: f32[32,32], index: 4, kind: input, shape index: {}]
  %s5 = inlined_call_operand.hbm [shape: f32[1,32], index: 5, kind: input, shape index: {}]
  %s6 = inlined_call_operand.hbm [shape: f32[32,32], index: 6, kind: input, shape index: {}]
  %s7 = inlined_call_operand.hbm [shape: f32[1,32], index: 7, kind: input, shape index: {}]
  %s8 = inlined_call_operand.hbm [shape: f32[1,32], index: 8, kind: input, shape index: {}]
  %s9 = inlined_call_operand.hbm [shape: f32[1,32], index: 9, kind: input, shape index: {}]
  %s10 = inlined_call_operand.hbm [shape: f32[2,8,32], index: 10, kind: input, shape index: {}]
  %s11 = inlined_call_operand.hbm [shape: f32[2,8,32], index: 11, kind: input, shape index: {}]
  %s12 = inlined_call_operand.vmem [shape: f32[2,16,32], index: 12, kind: input, shape index: {}]
  %s13 = inlined_call_operand.hbm [shape: f32[2,16,32], index: 13, kind: input, shape index: {}]
  %s14 = inlined_call_operand.vmem [shape: f32[2,8,32], index: 14, kind: input, shape index: {}]
  %s15 = inlined_call_operand.hbm [shape: f32[2,8,32], index: 15, kind: output, shape index: {}]
  %s16 = sld [smem:[#allocation0]]
  $region118: #{tpu_custom_call.1} parent=0
    _
  %s18 = ssub.s32 1, %s16
  %s19 = scalar_select 0, %s18, %s16
  $region1: #{tpu_custom_call.1} parent=0
    #allocation2 [shape = 'u8[16384]{0}', space=vmem, size = 0x4000, scoped, tag = 'input window, operand 0, single buffered']
    #allocation3 [shape = 's32[1]{0}', space=sflag, size = 0x4, scoped, tag = 'scoped memory for tpu_custom_call.1']
    #allocation4 [shape = 's32[1]{0}', space=sflag, size = 0x4, scoped, tag = 'scoped memory for tpu_custom_call.1']
    #allocation5 [shape = 'u8[16384]{0}', space=vmem, size = 0x4000, scoped, tag = 'input window, operand 2, single buffered']
    #allocation6 [shape = 's32[1]{0}', space=sflag, size = 0x4, scoped, tag = 'scoped memory for tpu_custom_call.1']
    #allocation7 [shape = 'u8[512]{0}', space=vmem, size = 0x400, scoped, tag = 'input window, operand 3, single buffered']
    #allocation8 [shape = 'u8[16384]{0}', space=vmem, size = 0x4000, scoped, tag = 'input window, operand 4, single buffered']
    #allocation9 [shape = 's32[1]{0}', space=sflag, size = 0x4, scoped, tag = 'scoped memory for tpu_custom_call.1']
    #allocation10 [shape = 'u8[512]{0}', space=vmem, size = 0x400, scoped, tag = 'input window, operand 5, single buffered']
    #allocation11 [shape = 'u8[16384]{0}', space=vmem, size = 0x4000, scoped, tag = 'input window, operand 6, single buffered']
    #allocation12 [shape = 's32[1]{0}', space=sflag, size = 0x4, scoped, tag = 'scoped memory for tpu_custom_call.1']
    #allocation13 [shape = 'u8[512]{0}', space=vmem, size = 0x400, scoped, tag = 'input window, operand 7, single buffered']
    #allocation14 [shape = 'u8[512]{0}', space=vmem, size = 0x400, scoped, tag = 'input window, operand 8, single buffered']
    #allocation15 [shape = 's32[1]{0}', space=sflag, size = 0x4, scoped, tag = 'scoped memory for tpu_custom_call.1']
    #allocation16 [shape = 'u8[512]{0}', space=vmem, size = 0x400, scoped, tag = 'input window, operand 9, single buffered']
    #allocation17 [shape = 'u8[8192]{0}', space=vmem, size = 0x2000, scoped, tag = 'input window, operand 10, single buffered']
    #allocation18 [shape = 's32[1]{0}', space=sflag, size = 0x4, scoped, tag = 'scoped memory for tpu_custom_call.1']
    #allocation19 [shape = 'u8[8192]{0}', space=vmem, size = 0x2000, scoped, tag = 'input window, operand 11, single buffered']
    #allocation20 [shape = 'u8[16384]{0}', space=vmem, size = 0x4000, scoped, tag = 'input window, operand 13, single buffered']
    #allocation21 [shape = 's32[1]{0}', space=sflag, size = 0x4, scoped, tag = 'scoped memory for tpu_custom_call.1']
    #allocation22 [shape = 'u8[8192]{0}', space=vmem, size = 0x2000, scoped, tag = 'output window, operand 0, single buffered']
    %20 = vsyncpa [#allocation3], 0
    %21 = vsyncpa [#allocation6], 0
    %22 = vsyncpa [#allocation9], 0
    %23 = vsyncpa [#allocation12], 0
    %24 = vsyncpa [#allocation15], 0
    %25 = vsyncpa [#allocation18], 0
    %26 = vsyncpa [#allocation21], 0
    %27 = vsyncpa [#allocation4], 0
    // Predicated region
    $region2: #{tpu_custom_call.1} parent=1 // pred_check
      _
    $region3: #{tpu_custom_call.1} parent=1 // pred_check_branch
      %29 = sbr.rel (0) target = $region5
    $region4: #{tpu_custom_call.1} parent=1 // pred_region
      %s31 = ssub.s32 512, 512
      %32 = vsyncadd [#allocation3], %s31
      %s33 = sshll.u32 [#allocation2], 4
      %s34 = int_to_ptr.vmem [resolvable:$true] %s33
      %39 = dma.hbm_to_vmem [thread:$0]  %s0, 512, %s34, [#allocation3], 128, 128, 8
    $region5: #{tpu_custom_call.1} parent=1 // pred_fallthru
      _
    // Predicated region
    $region6: #{tpu_custom_call.1} parent=1 // pred_check
      _
    $region7: #{tpu_custom_call.1} parent=1 // pred_check_branch
      %41 = sbr.rel (0) target = $region9
    $region8: #{tpu_custom_call.1} parent=1 // pred_region
      _
    $region9: #{tpu_custom_call.1} parent=1 // pred_fallthru
      _
    // Predicated region
    $region10: #{tpu_custom_call.1} parent=1 // pred_check
      _
    $region11: #{tpu_custom_call.1} parent=1 // pred_check_branch
      %43 = sbr.rel (0) target = $region13
    $region12: #{tpu_custom_call.1} parent=1 // pred_region
      %s45 = ssub.s32 512, 512
      %46 = vsyncadd [#allocation6], %s45
      %s47 = sshll.u32 [#allocation5], 4
      %s48 = int_to_ptr.vmem [resolvable:$true] %s47
      %53 = dma.hbm_to_vmem [thread:$0]  %s2, 512, %s48, [#allocation6], 128, 128, 8
    $region13: #{tpu_custom_call.1} parent=1 // pred_fallthru
      _
    // Predicated region
    $region14: #{tpu_custom_call.1} parent=1 // pred_check
      _
    $region15: #{tpu_custom_call.1} parent=1 // pred_check_branch
      %55 = sbr.rel (0) target = $region17
    $region16: #{tpu_custom_call.1} parent=1 // pred_region
      %s57 = ssub.s32 16, 16
      %58 = vsyncadd [#allocation6], %s57
      %s60 = sshll.u32 [#allocation7], 4
      %s61 = int_to_ptr.vmem [resolvable:$true] %s60
      %63 = dma.hbm_to_vmem [thread:$0]  %s3, 16, %s61, [#allocation6]
    $region17: #{tpu_custom_call.1} parent=1 // pred_fallthru
      _
    // Predicated region
    $region18: #{tpu_custom_call.1} parent=1 // pred_check
      _
    $region19: #{tpu_custom_call.1} parent=1 // pred_check_branch
      %65 = sbr.rel (0) target = $region21
    $region20: #{tpu_custom_call.1} parent=1 // pred_region
      %s67 = ssub.s32 512, 512
      %68 = vsyncadd [#allocation9], %s67
      %s69 = sshll.u32 [#allocation8], 4
      %s70 = int_to_ptr.vmem [resolvable:$true] %s69
      %75 = dma.hbm_to_vmem [thread:$0]  %s4, 512, %s70, [#allocation9], 128, 128, 8
    $region21: #{tpu_custom_call.1} parent=1 // pred_fallthru
      _
    // Predicated region
    $region22: #{tpu_custom_call.1} parent=1 // pred_check
      _
    $region23: #{tpu_custom_call.1} parent=1 // pred_check_branch
      %77 = sbr.rel (0) target = $region25
    $region24: #{tpu_custom_call.1} parent=1 // pred_region
      %s79 = ssub.s32 16, 16
      %80 = vsyncadd [#allocation9], %s79
      %s82 = sshll.u32 [#allocation10], 4
      %s83 = int_to_ptr.vmem [resolvable:$true] %s82
      %85 = dma.hbm_to_vmem [thread:$0]  %s5, 16, %s83, [#allocation9]
    $region25: #{tpu_custom_call.1} parent=1 // pred_fallthru
      _
    // Predicated region
    $region26: #{tpu_custom_call.1} parent=1 // pred_check
      _
    $region27: #{tpu_custom_call.1} parent=1 // pred_check_branch
      %87 = sbr.rel (0) target = $region29
    $region28: #{tpu_custom_call.1} parent=1 // pred_region
      %s89 = ssub.s32 512, 512
      %90 = vsyncadd [#allocation12], %s89
      %s91 = sshll.u32 [#allocation11], 4
      %s92 = int_to_ptr.vmem [resolvable:$true] %s91
      %97 = dma.hbm_to_vmem [thread:$0]  %s6, 512, %s92, [#allocation12], 128, 128, 8
    $region29: #{tpu_custom_call.1} parent=1 // pred_fallthru
      _
    // Predicated region
    $region30: #{tpu_custom_call.1} parent=1 // pred_check
      _
    $region31: #{tpu_custom_call.1} parent=1 // pred_check_branch
      %99 = sbr.rel (0) target = $region33
    $region32: #{tpu_custom_call.1} parent=1 // pred_region
      %s101 = ssub.s32 16, 16
      %102 = vsyncadd [#allocation12], %s101
      %s104 = sshll.u32 [#allocation13], 4
      %s105 = int_to_ptr.vmem [resolvable:$true] %s104
      %107 = dma.hbm_to_vmem [thread:$0]  %s7, 16, %s105, [#allocation12]
    $region33: #{tpu_custom_call.1} parent=1 // pred_fallthru
      _
    // Predicated region
    $region34: #{tpu_custom_call.1} parent=1 // pred_check
      _
    $region35: #{tpu_custom_call.1} parent=1 // pred_check_branch
      %109 = sbr.rel (0) target = $region37
    $region36: #{tpu_custom_call.1} parent=1 // pred_region
      %s111 = ssub.s32 16, 16
      %112 = vsyncadd [#allocation15], %s111
      %s114 = sshll.u32 [#allocation14], 4
      %s115 = int_to_ptr.vmem [resolvable:$true] %s114
      %117 = dma.hbm_to_vmem [thread:$0]  %s8, 16, %s115, [#allocation15]
    $region37: #{tpu_custom_call.1} parent=1 // pred_fallthru
      _
    // Predicated region
    $region38: #{tpu_custom_call.1} parent=1 // pred_check
      _
    $region39: #{tpu_custom_call.1} parent=1 // pred_check_branch
      %119 = sbr.rel (0) target = $region41
    $region40: #{tpu_custom_call.1} parent=1 // pred_region
      %s121 = ssub.s32 16, 16
      %122 = vsyncadd [#allocation15], %s121
      %s124 = sshll.u32 [#allocation16], 4
      %s125 = int_to_ptr.vmem [resolvable:$true] %s124
      %127 = dma.hbm_to_vmem [thread:$0]  %s9, 16, %s125, [#allocation15]
    $region41: #{tpu_custom_call.1} parent=1 // pred_fallthru
      _
    // Predicated region
    $region42: #{tpu_custom_call.1} parent=1 // pred_check
      _
    $region43: #{tpu_custom_call.1} parent=1 // pred_check_branch
      %129 = sbr.rel (0) target = $region45
    $region44: #{tpu_custom_call.1} parent=1 // pred_region
      %s131 = ssub.s32 256, 256
      %132 = vsyncadd [#allocation18], %s131
      %s133 = sshll.u32 [#allocation17], 4
      %s134 = int_to_ptr.vmem [resolvable:$true] %s133
      %139 = dma.hbm_to_vmem [thread:$0]  %s10, 256, %s134, [#allocation18], 128, 128, 8
    $region45: #{tpu_custom_call.1} parent=1 // pred_fallthru
      _
    // Predicated region
    $region46: #{tpu_custom_call.1} parent=1 // pred_check
      _
    $region47: #{tpu_custom_call.1} parent=1 // pred_check_branch
      %141 = sbr.rel (0) target = $region49
    $region48: #{tpu_custom_call.1} parent=1 // pred_region
      %s143 = ssub.s32 256, 256
      %144 = vsyncadd [#allocation18], %s143
      %s145 = sshll.u32 [#allocation19], 4
      %s146 = int_to_ptr.vmem [resolvable:$true] %s145
      %151 = dma.hbm_to_vmem [thread:$0]  %s11, 256, %s146, [#allocation18], 128, 128, 8
    $region49: #{tpu_custom_call.1} parent=1 // pred_fallthru
      _
    // Predicated region
    $region50: #{tpu_custom_call.1} parent=1 // pred_check
      _
    $region51: #{tpu_custom_call.1} parent=1 // pred_check_branch
      %153 = sbr.rel (0) target = $region53
    $region52: #{tpu_custom_call.1} parent=1 // pred_region
      _
    $region53: #{tpu_custom_call.1} parent=1 // pred_fallthru
      _
    // Predicated region
    $region54: #{tpu_custom_call.1} parent=1 // pred_check
      _
    $region55: #{tpu_custom_call.1} parent=1 // pred_check_branch
      %155 = sbr.rel (0) target = $region57
    $region56: #{tpu_custom_call.1} parent=1 // pred_region
      %s157 = ssub.s32 512, 512
      %158 = vsyncadd [#allocation21], %s157
      %s159 = sshll.u32 [#allocation20], 4
      %s160 = int_to_ptr.vmem [resolvable:$true] %s159
      %165 = dma.hbm_to_vmem [thread:$0]  %s13, 512, %s160, [#allocation21], 128, 128, 8
    $region57: #{tpu_custom_call.1} parent=1 // pred_fallthru
      _
    // Predicated region
    $region58: #{tpu_custom_call.1} parent=1 // pred_check
      _
    $region59: #{tpu_custom_call.1} parent=1 // pred_check_branch
      %167 = sbr.rel (0) target = $region61
    $region60: #{tpu_custom_call.1} parent=1 // pred_region
      _
    $region61: #{tpu_custom_call.1} parent=1 // pred_fallthru
      _
    // Predicated region
    $region62: #{tpu_custom_call.1} parent=1 // pred_check
      _
    $region63: #{tpu_custom_call.1} parent=1 // pred_check_branch
      %169 = sbr.rel (0) target = $region65
    $region64: #{tpu_custom_call.1} parent=1 // pred_region
      %170 = dma.done [#allocation3], 512
    $region65: #{tpu_custom_call.1} parent=1 // pred_fallthru
      _
    // Predicated region
    $region66: #{tpu_custom_call.1} parent=1 // pred_check
      _
    $region67: #{tpu_custom_call.1} parent=1 // pred_check_branch
      %172 = sbr.rel (0) target = $region69
    $region68: #{tpu_custom_call.1} parent=1 // pred_region
      %173 = dma.done [#allocation6], 512
    $region69: #{tpu_custom_call.1} parent=1 // pred_fallthru
      _
    // Predicated region
    $region70: #{tpu_custom_call.1} parent=1 // pred_check
      _
    $region71: #{tpu_custom_call.1} parent=1 // pred_check_branch
      %175 = sbr.rel (0) target = $region73
    $region72: #{tpu_custom_call.1} parent=1 // pred_region
      %176 = dma.done [#allocation6], 16
    $region73: #{tpu_custom_call.1} parent=1 // pred_fallthru
      _
    // Predicated region
    $region74: #{tpu_custom_call.1} parent=1 // pred_check
      _
    $region75: #{tpu_custom_call.1} parent=1 // pred_check_branch
      %178 = sbr.rel (0) target = $region77
    $region76: #{tpu_custom_call.1} parent=1 // pred_region
      %179 = dma.done [#allocation9], 512
    $region77: #{tpu_custom_call.1} parent=1 // pred_fallthru
      _
    // Predicated region
    $region78: #{tpu_custom_call.1} parent=1 // pred_check
      _
    $region79: #{tpu_custom_call.1} parent=1 // pred_check_branch
      %181 = sbr.rel (0) target = $region81
    $region80: #{tpu_custom_call.1} parent=1 // pred_region
      %182 = dma.done [#allocation9], 16
    $region81: #{tpu_custom_call.1} parent=1 // pred_fallthru
      _
    // Predicated region
    $region82: #{tpu_custom_call.1} parent=1 // pred_check
      _
    $region83: #{tpu_custom_call.1} parent=1 // pred_check_branch
      %184 = sbr.rel (0) target = $region85
    $region84: #{tpu_custom_call.1} parent=1 // pred_region
      %185 = dma.done [#allocation12], 512
    $region85: #{tpu_custom_call.1} parent=1 // pred_fallthru
      _
    // Predicated region
    $region86: #{tpu_custom_call.1} parent=1 // pred_check
      _
    $region87: #{tpu_custom_call.1} parent=1 // pred_check_branch
      %187 = sbr.rel (0) target = $region89
    $region88: #{tpu_custom_call.1} parent=1 // pred_region
      %188 = dma.done [#allocation12], 16
    $region89: #{tpu_custom_call.1} parent=1 // pred_fallthru
      _
    // Predicated region
    $region90: #{tpu_custom_call.1} parent=1 // pred_check
      _
    $region91: #{tpu_custom_call.1} parent=1 // pred_check_branch
      %190 = sbr.rel (0) target = $region93
    $region92: #{tpu_custom_call.1} parent=1 // pred_region
      %191 = dma.done [#allocation15], 16
    $region93: #{tpu_custom_call.1} parent=1 // pred_fallthru
      _
    // Predicated region
    $region94: #{tpu_custom_call.1} parent=1 // pred_check
      _
    $region95: #{tpu_custom_call.1} parent=1 // pred_check_branch
      %193 = sbr.rel (0) target = $region97
    $region96: #{tpu_custom_call.1} parent=1 // pred_region
      %194 = dma.done [#allocation15], 16
    $region97: #{tpu_custom_call.1} parent=1 // pred_fallthru
      _
    // Predicated region
    $region98: #{tpu_custom_call.1} parent=1 // pred_check
      _
    $region99: #{tpu_custom_call.1} parent=1 // pred_check_branch
      %196 = sbr.rel (0) target = $region101
    $region100: #{tpu_custom_call.1} parent=1 // pred_region
      %197 = dma.done [#allocation18], 256
    $region101: #{tpu_custom_call.1} parent=1 // pred_fallthru
      _
    // Predicated region
    $region102: #{tpu_custom_call.1} parent=1 // pred_check
      _
    $region103: #{tpu_custom_call.1} parent=1 // pred_check_branch
      %199 = sbr.rel (0) target = $region105
    $region104: #{tpu_custom_call.1} parent=1 // pred_region
      %200 = dma.done [#allocation18], 256
    $region105: #{tpu_custom_call.1} parent=1 // pred_fallthru
      _
    // Predicated region
    $region106: #{tpu_custom_call.1} parent=1 // pred_check
      _
    $region107: #{tpu_custom_call.1} parent=1 // pred_check_branch
      %202 = sbr.rel (0) target = $region109
    $region108: #{tpu_custom_call.1} parent=1 // pred_region
      %203 = dma.done [#allocation21], 512
    $region109: #{tpu_custom_call.1} parent=1 // pred_fallthru
      _
    %v204 = vld [vmem:[#allocation14] sm:$0x1]
    %v205 = vld [vmem:[#allocation16] sm:$0x1]
    %v206 = vld [vmem:[#allocation19] sm:$0xff]
    %v207 = vld [vmem:[#allocation19 + $0x8] sm:$0xff]
    %v208 = vld [vmem:[%s12] sm:$0xff]
    %v209 = vld [vmem:[%s12 + $0x8] sm:$0xff]
    %v210 = vld [vmem:[%s12 + $0x10] sm:$0xff]
    %v211 = vld [vmem:[%s12 + $0x18] sm:$0xff]
    %v212 = vld [vmem:[%s14] sm:$0xff]
    %v213 = vld [vmem:[%s14 + $0x8] sm:$0xff]
    %v214 = vadd.f32 %v206, %v212
    %v215 = vadd.f32 %v207, %v213
    %v216 = vld [vmem:[#allocation20] sm:$0xff]
    %v217 = vld [vmem:[#allocation20 + $0x8] sm:$0xff]
    %v218 = vld [vmem:[#allocation20 + $0x10] sm:$0xff]
    %v219 = vld [vmem:[#allocation20 + $0x18] sm:$0xff]
    %v220 = vadd.f32 %v208, %v216
    %v221 = vadd.f32 %v209, %v217
    %v222 = vadd.f32 %v210, %v218
    %v223 = vadd.f32 %v211, %v219
    %v224 = vld [vmem:[#allocation2] sm:$0xff]
    %v225 = vld [vmem:[#allocation2 + $0x8] sm:$0xff]
    %v226 = vld [vmem:[#allocation2 + $0x10] sm:$0xff]
    %v227 = vld [vmem:[#allocation2 + $0x18] sm:$0xff]
    %v228 = vld [vmem:[%s1] sm:$0x1]
    %v230 = vlaneseq
    %v231 = vshrl.u32 %v230, 7
    %v232 = vsub.s32 0, %v231
    %v233 = vrot.slane %v228, %v232
    %vm235 = vcmask 261120
    %v237 = vsel %vm235, %v214, 0
    %v240 = vsel %vm235, %v215, 0
    %242 = vmatprep.subr.mxu0 0.0
    %243 = vmatpush1.msra.mxu0 %v224
    %244 = vmatprep.subr.mxu0 0.0
    %245 = vmatpush1.msra.mxu0 %v225
    %246 = vmatprep.subr.mxu0 0.0
    %247 = vmatpush1.msra.mxu0 %v226
    %248 = vmatprep.subr.mxu0 0.0
    %249 = vmatpush1.msra.mxu0 %v227
    %250 = vmatprep.subr.mxu0 0.0
    %251 = vmatpush1.msra.mxu0 0.0
    %252 = vmatprep.subr.mxu0 0.0
    %253 = vmatpush1.msra.mxu0 0.0
    %254 = vmatprep.subr.mxu0 0.0
    %255 = vmatpush1.msra.mxu0 0.0
    %256 = vmatprep.subr.mxu0 0.0
    %257 = vmatpush1.msra.mxu0 0.0
    %258 = vmatprep.subr.mxu0 0.0
    %259 = vmatpush1.msra.mxu0 0.0
    %260 = vmatprep.subr.mxu0 0.0
    %261 = vmatpush1.msra.mxu0 0.0
    %262 = vmatprep.subr.mxu0 0.0
    %263 = vmatpush1.msra.mxu0 0.0
    %264 = vmatprep.subr.mxu0 0.0
    %265 = vmatpush1.msra.mxu0 0.0
    %266 = vmatprep.subr.mxu0 0.0
    %267 = vmatpush1.msra.mxu0 0.0
    %268 = vmatprep.subr.mxu0 0.0
    %269 = vmatpush1.msra.mxu0 0.0
    %270 = vmatprep.subr.mxu0 0.0
    %271 = vmatpush1.msra.mxu0 0.0
    %272 = vmatprep.subr.mxu0 0.0
    %273 = vmatpush1.msra.mxu0 0.0
    %274 = vmatprep.subr.mxu0 0.0
    %275 = vmatpush1.msra.mxu0 0.0
    %276 = vmatprep.subr.mxu0 0.0
    %277 = vmatpush1.msra.mxu0 0.0
    %278 = vmatprep.subr.mxu0 0.0
    %279 = vmatpush1.msra.mxu0 0.0
    %280 = vmatprep.subr.mxu0 0.0
    %281 = vmatpush1.msra.mxu0 0.0
    %282 = vmatprep.subr.mxu0 0.0
    %283 = vmatpush1.msra.mxu0 0.0
    %284 = vmatprep.subr.mxu0 0.0
    %285 = vmatpush1.msra.mxu0 0.0
    %286 = vmatprep.subr.mxu0 0.0
    %287 = vmatpush1.msra.mxu0 0.0
    %288 = vmatprep.subr.mxu0 0.0
    %289 = vmatpush1.msra.mxu0 0.0
    %290 = vmatprep.subr.mxu0 0.0
    %291 = vmatpush1.msra.mxu0 0.0
    %292 = vmatprep.subr.mxu0 0.0
    %293 = vmatpush1.msra.mxu0 0.0
    %294 = vmatprep.subr.mxu0 0.0
    %295 = vmatpush1.msra.mxu0 0.0
    %296 = vmatprep.subr.mxu0 0.0
    %297 = vmatpush1.msra.mxu0 0.0
    %298 = vmatprep.subr.mxu0 0.0
    %299 = vmatpush1.msra.mxu0 0.0
    %300 = vmatprep.subr.mxu0 0.0
    %301 = vmatpush1.msra.mxu0 0.0
    %302 = vmatprep.subr.mxu0 0.0
    %303 = vmatpush1.msra.mxu0 0.0
    %304 = vmatprep.subr.mxu0 0.0
    %305 = vmatpush1.msra.mxu0 0.0
    %306 = vmatprep.mubr.f32.mxu0 0.0
    %307 = vmatmul.mubr.f32.gmra.mrb[0].mxu0 %v237
    %v308 = vpop.f32.mrb[0].mxu0
    %v309 = vadd.f32 %v233, %v308
    %v310 = vpop.f32.mrb[0].mxu0
    %311 = vmatprep.mubr.f32.mxu0 0.0
    %312 = vmatmul.mubr.f32.gmra.mrb[0].mxu0 %v240
    %v313 = vpop.f32.mrb[0].mxu0
    %v314 = vadd.f32 %v233, %v313
    %v315 = vpop.f32.mrb[0].mxu0
    %316 = vdwg.mxu0
    %v317 = vmul.f32 %v309, 0.35355338
    %v318 = vmul.f32 %v314, 0.35355338
    %v319 = vld [vmem:[#allocation5] sm:$0xff]
    %v320 = vld [vmem:[#allocation5 + $0x8] sm:$0xff]
    %v321 = vld [vmem:[#allocation5 + $0x10] sm:$0xff]
    %v322 = vld [vmem:[#allocation5 + $0x18] sm:$0xff]
    %v323 = vld [vmem:[#allocation7] sm:$0x1]
    %v325 = vlaneseq
    %v326 = vshrl.u32 %v325, 7
    %v327 = vsub.s32 0, %v326
    %v328 = vrot.slane %v323, %v327
    %v331 = vsel %vm235, %v220, 0
    %v334 = vsel %vm235, %v221, 0
    %v337 = vsel %vm235, %v222, 0
    %v340 = vsel %vm235, %v223, 0
    %342 = vmatprep.subr.mxu0 0.0
    %343 = vmatpush1.msra.mxu0 %v319
    %344 = vmatprep.subr.mxu0 0.0
    %345 = vmatpush1.msra.mxu0 %v320
    %346 = vmatprep.subr.mxu0 0.0
    %347 = vmatpush1.msra.mxu0 %v321
    %348 = vmatprep.subr.mxu0 0.0
    %349 = vmatpush1.msra.mxu0 %v322
    %350 = vmatprep.subr.mxu0 0.0
    %351 = vmatpush1.msra.mxu0 0.0
    %352 = vmatprep.subr.mxu0 0.0
    %353 = vmatpush1.msra.mxu0 0.0
    %354 = vmatprep.subr.mxu0 0.0
    %355 = vmatpush1.msra.mxu0 0.0
    %356 = vmatprep.subr.mxu0 0.0
    %357 = vmatpush1.msra.mxu0 0.0
    %358 = vmatprep.subr.mxu0 0.0
    %359 = vmatpush1.msra.mxu0 0.0
    %360 = vmatprep.subr.mxu0 0.0
    %361 = vmatpush1.msra.mxu0 0.0
    %362 = vmatprep.subr.mxu0 0.0
    %363 = vmatpush1.msra.mxu0 0.0
    %364 = vmatprep.subr.mxu0 0.0
    %365 = vmatpush1.msra.mxu0 0.0
    %366 = vmatprep.subr.mxu0 0.0
    %367 = vmatpush1.msra.mxu0 0.0
    %368 = vmatprep.subr.mxu0 0.0
    %369 = vmatpush1.msra.mxu0 0.0
    %370 = vmatprep.subr.mxu0 0.0
    %371 = vmatpush1.msra.mxu0 0.0
    %372 = vmatprep.subr.mxu0 0.0
    %373 = vmatpush1.msra.mxu0 0.0
    %374 = vmatprep.subr.mxu0 0.0
    %375 = vmatpush1.msra.mxu0 0.0
    %376 = vmatprep.subr.mxu0 0.0
    %377 = vmatpush1.msra.mxu0 0.0
    %378 = vmatprep.subr.mxu0 0.0
    %379 = vmatpush1.msra.mxu0 0.0
    %380 = vmatprep.subr.mxu0 0.0
    %381 = vmatpush1.msra.mxu0 0.0
    %382 = vmatprep.subr.mxu0 0.0
    %383 = vmatpush1.msra.mxu0 0.0
    %384 = vmatprep.subr.mxu0 0.0
    %385 = vmatpush1.msra.mxu0 0.0
    %386 = vmatprep.subr.mxu0 0.0
    %387 = vmatpush1.msra.mxu0 0.0
    %388 = vmatprep.subr.mxu0 0.0
    %389 = vmatpush1.msra.mxu0 0.0
    %390 = vmatprep.subr.mxu0 0.0
    %391 = vmatpush1.msra.mxu0 0.0
    %392 = vmatprep.subr.mxu0 0.0
    %393 = vmatpush1.msra.mxu0 0.0
    %394 = vmatprep.subr.mxu0 0.0
    %395 = vmatpush1.msra.mxu0 0.0
    %396 = vmatprep.subr.mxu0 0.0
    %397 = vmatpush1.msra.mxu0 0.0
    %398 = vmatprep.subr.mxu0 0.0
    %399 = vmatpush1.msra.mxu0 0.0
    %400 = vmatprep.subr.mxu0 0.0
    %401 = vmatpush1.msra.mxu0 0.0
    %402 = vmatprep.subr.mxu0 0.0
    %403 = vmatpush1.msra.mxu0 0.0
    %404 = vmatprep.subr.mxu0 0.0
    %405 = vmatpush1.msra.mxu0 0.0
    %406 = vmatprep.mubr.f32.mxu0 0.0
    %407 = vmatmul.mubr.f32.gmra.mrb[0].mxu0 %v331
    %v408 = vpop.f32.mrb[0].mxu0
    %v409 = vadd.f32 %v328, %v408
    %v410 = vpop.f32.mrb[0].mxu0
    %411 = vmatprep.mubr.f32.mxu0 0.0
    %412 = vmatmul.mubr.f32.gmra.mrb[0].mxu0 %v334
    %v413 = vpop.f32.mrb[0].mxu0
    %v414 = vadd.f32 %v328, %v413
    %v415 = vpop.f32.mrb[0].mxu0
    %416 = vmatprep.mubr.f32.mxu0 0.0
    %417 = vmatmul.mubr.f32.gmra.mrb[0].mxu0 %v337
    %v418 = vpop.f32.mrb[0].mxu0
    %v419 = vadd.f32 %v328, %v418
    %v420 = vpop.f32.mrb[0].mxu0
    %421 = vmatprep.mubr.f32.mxu0 0.0
    %422 = vmatmul.mubr.f32.gmra.mrb[0].mxu0 %v340
    %v423 = vpop.f32.mrb[0].mxu0
    %v424 = vadd.f32 %v328, %v423
    %v425 = vpop.f32.mrb[0].mxu0
    %426 = vdwg.mxu0
    %v427 = vld [vmem:[#allocation8] sm:$0xff]
    %v428 = vld [vmem:[#allocation8 + $0x8] sm:$0xff]
    %v429 = vld [vmem:[#allocation8 + $0x10] sm:$0xff]
    %v430 = vld [vmem:[#allocation8 + $0x18] sm:$0xff]
    %v431 = vld [vmem:[#allocation10] sm:$0x1]
    %v433 = vlaneseq
    %v434 = vshrl.u32 %v433, 7
    %v435 = vsub.s32 0, %v434
    %v436 = vrot.slane %v431, %v435
    %v439 = vsel %vm235, %v208, 0
    %v442 = vsel %vm235, %v209, 0
    %v445 = vsel %vm235, %v210, 0
    %v448 = vsel %vm235, %v211, 0
    %450 = vmatprep.subr.mxu0 0.0
    %451 = vmatpush1.msra.mxu0 %v427
    %452 = vmatprep.subr.mxu0 0.0
    %453 = vmatpush1.msra.mxu0 %v428
    %454 = vmatprep.subr.mxu0 0.0
    %455 = vmatpush1.msra.mxu0 %v429
    %456 = vmatprep.subr.mxu0 0.0
    %457 = vmatpush1.msra.mxu0 %v430
    %458 = vmatprep.subr.mxu0 0.0
    %459 = vmatpush1.msra.mxu0 0.0
    %460 = vmatprep.subr.mxu0 0.0
    %461 = vmatpush1.msra.mxu0 0.0
    %462 = vmatprep.subr.mxu0 0.0
    %463 = vmatpush1.msra.mxu0 0.0
    %464 = vmatprep.subr.mxu0 0.0
    %465 = vmatpush1.msra.mxu0 0.0
    %466 = vmatprep.subr.mxu0 0.0
    %467 = vmatpush1.msra.mxu0 0.0
    %468 = vmatprep.subr.mxu0 0.0
    %469 = vmatpush1.msra.mxu0 0.0
    %470 = vmatprep.subr.mxu0 0.0
    %471 = vmatpush1.msra.mxu0 0.0
    %472 = vmatprep.subr.mxu0 0.0
    %473 = vmatpush1.msra.mxu0 0.0
    %474 = vmatprep.subr.mxu0 0.0
    %475 = vmatpush1.msra.mxu0 0.0
    %476 = vmatprep.subr.mxu0 0.0
    %477 = vmatpush1.msra.mxu0 0.0
    %478 = vmatprep.subr.mxu0 0.0
    %479 = vmatpush1.msra.mxu0 0.0
    %480 = vmatprep.subr.mxu0 0.0
    %481 = vmatpush1.msra.mxu0 0.0
    %482 = vmatprep.subr.mxu0 0.0
    %483 = vmatpush1.msra.mxu0 0.0
    %484 = vmatprep.subr.mxu0 0.0
    %485 = vmatpush1.msra.mxu0 0.0
    %486 = vmatprep.subr.mxu0 0.0
    %487 = vmatpush1.msra.mxu0 0.0
    %488 = vmatprep.subr.mxu0 0.0
    %489 = vmatpush1.msra.mxu0 0.0
    %490 = vmatprep.subr.mxu0 0.0
    %491 = vmatpush1.msra.mxu0 0.0
    %492 = vmatprep.subr.mxu0 0.0
    %493 = vmatpush1.msra.mxu0 0.0
    %494 = vmatprep.subr.mxu0 0.0
    %495 = vmatpush1.msra.mxu0 0.0
    %496 = vmatprep.subr.mxu0 0.0
    %497 = vmatpush1.msra.mxu0 0.0
    %498 = vmatprep.subr.mxu0 0.0
    %499 = vmatpush1.msra.mxu0 0.0
    %500 = vmatprep.subr.mxu0 0.0
    %501 = vmatpush1.msra.mxu0 0.0
    %502 = vmatprep.subr.mxu0 0.0
    %503 = vmatpush1.msra.mxu0 0.0
    %504 = vmatprep.subr.mxu0 0.0
    %505 = vmatpush1.msra.mxu0 0.0
    %506 = vmatprep.subr.mxu0 0.0
    %507 = vmatpush1.msra.mxu0 0.0
    %508 = vmatprep.subr.mxu0 0.0
    %509 = vmatpush1.msra.mxu0 0.0
    %510 = vmatprep.subr.mxu0 0.0
    %511 = vmatpush1.msra.mxu0 0.0
    %512 = vmatprep.subr.mxu0 0.0
    %513 = vmatpush1.msra.mxu0 0.0
    %514 = vmatprep.mubr.f32.mxu0 0.0
    %515 = vmatmul.mubr.f32.gmra.mrb[0].mxu0 %v439
    %v516 = vpop.f32.mrb[0].mxu0
    %v517 = vadd.f32 %v436, %v516
    %v518 = vpop.f32.mrb[0].mxu0
    %519 = vmatprep.mubr.f32.mxu0 0.0
    %520 = vmatmul.mubr.f32.gmra.mrb[0].mxu0 %v442
    %v521 = vpop.f32.mrb[0].mxu0
    %v522 = vadd.f32 %v436, %v521
    %v523 = vpop.f32.mrb[0].mxu0
    %524 = vmatprep.mubr.f32.mxu0 0.0
    %525 = vmatmul.mubr.f32.gmra.mrb[0].mxu0 %v445
    %v526 = vpop.f32.mrb[0].mxu0
    %v527 = vadd.f32 %v436, %v526
    %v528 = vpop.f32.mrb[0].mxu0
    %529 = vmatprep.mubr.f32.mxu0 0.0
    %530 = vmatmul.mubr.f32.gmra.mrb[0].mxu0 %v448
    %v531 = vpop.f32.mrb[0].mxu0
    %v532 = vadd.f32 %v436, %v531
    %v533 = vpop.f32.mrb[0].mxu0
    %534 = vdwg.mxu0
    %537 = vrot.lane.b32.xlu0 %v317, 120
    %v538 = vpop.permute.xlu0 %537
    %539 = vrot.lane.b32.xlu0 %v318, 120
    %v540 = vpop.permute.xlu0 %539
    %543 = vrot.lane.b32.xlu0 %v317, 112
    %v544 = vpop.permute.xlu0 %543
    %545 = vrot.lane.b32.xlu0 %v318, 112
    %v546 = vpop.permute.xlu0 %545
    %549 = vrot.lane.b32.xlu0 %v317, 104
    %v550 = vpop.permute.xlu0 %549
    %551 = vrot.lane.b32.xlu0 %v318, 104
    %v552 = vpop.permute.xlu0 %551
    %v555 = vcombine.low %v317, %v544
    %v556 = vcombine.high %v317, %v544
    %v558 = vunpack.c.l.s4 1983009808
    %v559 = vunpack.c.0.s8 %v558
    %v560 = vlaneseq
    %v561 = vshrl.u32 %v560, 7
    %v562 = vsub.s32 %v559, %v561
    %v563 = vrot.slane %v555, %v562
    %v565 = vunpack.c.l.s4 1983009808
    %v566 = vunpack.c.0.s8 %v565
    %v567 = vlaneseq
    %v568 = vshrl.u32 %v567, 7
    %v569 = vsub.s32 %v566, %v568
    %v570 = vrot.slane %v556, %v569
    %v571 = vcombine.low %v538, %v550
    %v572 = vcombine.high %v538, %v550
    %v574 = vunpack.c.l.s4 1983009808
    %v575 = vunpack.c.0.s8 %v574
    %v576 = vlaneseq
    %v577 = vshrl.u32 %v576, 7
    %v578 = vsub.s32 %v575, %v577
    %v579 = vrot.slane %v571, %v578
    %v581 = vunpack.c.l.s4 1983009808
    %v582 = vunpack.c.0.s8 %v581
    %v583 = vlaneseq
    %v584 = vshrl.u32 %v583, 7
    %v585 = vsub.s32 %v582, %v584
    %v586 = vrot.slane %v572, %v585
    %v587 = vcombine.low %v563, %v579
    %v588 = vcombine.high %v563, %v579
    %v590 = vunpack.c.l.s4 1934713408
    %v591 = vunpack.c.0.s8 %v590
    %v592 = vlaneseq
    %v593 = vshrl.u32 %v592, 7
    %v594 = vsub.s32 %v591, %v593
    %v595 = vrot.slane %v587, %v594
    %v597 = vunpack.c.l.s4 1934713408
    %v598 = vunpack.c.0.s8 %v597
    %v599 = vlaneseq
    %v600 = vshrl.u32 %v599, 7
    %v601 = vsub.s32 %v598, %v600
    %v602 = vrot.slane %v588, %v601
    %v603 = vcombine.low %v570, %v586
    %v604 = vcombine.high %v570, %v586
    %v606 = vunpack.c.l.s4 1934713408
    %v607 = vunpack.c.0.s8 %v606
    %v608 = vlaneseq
    %v609 = vshrl.u32 %v608, 7
    %v610 = vsub.s32 %v607, %v609
    %v611 = vrot.slane %v603, %v610
    %v613 = vunpack.c.l.s4 1934713408
    %v614 = vunpack.c.0.s8 %v613
    %v615 = vlaneseq
    %v616 = vshrl.u32 %v615, 7
    %v617 = vsub.s32 %v614, %v616
    %v618 = vrot.slane %v604, %v617
    %v619 = vcombine.high %v595, 0.0
    %v620 = vcombine.high %v602, 0.0
    %v621 = vcombine.high %v611, 0.0
    %v622 = vcombine.high %v618, 0.0
    %v623 = vcombine.low %v318, %v546
    %v624 = vcombine.high %v318, %v546
    %v626 = vunpack.c.l.s4 1983009808
    %v627 = vunpack.c.0.s8 %v626
    %v628 = vlaneseq
    %v629 = vshrl.u32 %v628, 7
    %v630 = vsub.s32 %v627, %v629
    %v631 = vrot.slane %v623, %v630
    %v633 = vunpack.c.l.s4 1983009808
    %v634 = vunpack.c.0.s8 %v633
    %v635 = vlaneseq
    %v636 = vshrl.u32 %v635, 7
    %v637 = vsub.s32 %v634, %v636
    %v638 = vrot.slane %v624, %v637
    %v639 = vcombine.low %v540, %v552
    %v640 = vcombine.high %v540, %v552
    %v642 = vunpack.c.l.s4 1983009808
    %v643 = vunpack.c.0.s8 %v642
    %v644 = vlaneseq
    %v645 = vshrl.u32 %v644, 7
    %v646 = vsub.s32 %v643, %v645
    %v647 = vrot.slane %v639, %v646
    %v649 = vunpack.c.l.s4 1983009808
    %v650 = vunpack.c.0.s8 %v649
    %v651 = vlaneseq
    %v652 = vshrl.u32 %v651, 7
    %v653 = vsub.s32 %v650, %v652
    %v654 = vrot.slane %v640, %v653
    %v655 = vcombine.low %v631, %v647
    %v656 = vcombine.high %v631, %v647
    %v658 = vunpack.c.l.s4 1934713408
    %v659 = vunpack.c.0.s8 %v658
    %v660 = vlaneseq
    %v661 = vshrl.u32 %v660, 7
    %v662 = vsub.s32 %v659, %v661
    %v663 = vrot.slane %v655, %v662
    %v665 = vunpack.c.l.s4 1934713408
    %v666 = vunpack.c.0.s8 %v665
    %v667 = vlaneseq
    %v668 = vshrl.u32 %v667, 7
    %v669 = vsub.s32 %v666, %v668
    %v670 = vrot.slane %v656, %v669
    %v671 = vcombine.low %v638, %v654
    %v672 = vcombine.high %v638, %v654
    %v674 = vunpack.c.l.s4 1934713408
    %v675 = vunpack.c.0.s8 %v674
    %v676 = vlaneseq
    %v677 = vshrl.u32 %v676, 7
    %v678 = vsub.s32 %v675, %v677
    %v679 = vrot.slane %v671, %v678
    %v681 = vunpack.c.l.s4 1934713408
    %v682 = vunpack.c.0.s8 %v681
    %v683 = vlaneseq
    %v684 = vshrl.u32 %v683, 7
    %v685 = vsub.s32 %v682, %v684
    %v686 = vrot.slane %v672, %v685
    %v687 = vcombine.high %v663, 0.0
    %v688 = vcombine.high %v670, 0.0
    %v689 = vcombine.high %v679, 0.0
    %v690 = vcombine.high %v686, 0.0
    %v691 = vcombine.low %v595, %v602
    %v693 = vunpack.c.l.s4 1983009808
    %v694 = vunpack.c.0.s8 %v693
    %v695 = vlaneseq
    %v696 = vshrl.u32 %v695, 7
    %v697 = vsub.s32 %v694, %v696
    %v698 = vrot.slane %v691, %v697
    %v699 = vcombine.low %v619, %v620
    %v701 = vunpack.c.l.s4 1983009808
    %v702 = vunpack.c.0.s8 %v701
    %v703 = vlaneseq
    %v704 = vshrl.u32 %v703, 7
    %v705 = vsub.s32 %v702, %v704
    %v706 = vrot.slane %v699, %v705
    %v707 = vcombine.low %v611, %v618
    %v709 = vunpack.c.l.s4 1983009808
    %v710 = vunpack.c.0.s8 %v709
    %v711 = vlaneseq
    %v712 = vshrl.u32 %v711, 7
    %v713 = vsub.s32 %v710, %v712
    %v714 = vrot.slane %v707, %v713
    %v715 = vcombine.low %v621, %v622
    %v717 = vunpack.c.l.s4 1983009808
    %v718 = vunpack.c.0.s8 %v717
    %v719 = vlaneseq
    %v720 = vshrl.u32 %v719, 7
    %v721 = vsub.s32 %v718, %v720
    %v722 = vrot.slane %v715, %v721
    %v723 = vcombine.low %v698, %v706
    %v724 = vcombine.high %v698, %v706
    %v726 = vunpack.c.l.s4 1934713408
    %v727 = vunpack.c.0.s8 %v726
    %v728 = vlaneseq
    %v729 = vshrl.u32 %v728, 7
    %v730 = vsub.s32 %v727, %v729
    %v731 = vrot.slane %v723, %v730
    %v733 = vunpack.c.l.s4 1934713408
    %v734 = vunpack.c.0.s8 %v733
    %v735 = vlaneseq
    %v736 = vshrl.u32 %v735, 7
    %v737 = vsub.s32 %v734, %v736
    %v738 = vrot.slane %v724, %v737
    %v739 = vcombine.low %v714, %v722
    %v740 = vcombine.high %v714, %v722
    %v742 = vunpack.c.l.s4 1934713408
    %v743 = vunpack.c.0.s8 %v742
    %v744 = vlaneseq
    %v745 = vshrl.u32 %v744, 7
    %v746 = vsub.s32 %v743, %v745
    %v747 = vrot.slane %v739, %v746
    %v749 = vunpack.c.l.s4 1934713408
    %v750 = vunpack.c.0.s8 %v749
    %v751 = vlaneseq
    %v752 = vshrl.u32 %v751, 7
    %v753 = vsub.s32 %v750, %v752
    %v754 = vrot.slane %v740, %v753
    %v755 = vcombine.low %v731, %v747
    %v756 = vcombine.high %v731, %v747
    %v757 = vcombine.low %v738, %v754
    %v758 = vcombine.high %v738, %v754
    %v759 = vcombine.low %v663, %v670
    %v761 = vunpack.c.l.s4 1983009808
    %v762 = vunpack.c.0.s8 %v761
    %v763 = vlaneseq
    %v764 = vshrl.u32 %v763, 7
    %v765 = vsub.s32 %v762, %v764
    %v766 = vrot.slane %v759, %v765
    %v767 = vcombine.low %v687, %v688
    %v769 = vunpack.c.l.s4 1983009808
    %v770 = vunpack.c.0.s8 %v769
    %v771 = vlaneseq
    %v772 = vshrl.u32 %v771, 7
    %v773 = vsub.s32 %v770, %v772
    %v774 = vrot.slane %v767, %v773
    %v775 = vcombine.low %v679, %v686
    %v777 = vunpack.c.l.s4 1983009808
    %v778 = vunpack.c.0.s8 %v777
    %v779 = vlaneseq
    %v780 = vshrl.u32 %v779, 7
    %v781 = vsub.s32 %v778, %v780
    %v782 = vrot.slane %v775, %v781
    %v783 = vcombine.low %v689, %v690
    %v785 = vunpack.c.l.s4 1983009808
    %v786 = vunpack.c.0.s8 %v785
    %v787 = vlaneseq
    %v788 = vshrl.u32 %v787, 7
    %v789 = vsub.s32 %v786, %v788
    %v790 = vrot.slane %v783, %v789
    %v791 = vcombine.low %v766, %v774
    %v792 = vcombine.high %v766, %v774
    %v794 = vunpack.c.l.s4 1934713408
    %v795 = vunpack.c.0.s8 %v794
    %v796 = vlaneseq
    %v797 = vshrl.u32 %v796, 7
    %v798 = vsub.s32 %v795, %v797
    %v799 = vrot.slane %v791, %v798
    %v801 = vunpack.c.l.s4 1934713408
    %v802 = vunpack.c.0.s8 %v801
    %v803 = vlaneseq
    %v804 = vshrl.u32 %v803, 7
    %v805 = vsub.s32 %v802, %v804
    %v806 = vrot.slane %v792, %v805
    %v807 = vcombine.low %v782, %v790
    %v808 = vcombine.high %v782, %v790
    %v810 = vunpack.c.l.s4 1934713408
    %v811 = vunpack.c.0.s8 %v810
    %v812 = vlaneseq
    %v813 = vshrl.u32 %v812, 7
    %v814 = vsub.s32 %v811, %v813
    %v815 = vrot.slane %v807, %v814
    %v817 = vunpack.c.l.s4 1934713408
    %v818 = vunpack.c.0.s8 %v817
    %v819 = vlaneseq
    %v820 = vshrl.u32 %v819, 7
    %v821 = vsub.s32 %v818, %v820
    %v822 = vrot.slane %v808, %v821
    %v823 = vcombine.low %v799, %v815
    %v824 = vcombine.high %v799, %v815
    %v825 = vcombine.low %v806, %v822
    %v826 = vcombine.high %v806, %v822
    %831 = vrot.lane.b32.xlu0 %v409, 120
    %v832 = vpop.permute.xlu0 %831
    %833 = vrot.lane.b32.xlu0 %v414, 120
    %v834 = vpop.permute.xlu0 %833
    %835 = vrot.lane.b32.xlu0 %v419, 120
    %v836 = vpop.permute.xlu0 %835
    %837 = vrot.lane.b32.xlu0 %v424, 120
    %v838 = vpop.permute.xlu0 %837
    %843 = vrot.lane.b32.xlu0 %v409, 112
    %v844 = vpop.permute.xlu0 %843
    %845 = vrot.lane.b32.xlu0 %v414, 112
    %v846 = vpop.permute.xlu0 %845
    %847 = vrot.lane.b32.xlu0 %v419, 112
    %v848 = vpop.permute.xlu0 %847
    %849 = vrot.lane.b32.xlu0 %v424, 112
    %v850 = vpop.permute.xlu0 %849
    %855 = vrot.lane.b32.xlu0 %v409, 104
    %v856 = vpop.permute.xlu0 %855
    %857 = vrot.lane.b32.xlu0 %v414, 104
    %v858 = vpop.permute.xlu0 %857
    %859 = vrot.lane.b32.xlu0 %v419, 104
    %v860 = vpop.permute.xlu0 %859
    %861 = vrot.lane.b32.xlu0 %v424, 104
    %v862 = vpop.permute.xlu0 %861
    %v867 = vcombine.low %v409, %v844
    %v868 = vcombine.high %v409, %v844
    %v870 = vunpack.c.l.s4 1983009808
    %v871 = vunpack.c.0.s8 %v870
    %v872 = vlaneseq
    %v873 = vshrl.u32 %v872, 7
    %v874 = vsub.s32 %v871, %v873
    %v875 = vrot.slane %v867, %v874
    %v877 = vunpack.c.l.s4 1983009808
    %v878 = vunpack.c.0.s8 %v877
    %v879 = vlaneseq
    %v880 = vshrl.u32 %v879, 7
    %v881 = vsub.s32 %v878, %v880
    %v882 = vrot.slane %v868, %v881
    %v883 = vcombine.low %v832, %v856
    %v884 = vcombine.high %v832, %v856
    %v886 = vunpack.c.l.s4 1983009808
    %v887 = vunpack.c.0.s8 %v886
    %v888 = vlaneseq
    %v889 = vshrl.u32 %v888, 7
    %v890 = vsub.s32 %v887, %v889
    %v891 = vrot.slane %v883, %v890
    %v893 = vunpack.c.l.s4 1983009808
    %v894 = vunpack.c.0.s8 %v893
    %v895 = vlaneseq
    %v896 = vshrl.u32 %v895, 7
    %v897 = vsub.s32 %v894, %v896
    %v898 = vrot.slane %v884, %v897
    %v899 = vcombine.low %v875, %v891
    %v900 = vcombine.high %v875, %v891
    %v902 = vunpack.c.l.s4 1934713408
    %v903 = vunpack.c.0.s8 %v902
    %v904 = vlaneseq
    %v905 = vshrl.u32 %v904, 7
    %v906 = vsub.s32 %v903, %v905
    %v907 = vrot.slane %v899, %v906
    %v909 = vunpack.c.l.s4 1934713408
    %v910 = vunpack.c.0.s8 %v909
    %v911 = vlaneseq
    %v912 = vshrl.u32 %v911, 7
    %v913 = vsub.s32 %v910, %v912
    %v914 = vrot.slane %v900, %v913
    %v915 = vcombine.low %v882, %v898
    %v916 = vcombine.high %v882, %v898
    %v918 = vunpack.c.l.s4 1934713408
    %v919 = vunpack.c.0.s8 %v918
    %v920 = vlaneseq
    %v921 = vshrl.u32 %v920, 7
    %v922 = vsub.s32 %v919, %v921
    %v923 = vrot.slane %v915, %v922
    %v925 = vunpack.c.l.s4 1934713408
    %v926 = vunpack.c.0.s8 %v925
    %v927 = vlaneseq
    %v928 = vshrl.u32 %v927, 7
    %v929 = vsub.s32 %v926, %v928
    %v930 = vrot.slane %v916, %v929
    %v931 = vcombine.high %v907, 0.0
    %v932 = vcombine.high %v914, 0.0
    %v933 = vcombine.high %v923, 0.0
    %v934 = vcombine.high %v930, 0.0
    %v935 = vcombine.low %v414, %v846
    %v936 = vcombine.high %v414, %v846
    %v938 = vunpack.c.l.s4 1983009808
    %v939 = vunpack.c.0.s8 %v938
    %v940 = vlaneseq
    %v941 = vshrl.u32 %v940, 7
    %v942 = vsub.s32 %v939, %v941
    %v943 = vrot.slane %v935, %v942
    %v945 = vunpack.c.l.s4 1983009808
    %v946 = vunpack.c.0.s8 %v945
    %v947 = vlaneseq
    %v948 = vshrl.u32 %v947, 7
    %v949 = vsub.s32 %v946, %v948
    %v950 = vrot.slane %v936, %v949
    %v951 = vcombine.low %v834, %v858
    %v952 = vcombine.high %v834, %v858
    %v954 = vunpack.c.l.s4 1983009808
    %v955 = vunpack.c.0.s8 %v954
    %v956 = vlaneseq
    %v957 = vshrl.u32 %v956, 7
    %v958 = vsub.s32 %v955, %v957
    %v959 = vrot.slane %v951, %v958
    %v961 = vunpack.c.l.s4 1983009808
    %v962 = vunpack.c.0.s8 %v961
    %v963 = vlaneseq
    %v964 = vshrl.u32 %v963, 7
    %v965 = vsub.s32 %v962, %v964
    %v966 = vrot.slane %v952, %v965
    %v967 = vcombine.low %v943, %v959
    %v968 = vcombine.high %v943, %v959
    %v970 = vunpack.c.l.s4 1934713408
    %v971 = vunpack.c.0.s8 %v970
    %v972 = vlaneseq
    %v973 = vshrl.u32 %v972, 7
    %v974 = vsub.s32 %v971, %v973
    %v975 = vrot.slane %v967, %v974
    %v977 = vunpack.c.l.s4 1934713408
    %v978 = vunpack.c.0.s8 %v977
    %v979 = vlaneseq
    %v980 = vshrl.u32 %v979, 7
    %v981 = vsub.s32 %v978, %v980
    %v982 = vrot.slane %v968, %v981
    %v983 = vcombine.low %v950, %v966
    %v984 = vcombine.high %v950, %v966
    %v986 = vunpack.c.l.s4 1934713408
    %v987 = vunpack.c.0.s8 %v986
    %v988 = vlaneseq
    %v989 = vshrl.u32 %v988, 7
    %v990 = vsub.s32 %v987, %v989
    %v991 = vrot.slane %v983, %v990
    %v993 = vunpack.c.l.s4 1934713408
    %v994 = vunpack.c.0.s8 %v993
    %v995 = vlaneseq
    %v996 = vshrl.u32 %v995, 7
    %v997 = vsub.s32 %v994, %v996
    %v998 = vrot.slane %v984, %v997
    %v999 = vcombine.high %v975, 0.0
    %v1000 = vcombine.high %v982, 0.0
    %v1001 = vcombine.high %v991, 0.0
    %v1002 = vcombine.high %v998, 0.0
    %v1003 = vcombine.low %v419, %v848
    %v1004 = vcombine.high %v419, %v848
    %v1006 = vunpack.c.l.s4 1983009808
    %v1007 = vunpack.c.0.s8 %v1006
    %v1008 = vlaneseq
    %v1009 = vshrl.u32 %v1008, 7
    %v1010 = vsub.s32 %v1007, %v1009
    %v1011 = vrot.slane %v1003, %v1010
    %v1013 = vunpack.c.l.s4 1983009808
    %v1014 = vunpack.c.0.s8 %v1013
    %v1015 = vlaneseq
    %v1016 = vshrl.u32 %v1015, 7
    %v1017 = vsub.s32 %v1014, %v1016
    %v1018 = vrot.slane %v1004, %v1017
    %v1019 = vcombine.low %v836, %v860
    %v1020 = vcombine.high %v836, %v860
    %v1022 = vunpack.c.l.s4 1983009808
    %v1023 = vunpack.c.0.s8 %v1022
    %v1024 = vlaneseq
    %v1025 = vshrl.u32 %v1024, 7
    %v1026 = vsub.s32 %v1023, %v1025
    %v1027 = vrot.slane %v1019, %v1026
    %v1029 = vunpack.c.l.s4 1983009808
    %v1030 = vunpack.c.0.s8 %v1029
    %v1031 = vlaneseq
    %v1032 = vshrl.u32 %v1031, 7
    %v1033 = vsub.s32 %v1030, %v1032
    %v1034 = vrot.slane %v1020, %v1033
    %v1035 = vcombine.low %v1011, %v1027
    %v1036 = vcombine.high %v1011, %v1027
    %v1038 = vunpack.c.l.s4 1934713408
    %v1039 = vunpack.c.0.s8 %v1038
    %v1040 = vlaneseq
    %v1041 = vshrl.u32 %v1040, 7
    %v1042 = vsub.s32 %v1039, %v1041
    %v1043 = vrot.slane %v1035, %v1042
    %v1045 = vunpack.c.l.s4 1934713408
    %v1046 = vunpack.c.0.s8 %v1045
    %v1047 = vlaneseq
    %v1048 = vshrl.u32 %v1047, 7
    %v1049 = vsub.s32 %v1046, %v1048
    %v1050 = vrot.slane %v1036, %v1049
    %v1051 = vcombine.low %v1018, %v1034
    %v1052 = vcombine.high %v1018, %v1034
    %v1054 = vunpack.c.l.s4 1934713408
    %v1055 = vunpack.c.0.s8 %v1054
    %v1056 = vlaneseq
    %v1057 = vshrl.u32 %v1056, 7
    %v1058 = vsub.s32 %v1055, %v1057
    %v1059 = vrot.slane %v1051, %v1058
    %v1061 = vunpack.c.l.s4 1934713408
    %v1062 = vunpack.c.0.s8 %v1061
    %v1063 = vlaneseq
    %v1064 = vshrl.u32 %v1063, 7
    %v1065 = vsub.s32 %v1062, %v1064
    %v1066 = vrot.slane %v1052, %v1065
    %v1067 = vcombine.high %v1043, 0.0
    %v1068 = vcombine.high %v1050, 0.0
    %v1069 = vcombine.high %v1059, 0.0
    %v1070 = vcombine.high %v1066, 0.0
    %v1071 = vcombine.low %v424, %v850
    %v1072 = vcombine.high %v424, %v850
    %v1074 = vunpack.c.l.s4 1983009808
    %v1075 = vunpack.c.0.s8 %v1074
    %v1076 = vlaneseq
    %v1077 = vshrl.u32 %v1076, 7
    %v1078 = vsub.s32 %v1075, %v1077
    %v1079 = vrot.slane %v1071, %v1078
    %v1081 = vunpack.c.l.s4 1983009808
    %v1082 = vunpack.c.0.s8 %v1081
    %v1083 = vlaneseq
    %v1084 = vshrl.u32 %v1083, 7
    %v1085 = vsub.s32 %v1082, %v1084
    %v1086 = vrot.slane %v1072, %v1085
    %v1087 = vcombine.low %v838, %v862
    %v1088 = vcombine.high %v838, %v862
    %v1090 = vunpack.c.l.s4 1983009808
    %v1091 = vunpack.c.0.s8 %v1090
    %v1092 = vlaneseq
    %v1093 = vshrl.u32 %v1092, 7
    %v1094 = vsub.s32 %v1091, %v1093
    %v1095 = vrot.slane %v1087, %v1094
    %v1097 = vunpack.c.l.s4 1983009808
    %v1098 = vunpack.c.0.s8 %v1097
    %v1099 = vlaneseq
    %v1100 = vshrl.u32 %v1099, 7
    %v1101 = vsub.s32 %v1098, %v1100
    %v1102 = vrot.slane %v1088, %v1101
    %v1103 = vcombine.low %v1079, %v1095
    %v1104 = vcombine.high %v1079, %v1095
    %v1106 = vunpack.c.l.s4 1934713408
    %v1107 = vunpack.c.0.s8 %v1106
    %v1108 = vlaneseq
    %v1109 = vshrl.u32 %v1108, 7
    %v1110 = vsub.s32 %v1107, %v1109
    %v1111 = vrot.slane %v1103, %v1110
    %v1113 = vunpack.c.l.s4 1934713408
    %v1114 = vunpack.c.0.s8 %v1113
    %v1115 = vlaneseq
    %v1116 = vshrl.u32 %v1115, 7
    %v1117 = vsub.s32 %v1114, %v1116
    %v1118 = vrot.slane %v1104, %v1117
    %v1119 = vcombine.low %v1086, %v1102
    %v1120 = vcombine.high %v1086, %v1102
    %v1122 = vunpack.c.l.s4 1934713408
    %v1123 = vunpack.c.0.s8 %v1122
    %v1124 = vlaneseq
    %v1125 = vshrl.u32 %v1124, 7
    %v1126 = vsub.s32 %v1123, %v1125
    %v1127 = vrot.slane %v1119, %v1126
    %v1129 = vunpack.c.l.s4 1934713408
    %v1130 = vunpack.c.0.s8 %v1129
    %v1131 = vlaneseq
    %v1132 = vshrl.u32 %v1131, 7
    %v1133 = vsub.s32 %v1130, %v1132
    %v1134 = vrot.slane %v1120, %v1133
    %v1135 = vcombine.high %v1111, 0.0
    %v1136 = vcombine.high %v1118, 0.0
    %v1137 = vcombine.high %v1127, 0.0
    %v1138 = vcombine.high %v1134, 0.0
    %v1139 = vcombine.low %v907, %v914
    %v1141 = vunpack.c.l.s4 1983009808
    %v1142 = vunpack.c.0.s8 %v1141
    %v1143 = vlaneseq
    %v1144 = vshrl.u32 %v1143, 7
    %v1145 = vsub.s32 %v1142, %v1144
    %v1146 = vrot.slane %v1139, %v1145
    %v1147 = vcombine.low %v931, %v932
    %v1149 = vunpack.c.l.s4 1983009808
    %v1150 = vunpack.c.0.s8 %v1149
    %v1151 = vlaneseq
    %v1152 = vshrl.u32 %v1151, 7
    %v1153 = vsub.s32 %v1150, %v1152
    %v1154 = vrot.slane %v1147, %v1153
    %v1155 = vcombine.low %v923, %v930
    %v1157 = vunpack.c.l.s4 1983009808
    %v1158 = vunpack.c.0.s8 %v1157
    %v1159 = vlaneseq
    %v1160 = vshrl.u32 %v1159, 7
    %v1161 = vsub.s32 %v1158, %v1160
    %v1162 = vrot.slane %v1155, %v1161
    %v1163 = vcombine.low %v933, %v934
    %v1165 = vunpack.c.l.s4 1983009808
    %v1166 = vunpack.c.0.s8 %v1165
    %v1167 = vlaneseq
    %v1168 = vshrl.u32 %v1167, 7
    %v1169 = vsub.s32 %v1166, %v1168
    %v1170 = vrot.slane %v1163, %v1169
    %v1171 = vcombine.low %v1146, %v1154
    %v1172 = vcombine.high %v1146, %v1154
    %v1174 = vunpack.c.l.s4 1934713408
    %v1175 = vunpack.c.0.s8 %v1174
    %v1176 = vlaneseq
    %v1177 = vshrl.u32 %v1176, 7
    %v1178 = vsub.s32 %v1175, %v1177
    %v1179 = vrot.slane %v1171, %v1178
    %v1181 = vunpack.c.l.s4 1934713408
    %v1182 = vunpack.c.0.s8 %v1181
    %v1183 = vlaneseq
    %v1184 = vshrl.u32 %v1183, 7
    %v1185 = vsub.s32 %v1182, %v1184
    %v1186 = vrot.slane %v1172, %v1185
    %v1187 = vcombine.low %v1162, %v1170
    %v1188 = vcombine.high %v1162, %v1170
    %v1190 = vunpack.c.l.s4 1934713408
    %v1191 = vunpack.c.0.s8 %v1190
    %v1192 = vlaneseq
    %v1193 = vshrl.u32 %v1192, 7
    %v1194 = vsub.s32 %v1191, %v1193
    %v1195 = vrot.slane %v1187, %v1194
    %v1197 = vunpack.c.l.s4 1934713408
    %v1198 = vunpack.c.0.s8 %v1197
    %v1199 = vlaneseq
    %v1200 = vshrl.u32 %v1199, 7
    %v1201 = vsub.s32 %v1198, %v1200
    %v1202 = vrot.slane %v1188, %v1201
    %v1203 = vcombine.low %v1179, %v1195
    %v1204 = vcombine.high %v1179, %v1195
    %v1205 = vcombine.low %v1186, %v1202
    %v1206 = vcombine.high %v1186, %v1202
    %v1207 = vcombine.low %v975, %v982
    %v1209 = vunpack.c.l.s4 1983009808
    %v1210 = vunpack.c.0.s8 %v1209
    %v1211 = vlaneseq
    %v1212 = vshrl.u32 %v1211, 7
    %v1213 = vsub.s32 %v1210, %v1212
    %v1214 = vrot.slane %v1207, %v1213
    %v1215 = vcombine.low %v999, %v1000
    %v1217 = vunpack.c.l.s4 1983009808
    %v1218 = vunpack.c.0.s8 %v1217
    %v1219 = vlaneseq
    %v1220 = vshrl.u32 %v1219, 7
    %v1221 = vsub.s32 %v1218, %v1220
    %v1222 = vrot.slane %v1215, %v1221
    %v1223 = vcombine.low %v991, %v998
    %v1225 = vunpack.c.l.s4 1983009808
    %v1226 = vunpack.c.0.s8 %v1225
    %v1227 = vlaneseq
    %v1228 = vshrl.u32 %v1227, 7
    %v1229 = vsub.s32 %v1226, %v1228
    %v1230 = vrot.slane %v1223, %v1229
    %v1231 = vcombine.low %v1001, %v1002
    %v1233 = vunpack.c.l.s4 1983009808
    %v1234 = vunpack.c.0.s8 %v1233
    %v1235 = vlaneseq
    %v1236 = vshrl.u32 %v1235, 7
    %v1237 = vsub.s32 %v1234, %v1236
    %v1238 = vrot.slane %v1231, %v1237
    %v1239 = vcombine.low %v1214, %v1222
    %v1240 = vcombine.high %v1214, %v1222
    %v1242 = vunpack.c.l.s4 1934713408
    %v1243 = vunpack.c.0.s8 %v1242
    %v1244 = vlaneseq
    %v1245 = vshrl.u32 %v1244, 7
    %v1246 = vsub.s32 %v1243, %v1245
    %v1247 = vrot.slane %v1239, %v1246
    %v1249 = vunpack.c.l.s4 1934713408
    %v1250 = vunpack.c.0.s8 %v1249
    %v1251 = vlaneseq
    %v1252 = vshrl.u32 %v1251, 7
    %v1253 = vsub.s32 %v1250, %v1252
    %v1254 = vrot.slane %v1240, %v1253
    %v1255 = vcombine.low %v1230, %v1238
    %v1256 = vcombine.high %v1230, %v1238
    %v1258 = vunpack.c.l.s4 1934713408
    %v1259 = vunpack.c.0.s8 %v1258
    %v1260 = vlaneseq
    %v1261 = vshrl.u32 %v1260, 7
    %v1262 = vsub.s32 %v1259, %v1261
    %v1263 = vrot.slane %v1255, %v1262
    %v1265 = vunpack.c.l.s4 1934713408
    %v1266 = vunpack.c.0.s8 %v1265
    %v1267 = vlaneseq
    %v1268 = vshrl.u32 %v1267, 7
    %v1269 = vsub.s32 %v1266, %v1268
    %v1270 = vrot.slane %v1256, %v1269
    %v1271 = vcombine.low %v1247, %v1263
    %v1272 = vcombine.high %v1247, %v1263
    %v1273 = vcombine.low %v1254, %v1270
    %v1274 = vcombine.high %v1254, %v1270
    %v1275 = vcombine.low %v1043, %v1050
    %v1277 = vunpack.c.l.s4 1983009808
    %v1278 = vunpack.c.0.s8 %v1277
    %v1279 = vlaneseq
    %v1280 = vshrl.u32 %v1279, 7
    %v1281 = vsub.s32 %v1278, %v1280
    %v1282 = vrot.slane %v1275, %v1281
    %v1283 = vcombine.low %v1067, %v1068
    %v1285 = vunpack.c.l.s4 1983009808
    %v1286 = vunpack.c.0.s8 %v1285
    %v1287 = vlaneseq
    %v1288 = vshrl.u32 %v1287, 7
    %v1289 = vsub.s32 %v1286, %v1288
    %v1290 = vrot.slane %v1283, %v1289
    %v1291 = vcombine.low %v1059, %v1066
    %v1293 = vunpack.c.l.s4 1983009808
    %v1294 = vunpack.c.0.s8 %v1293
    %v1295 = vlaneseq
    %v1296 = vshrl.u32 %v1295, 7
    %v1297 = vsub.s32 %v1294, %v1296
    %v1298 = vrot.slane %v1291, %v1297
    %v1299 = vcombine.low %v1069, %v1070
    %v1301 = vunpack.c.l.s4 1983009808
    %v1302 = vunpack.c.0.s8 %v1301
    %v1303 = vlaneseq
    %v1304 = vshrl.u32 %v1303, 7
    %v1305 = vsub.s32 %v1302, %v1304
    %v1306 = vrot.slane %v1299, %v1305
    %v1307 = vcombine.low %v1282, %v1290
    %v1308 = vcombine.high %v1282, %v1290
    %v1310 = vunpack.c.l.s4 1934713408
    %v1311 = vunpack.c.0.s8 %v1310
    %v1312 = vlaneseq
    %v1313 = vshrl.u32 %v1312, 7
    %v1314 = vsub.s32 %v1311, %v1313
    %v1315 = vrot.slane %v1307, %v1314
    %v1317 = vunpack.c.l.s4 1934713408
    %v1318 = vunpack.c.0.s8 %v1317
    %v1319 = vlaneseq
    %v1320 = vshrl.u32 %v1319, 7
    %v1321 = vsub.s32 %v1318, %v1320
    %v1322 = vrot.slane %v1308, %v1321
    %v1323 = vcombine.low %v1298, %v1306
    %v1324 = vcombine.high %v1298, %v1306
    %v1326 = vunpack.c.l.s4 1934713408
    %v1327 = vunpack.c.0.s8 %v1326
    %v1328 = vlaneseq
    %v1329 = vshrl.u32 %v1328, 7
    %v1330 = vsub.s32 %v1327, %v1329
    %v1331 = vrot.slane %v1323, %v1330
    %v1333 = vunpack.c.l.s4 1934713408
    %v1334 = vunpack.c.0.s8 %v1333
    %v1335 = vlaneseq
    %v1336 = vshrl.u32 %v1335, 7
    %v1337 = vsub.s32 %v1334, %v1336
    %v1338 = vrot.slane %v1324, %v1337
    %v1339 = vcombine.low %v1315, %v1331
    %v1340 = vcombine.high %v1315, %v1331
    %v1341 = vcombine.low %v1322, %v1338
    %v1342 = vcombine.high %v1322, %v1338
    %v1343 = vcombine.low %v1111, %v1118
    %v1345 = vunpack.c.l.s4 1983009808
    %v1346 = vunpack.c.0.s8 %v1345
    %v1347 = vlaneseq
    %v1348 = vshrl.u32 %v1347, 7
    %v1349 = vsub.s32 %v1346, %v1348
    %v1350 = vrot.slane %v1343, %v1349
    %v1351 = vcombine.low %v1135, %v1136
    %v1353 = vunpack.c.l.s4 1983009808
    %v1354 = vunpack.c.0.s8 %v1353
    %v1355 = vlaneseq
    %v1356 = vshrl.u32 %v1355, 7
    %v1357 = vsub.s32 %v1354, %v1356
    %v1358 = vrot.slane %v1351, %v1357
    %v1359 = vcombine.low %v1127, %v1134
    %v1361 = vunpack.c.l.s4 1983009808
    %v1362 = vunpack.c.0.s8 %v1361
    %v1363 = vlaneseq
    %v1364 = vshrl.u32 %v1363, 7
    %v1365 = vsub.s32 %v1362, %v1364
    %v1366 = vrot.slane %v1359, %v1365
    %v1367 = vcombine.low %v1137, %v1138
    %v1369 = vunpack.c.l.s4 1983009808
    %v1370 = vunpack.c.0.s8 %v1369
    %v1371 = vlaneseq
    %v1372 = vshrl.u32 %v1371, 7
    %v1373 = vsub.s32 %v1370, %v1372
    %v1374 = vrot.slane %v1367, %v1373
    %v1375 = vcombine.low %v1350, %v1358
    %v1376 = vcombine.high %v1350, %v1358
    %v1378 = vunpack.c.l.s4 1934713408
    %v1379 = vunpack.c.0.s8 %v1378
    %v1380 = vlaneseq
    %v1381 = vshrl.u32 %v1380, 7
    %v1382 = vsub.s32 %v1379, %v1381
    %v1383 = vrot.slane %v1375, %v1382
    %v1385 = vunpack.c.l.s4 1934713408
    %v1386 = vunpack.c.0.s8 %v1385
    %v1387 = vlaneseq
    %v1388 = vshrl.u32 %v1387, 7
    %v1389 = vsub.s32 %v1386, %v1388
    %v1390 = vrot.slane %v1376, %v1389
    %v1391 = vcombine.low %v1366, %v1374
    %v1392 = vcombine.high %v1366, %v1374
    %v1394 = vunpack.c.l.s4 1934713408
    %v1395 = vunpack.c.0.s8 %v1394
    %v1396 = vlaneseq
    %v1397 = vshrl.u32 %v1396, 7
    %v1398 = vsub.s32 %v1395, %v1397
    %v1399 = vrot.slane %v1391, %v1398
    %v1401 = vunpack.c.l.s4 1934713408
    %v1402 = vunpack.c.0.s8 %v1401
    %v1403 = vlaneseq
    %v1404 = vshrl.u32 %v1403, 7
    %v1405 = vsub.s32 %v1402, %v1404
    %v1406 = vrot.slane %v1392, %v1405
    %v1407 = vcombine.low %v1383, %v1399
    %v1408 = vcombine.high %v1383, %v1399
    %v1409 = vcombine.low %v1390, %v1406
    %v1410 = vcombine.high %v1390, %v1406
    %1415 = vrot.lane.b32.xlu0 %v517, 120
    %v1416 = vpop.permute.xlu0 %1415
    %1417 = vrot.lane.b32.xlu0 %v522, 120
    %v1418 = vpop.permute.xlu0 %1417
    %1419 = vrot.lane.b32.xlu0 %v527, 120
    %v1420 = vpop.permute.xlu0 %1419
    %1421 = vrot.lane.b32.xlu0 %v532, 120
    %v1422 = vpop.permute.xlu0 %1421
    %1427 = vrot.lane.b32.xlu0 %v517, 112
    %v1428 = vpop.permute.xlu0 %1427
    %1429 = vrot.lane.b32.xlu0 %v522, 112
    %v1430 = vpop.permute.xlu0 %1429
    %1431 = vrot.lane.b32.xlu0 %v527, 112
    %v1432 = vpop.permute.xlu0 %1431
    %1433 = vrot.lane.b32.xlu0 %v532, 112
    %v1434 = vpop.permute.xlu0 %1433
    %1439 = vrot.lane.b32.xlu0 %v517, 104
    %v1440 = vpop.permute.xlu0 %1439
    %1441 = vrot.lane.b32.xlu0 %v522, 104
    %v1442 = vpop.permute.xlu0 %1441
    %1443 = vrot.lane.b32.xlu0 %v527, 104
    %v1444 = vpop.permute.xlu0 %1443
    %1445 = vrot.lane.b32.xlu0 %v532, 104
    %v1446 = vpop.permute.xlu0 %1445
    %v1451 = vcombine.low %v517, %v1428
    %v1452 = vcombine.high %v517, %v1428
    %v1454 = vunpack.c.l.s4 1983009808
    %v1455 = vunpack.c.0.s8 %v1454
    %v1456 = vlaneseq
    %v1457 = vshrl.u32 %v1456, 7
    %v1458 = vsub.s32 %v1455, %v1457
    %v1459 = vrot.slane %v1451, %v1458
    %v1461 = vunpack.c.l.s4 1983009808
    %v1462 = vunpack.c.0.s8 %v1461
    %v1463 = vlaneseq
    %v1464 = vshrl.u32 %v1463, 7
    %v1465 = vsub.s32 %v1462, %v1464
    %v1466 = vrot.slane %v1452, %v1465
    %v1467 = vcombine.low %v1416, %v1440
    %v1468 = vcombine.high %v1416, %v1440
    %v1470 = vunpack.c.l.s4 1983009808
    %v1471 = vunpack.c.0.s8 %v1470
    %v1472 = vlaneseq
    %v1473 = vshrl.u32 %v1472, 7
    %v1474 = vsub.s32 %v1471, %v1473
    %v1475 = vrot.slane %v1467, %v1474
    %v1477 = vunpack.c.l.s4 1983009808
    %v1478 = vunpack.c.0.s8 %v1477
    %v1479 = vlaneseq
    %v1480 = vshrl.u32 %v1479, 7
    %v1481 = vsub.s32 %v1478, %v1480
    %v1482 = vrot.slane %v1468, %v1481
    %v1483 = vcombine.low %v1459, %v1475
    %v1484 = vcombine.high %v1459, %v1475
    %v1486 = vunpack.c.l.s4 1934713408
    %v1487 = vunpack.c.0.s8 %v1486
    %v1488 = vlaneseq
    %v1489 = vshrl.u32 %v1488, 7
    %v1490 = vsub.s32 %v1487, %v1489
    %v1491 = vrot.slane %v1483, %v1490
    %v1493 = vunpack.c.l.s4 1934713408
    %v1494 = vunpack.c.0.s8 %v1493
    %v1495 = vlaneseq
    %v1496 = vshrl.u32 %v1495, 7
    %v1497 = vsub.s32 %v1494, %v1496
    %v1498 = vrot.slane %v1484, %v1497
    %v1499 = vcombine.low %v1466, %v1482
    %v1500 = vcombine.high %v1466, %v1482
    %v1502 = vunpack.c.l.s4 1934713408
    %v1503 = vunpack.c.0.s8 %v1502
    %v1504 = vlaneseq
    %v1505 = vshrl.u32 %v1504, 7
    %v1506 = vsub.s32 %v1503, %v1505
    %v1507 = vrot.slane %v1499, %v1506
    %v1509 = vunpack.c.l.s4 1934713408
    %v1510 = vunpack.c.0.s8 %v1509
    %v1511 = vlaneseq
    %v1512 = vshrl.u32 %v1511, 7
    %v1513 = vsub.s32 %v1510, %v1512
    %v1514 = vrot.slane %v1500, %v1513
    %v1515 = vcombine.high %v1491, 0.0
    %v1516 = vcombine.high %v1498, 0.0
    %v1517 = vcombine.high %v1507, 0.0
    %v1518 = vcombine.high %v1514, 0.0
    %v1519 = vcombine.low %v522, %v1430
    %v1520 = vcombine.high %v522, %v1430
    %v1522 = vunpack.c.l.s4 1983009808
    %v1523 = vunpack.c.0.s8 %v1522
    %v1524 = vlaneseq
    %v1525 = vshrl.u32 %v1524, 7
    %v1526 = vsub.s32 %v1523, %v1525
    %v1527 = vrot.slane %v1519, %v1526
    %v1529 = vunpack.c.l.s4 1983009808
    %v1530 = vunpack.c.0.s8 %v1529
    %v1531 = vlaneseq
    %v1532 = vshrl.u32 %v1531, 7
    %v1533 = vsub.s32 %v1530, %v1532
    %v1534 = vrot.slane %v1520, %v1533
    %v1535 = vcombine.low %v1418, %v1442
    %v1536 = vcombine.high %v1418, %v1442
    %v1538 = vunpack.c.l.s4 1983009808
    %v1539 = vunpack.c.0.s8 %v1538
    %v1540 = vlaneseq
    %v1541 = vshrl.u32 %v1540, 7
    %v1542 = vsub.s32 %v1539, %v1541
    %v1543 = vrot.slane %v1535, %v1542
    %v1545 = vunpack.c.l.s4 1983009808
    %v1546 = vunpack.c.0.s8 %v1545
    %v1547 = vlaneseq
    %v1548 = vshrl.u32 %v1547, 7
    %v1549 = vsub.s32 %v1546, %v1548
    %v1550 = vrot.slane %v1536, %v1549
    %v1551 = vcombine.low %v1527, %v1543
    %v1552 = vcombine.high %v1527, %v1543
    %v1554 = vunpack.c.l.s4 1934713408
    %v1555 = vunpack.c.0.s8 %v1554
    %v1556 = vlaneseq
    %v1557 = vshrl.u32 %v1556, 7
    %v1558 = vsub.s32 %v1555, %v1557
    %v1559 = vrot.slane %v1551, %v1558
    %v1561 = vunpack.c.l.s4 1934713408
    %v1562 = vunpack.c.0.s8 %v1561
    %v1563 = vlaneseq
    %v1564 = vshrl.u32 %v1563, 7
    %v1565 = vsub.s32 %v1562, %v1564
    %v1566 = vrot.slane %v1552, %v1565
    %v1567 = vcombine.low %v1534, %v1550
    %v1568 = vcombine.high %v1534, %v1550
    %v1570 = vunpack.c.l.s4 1934713408
    %v1571 = vunpack.c.0.s8 %v1570
    %v1572 = vlaneseq
    %v1573 = vshrl.u32 %v1572, 7
    %v1574 = vsub.s32 %v1571, %v1573
    %v1575 = vrot.slane %v1567, %v1574
    %v1577 = vunpack.c.l.s4 1934713408
    %v1578 = vunpack.c.0.s8 %v1577
    %v1579 = vlaneseq
    %v1580 = vshrl.u32 %v1579, 7
    %v1581 = vsub.s32 %v1578, %v1580
    %v1582 = vrot.slane %v1568, %v1581
    %v1583 = vcombine.high %v1559, 0.0
    %v1584 = vcombine.high %v1566, 0.0
    %v1585 = vcombine.high %v1575, 0.0
    %v1586 = vcombine.high %v1582, 0.0
    %v1587 = vcombine.low %v527, %v1432
    %v1588 = vcombine.high %v527, %v1432
    %v1590 = vunpack.c.l.s4 1983009808
    %v1591 = vunpack.c.0.s8 %v1590
    %v1592 = vlaneseq
    %v1593 = vshrl.u32 %v1592, 7
    %v1594 = vsub.s32 %v1591, %v1593
    %v1595 = vrot.slane %v1587, %v1594
    %v1597 = vunpack.c.l.s4 1983009808
    %v1598 = vunpack.c.0.s8 %v1597
    %v1599 = vlaneseq
    %v1600 = vshrl.u32 %v1599, 7
    %v1601 = vsub.s32 %v1598, %v1600
    %v1602 = vrot.slane %v1588, %v1601
    %v1603 = vcombine.low %v1420, %v1444
    %v1604 = vcombine.high %v1420, %v1444
    %v1606 = vunpack.c.l.s4 1983009808
    %v1607 = vunpack.c.0.s8 %v1606
    %v1608 = vlaneseq
    %v1609 = vshrl.u32 %v1608, 7
    %v1610 = vsub.s32 %v1607, %v1609
    %v1611 = vrot.slane %v1603, %v1610
    %v1613 = vunpack.c.l.s4 1983009808
    %v1614 = vunpack.c.0.s8 %v1613
    %v1615 = vlaneseq
    %v1616 = vshrl.u32 %v1615, 7
    %v1617 = vsub.s32 %v1614, %v1616
    %v1618 = vrot.slane %v1604, %v1617
    %v1619 = vcombine.low %v1595, %v1611
    %v1620 = vcombine.high %v1595, %v1611
    %v1622 = vunpack.c.l.s4 1934713408
    %v1623 = vunpack.c.0.s8 %v1622
    %v1624 = vlaneseq
    %v1625 = vshrl.u32 %v1624, 7
    %v1626 = vsub.s32 %v1623, %v1625
    %v1627 = vrot.slane %v1619, %v1626
    %v1629 = vunpack.c.l.s4 1934713408
    %v1630 = vunpack.c.0.s8 %v1629
    %v1631 = vlaneseq
    %v1632 = vshrl.u32 %v1631, 7
    %v1633 = vsub.s32 %v1630, %v1632
    %v1634 = vrot.slane %v1620, %v1633
    %v1635 = vcombine.low %v1602, %v1618
    %v1636 = vcombine.high %v1602, %v1618
    %v1638 = vunpack.c.l.s4 1934713408
    %v1639 = vunpack.c.0.s8 %v1638
    %v1640 = vlaneseq
    %v1641 = vshrl.u32 %v1640, 7
    %v1642 = vsub.s32 %v1639, %v1641
    %v1643 = vrot.slane %v1635, %v1642
    %v1645 = vunpack.c.l.s4 1934713408
    %v1646 = vunpack.c.0.s8 %v1645
    %v1647 = vlaneseq
    %v1648 = vshrl.u32 %v1647, 7
    %v1649 = vsub.s32 %v1646, %v1648
    %v1650 = vrot.slane %v1636, %v1649
    %v1651 = vcombine.high %v1627, 0.0
    %v1652 = vcombine.high %v1634, 0.0
    %v1653 = vcombine.high %v1643, 0.0
    %v1654 = vcombine.high %v1650, 0.0
    %v1655 = vcombine.low %v532, %v1434
    %v1656 = vcombine.high %v532, %v1434
    %v1658 = vunpack.c.l.s4 1983009808
    %v1659 = vunpack.c.0.s8 %v1658
    %v1660 = vlaneseq
    %v1661 = vshrl.u32 %v1660, 7
    %v1662 = vsub.s32 %v1659, %v1661
    %v1663 = vrot.slane %v1655, %v1662
    %v1665 = vunpack.c.l.s4 1983009808
    %v1666 = vunpack.c.0.s8 %v1665
    %v1667 = vlaneseq
    %v1668 = vshrl.u32 %v1667, 7
    %v1669 = vsub.s32 %v1666, %v1668
    %v1670 = vrot.slane %v1656, %v1669
    %v1671 = vcombine.low %v1422, %v1446
    %v1672 = vcombine.high %v1422, %v1446
    %v1674 = vunpack.c.l.s4 1983009808
    %v1675 = vunpack.c.0.s8 %v1674
    %v1676 = vlaneseq
    %v1677 = vshrl.u32 %v1676, 7
    %v1678 = vsub.s32 %v1675, %v1677
    %v1679 = vrot.slane %v1671, %v1678
    %v1681 = vunpack.c.l.s4 1983009808
    %v1682 = vunpack.c.0.s8 %v1681
    %v1683 = vlaneseq
    %v1684 = vshrl.u32 %v1683, 7
    %v1685 = vsub.s32 %v1682, %v1684
    %v1686 = vrot.slane %v1672, %v1685
    %v1687 = vcombine.low %v1663, %v1679
    %v1688 = vcombine.high %v1663, %v1679
    %v1690 = vunpack.c.l.s4 1934713408
    %v1691 = vunpack.c.0.s8 %v1690
    %v1692 = vlaneseq
    %v1693 = vshrl.u32 %v1692, 7
    %v1694 = vsub.s32 %v1691, %v1693
    %v1695 = vrot.slane %v1687, %v1694
    %v1697 = vunpack.c.l.s4 1934713408
    %v1698 = vunpack.c.0.s8 %v1697
    %v1699 = vlaneseq
    %v1700 = vshrl.u32 %v1699, 7
    %v1701 = vsub.s32 %v1698, %v1700
    %v1702 = vrot.slane %v1688, %v1701
    %v1703 = vcombine.low %v1670, %v1686
    %v1704 = vcombine.high %v1670, %v1686
    %v1706 = vunpack.c.l.s4 1934713408
    %v1707 = vunpack.c.0.s8 %v1706
    %v1708 = vlaneseq
    %v1709 = vshrl.u32 %v1708, 7
    %v1710 = vsub.s32 %v1707, %v1709
    %v1711 = vrot.slane %v1703, %v1710
    %v1713 = vunpack.c.l.s4 1934713408
    %v1714 = vunpack.c.0.s8 %v1713
    %v1715 = vlaneseq
    %v1716 = vshrl.u32 %v1715, 7
    %v1717 = vsub.s32 %v1714, %v1716
    %v1718 = vrot.slane %v1704, %v1717
    %v1719 = vcombine.high %v1695, 0.0
    %v1720 = vcombine.high %v1702, 0.0
    %v1721 = vcombine.high %v1711, 0.0
    %v1722 = vcombine.high %v1718, 0.0
    %v1723 = vcombine.low %v1491, %v1498
    %v1725 = vunpack.c.l.s4 1983009808
    %v1726 = vunpack.c.0.s8 %v1725
    %v1727 = vlaneseq
    %v1728 = vshrl.u32 %v1727, 7
    %v1729 = vsub.s32 %v1726, %v1728
    %v1730 = vrot.slane %v1723, %v1729
    %v1731 = vcombine.low %v1515, %v1516
    %v1733 = vunpack.c.l.s4 1983009808
    %v1734 = vunpack.c.0.s8 %v1733
    %v1735 = vlaneseq
    %v1736 = vshrl.u32 %v1735, 7
    %v1737 = vsub.s32 %v1734, %v1736
    %v1738 = vrot.slane %v1731, %v1737
    %v1739 = vcombine.low %v1507, %v1514
    %v1741 = vunpack.c.l.s4 1983009808
    %v1742 = vunpack.c.0.s8 %v1741
    %v1743 = vlaneseq
    %v1744 = vshrl.u32 %v1743, 7
    %v1745 = vsub.s32 %v1742, %v1744
    %v1746 = vrot.slane %v1739, %v1745
    %v1747 = vcombine.low %v1517, %v1518
    %v1749 = vunpack.c.l.s4 1983009808
    %v1750 = vunpack.c.0.s8 %v1749
    %v1751 = vlaneseq
    %v1752 = vshrl.u32 %v1751, 7
    %v1753 = vsub.s32 %v1750, %v1752
    %v1754 = vrot.slane %v1747, %v1753
    %v1755 = vcombine.low %v1730, %v1738
    %v1756 = vcombine.high %v1730, %v1738
    %v1758 = vunpack.c.l.s4 1934713408
    %v1759 = vunpack.c.0.s8 %v1758
    %v1760 = vlaneseq
    %v1761 = vshrl.u32 %v1760, 7
    %v1762 = vsub.s32 %v1759, %v1761
    %v1763 = vrot.slane %v1755, %v1762
    %v1765 = vunpack.c.l.s4 1934713408
    %v1766 = vunpack.c.0.s8 %v1765
    %v1767 = vlaneseq
    %v1768 = vshrl.u32 %v1767, 7
    %v1769 = vsub.s32 %v1766, %v1768
    %v1770 = vrot.slane %v1756, %v1769
    %v1771 = vcombine.low %v1746, %v1754
    %v1772 = vcombine.high %v1746, %v1754
    %v1774 = vunpack.c.l.s4 1934713408
    %v1775 = vunpack.c.0.s8 %v1774
    %v1776 = vlaneseq
    %v1777 = vshrl.u32 %v1776, 7
    %v1778 = vsub.s32 %v1775, %v1777
    %v1779 = vrot.slane %v1771, %v1778
    %v1781 = vunpack.c.l.s4 1934713408
    %v1782 = vunpack.c.0.s8 %v1781
    %v1783 = vlaneseq
    %v1784 = vshrl.u32 %v1783, 7
    %v1785 = vsub.s32 %v1782, %v1784
    %v1786 = vrot.slane %v1772, %v1785
    %v1787 = vcombine.low %v1763, %v1779
    %v1788 = vcombine.high %v1763, %v1779
    %v1789 = vcombine.low %v1770, %v1786
    %v1790 = vcombine.high %v1770, %v1786
    %v1791 = vcombine.low %v1559, %v1566
    %v1793 = vunpack.c.l.s4 1983009808
    %v1794 = vunpack.c.0.s8 %v1793
    %v1795 = vlaneseq
    %v1796 = vshrl.u32 %v1795, 7
    %v1797 = vsub.s32 %v1794, %v1796
    %v1798 = vrot.slane %v1791, %v1797
    %v1799 = vcombine.low %v1583, %v1584
    %v1801 = vunpack.c.l.s4 1983009808
    %v1802 = vunpack.c.0.s8 %v1801
    %v1803 = vlaneseq
    %v1804 = vshrl.u32 %v1803, 7
    %v1805 = vsub.s32 %v1802, %v1804
    %v1806 = vrot.slane %v1799, %v1805
    %v1807 = vcombine.low %v1575, %v1582
    %v1809 = vunpack.c.l.s4 1983009808
    %v1810 = vunpack.c.0.s8 %v1809
    %v1811 = vlaneseq
    %v1812 = vshrl.u32 %v1811, 7
    %v1813 = vsub.s32 %v1810, %v1812
    %v1814 = vrot.slane %v1807, %v1813
    %v1815 = vcombine.low %v1585, %v1586
    %v1817 = vunpack.c.l.s4 1983009808
    %v1818 = vunpack.c.0.s8 %v1817
    %v1819 = vlaneseq
    %v1820 = vshrl.u32 %v1819, 7
    %v1821 = vsub.s32 %v1818, %v1820
    %v1822 = vrot.slane %v1815, %v1821
    %v1823 = vcombine.low %v1798, %v1806
    %v1824 = vcombine.high %v1798, %v1806
    %v1826 = vunpack.c.l.s4 1934713408
    %v1827 = vunpack.c.0.s8 %v1826
    %v1828 = vlaneseq
    %v1829 = vshrl.u32 %v1828, 7
    %v1830 = vsub.s32 %v1827, %v1829
    %v1831 = vrot.slane %v1823, %v1830
    %v1833 = vunpack.c.l.s4 1934713408
    %v1834 = vunpack.c.0.s8 %v1833
    %v1835 = vlaneseq
    %v1836 = vshrl.u32 %v1835, 7
    %v1837 = vsub.s32 %v1834, %v1836
    %v1838 = vrot.slane %v1824, %v1837
    %v1839 = vcombine.low %v1814, %v1822
    %v1840 = vcombine.high %v1814, %v1822
    %v1842 = vunpack.c.l.s4 1934713408
    %v1843 = vunpack.c.0.s8 %v1842
    %v1844 = vlaneseq
    %v1845 = vshrl.u32 %v1844, 7
    %v1846 = vsub.s32 %v1843, %v1845
    %v1847 = vrot.slane %v1839, %v1846
    %v1849 = vunpack.c.l.s4 1934713408
    %v1850 = vunpack.c.0.s8 %v1849
    %v1851 = vlaneseq
    %v1852 = vshrl.u32 %v1851, 7
    %v1853 = vsub.s32 %v1850, %v1852
    %v1854 = vrot.slane %v1840, %v1853
    %v1855 = vcombine.low %v1831, %v1847
    %v1856 = vcombine.high %v1831, %v1847
    %v1857 = vcombine.low %v1838, %v1854
    %v1858 = vcombine.high %v1838, %v1854
    %v1859 = vcombine.low %v1627, %v1634
    %v1861 = vunpack.c.l.s4 1983009808
    %v1862 = vunpack.c.0.s8 %v1861
    %v1863 = vlaneseq
    %v1864 = vshrl.u32 %v1863, 7
    %v1865 = vsub.s32 %v1862, %v1864
    %v1866 = vrot.slane %v1859, %v1865
    %v1867 = vcombine.low %v1651, %v1652
    %v1869 = vunpack.c.l.s4 1983009808
    %v1870 = vunpack.c.0.s8 %v1869
    %v1871 = vlaneseq
    %v1872 = vshrl.u32 %v1871, 7
    %v1873 = vsub.s32 %v1870, %v1872
    %v1874 = vrot.slane %v1867, %v1873
    %v1875 = vcombine.low %v1643, %v1650
    %v1877 = vunpack.c.l.s4 1983009808
    %v1878 = vunpack.c.0.s8 %v1877
    %v1879 = vlaneseq
    %v1880 = vshrl.u32 %v1879, 7
    %v1881 = vsub.s32 %v1878, %v1880
    %v1882 = vrot.slane %v1875, %v1881
    %v1883 = vcombine.low %v1653, %v1654
    %v1885 = vunpack.c.l.s4 1983009808
    %v1886 = vunpack.c.0.s8 %v1885
    %v1887 = vlaneseq
    %v1888 = vshrl.u32 %v1887, 7
    %v1889 = vsub.s32 %v1886, %v1888
    %v1890 = vrot.slane %v1883, %v1889
    %v1891 = vcombine.low %v1866, %v1874
    %v1892 = vcombine.high %v1866, %v1874
    %v1894 = vunpack.c.l.s4 1934713408
    %v1895 = vunpack.c.0.s8 %v1894
    %v1896 = vlaneseq
    %v1897 = vshrl.u32 %v1896, 7
    %v1898 = vsub.s32 %v1895, %v1897
    %v1899 = vrot.slane %v1891, %v1898
    %v1901 = vunpack.c.l.s4 1934713408
    %v1902 = vunpack.c.0.s8 %v1901
    %v1903 = vlaneseq
    %v1904 = vshrl.u32 %v1903, 7
    %v1905 = vsub.s32 %v1902, %v1904
    %v1906 = vrot.slane %v1892, %v1905
    %v1907 = vcombine.low %v1882, %v1890
    %v1908 = vcombine.high %v1882, %v1890
    %v1910 = vunpack.c.l.s4 1934713408
    %v1911 = vunpack.c.0.s8 %v1910
    %v1912 = vlaneseq
    %v1913 = vshrl.u32 %v1912, 7
    %v1914 = vsub.s32 %v1911, %v1913
    %v1915 = vrot.slane %v1907, %v1914
    %v1917 = vunpack.c.l.s4 1934713408
    %v1918 = vunpack.c.0.s8 %v1917
    %v1919 = vlaneseq
    %v1920 = vshrl.u32 %v1919, 7
    %v1921 = vsub.s32 %v1918, %v1920
    %v1922 = vrot.slane %v1908, %v1921
    %v1923 = vcombine.low %v1899, %v1915
    %v1924 = vcombine.high %v1899, %v1915
    %v1925 = vcombine.low %v1906, %v1922
    %v1926 = vcombine.high %v1906, %v1922
    %v1927 = vcombine.low %v1695, %v1702
    %v1929 = vunpack.c.l.s4 1983009808
    %v1930 = vunpack.c.0.s8 %v1929
    %v1931 = vlaneseq
    %v1932 = vshrl.u32 %v1931, 7
    %v1933 = vsub.s32 %v1930, %v1932
    %v1934 = vrot.slane %v1927, %v1933
    %v1935 = vcombine.low %v1719, %v1720
    %v1937 = vunpack.c.l.s4 1983009808
    %v1938 = vunpack.c.0.s8 %v1937
    %v1939 = vlaneseq
    %v1940 = vshrl.u32 %v1939, 7
    %v1941 = vsub.s32 %v1938, %v1940
    %v1942 = vrot.slane %v1935, %v1941
    %v1943 = vcombine.low %v1711, %v1718
    %v1945 = vunpack.c.l.s4 1983009808
    %v1946 = vunpack.c.0.s8 %v1945
    %v1947 = vlaneseq
    %v1948 = vshrl.u32 %v1947, 7
    %v1949 = vsub.s32 %v1946, %v1948
    %v1950 = vrot.slane %v1943, %v1949
    %v1951 = vcombine.low %v1721, %v1722
    %v1953 = vunpack.c.l.s4 1983009808
    %v1954 = vunpack.c.0.s8 %v1953
    %v1955 = vlaneseq
    %v1956 = vshrl.u32 %v1955, 7
    %v1957 = vsub.s32 %v1954, %v1956
    %v1958 = vrot.slane %v1951, %v1957
    %v1959 = vcombine.low %v1934, %v1942
    %v1960 = vcombine.high %v1934, %v1942
    %v1962 = vunpack.c.l.s4 1934713408
    %v1963 = vunpack.c.0.s8 %v1962
    %v1964 = vlaneseq
    %v1965 = vshrl.u32 %v1964, 7
    %v1966 = vsub.s32 %v1963, %v1965
    %v1967 = vrot.slane %v1959, %v1966
    %v1969 = vunpack.c.l.s4 1934713408
    %v1970 = vunpack.c.0.s8 %v1969
    %v1971 = vlaneseq
    %v1972 = vshrl.u32 %v1971, 7
    %v1973 = vsub.s32 %v1970, %v1972
    %v1974 = vrot.slane %v1960, %v1973
    %v1975 = vcombine.low %v1950, %v1958
    %v1976 = vcombine.high %v1950, %v1958
    %v1978 = vunpack.c.l.s4 1934713408
    %v1979 = vunpack.c.0.s8 %v1978
    %v1980 = vlaneseq
    %v1981 = vshrl.u32 %v1980, 7
    %v1982 = vsub.s32 %v1979, %v1981
    %v1983 = vrot.slane %v1975, %v1982
    %v1985 = vunpack.c.l.s4 1934713408
    %v1986 = vunpack.c.0.s8 %v1985
    %v1987 = vlaneseq
    %v1988 = vshrl.u32 %v1987, 7
    %v1989 = vsub.s32 %v1986, %v1988
    %v1990 = vrot.slane %v1976, %v1989
    %v1991 = vcombine.low %v1967, %v1983
    %v1992 = vcombine.high %v1967, %v1983
    %v1993 = vcombine.low %v1974, %v1990
    %v1994 = vcombine.high %v1974, %v1990
    %vm1995 = vcmask 64512
    %v1997 = vsel %vm1995, %v755, 0
    %v2000 = vsel %vm1995, %v1203, 0
    %v2003 = vsel %vm1995, %v1271, 0
    %2005 = vmatprep.subr.mxu0 0.0
    %2006 = vmatpush1.xpose.msra.mxu0 %v2000
    %2007 = vmatprep.subr.mxu0 0.0
    %2008 = vmatpush1.xpose.msra.mxu0 %v2003
    %2009 = vmatprep.subr.mxu0 0.0
    %2010 = vmatpush1.xpose.msra.mxu0 0.0
    %2011 = vmatprep.subr.mxu0 0.0
    %2012 = vmatpush1.xpose.msra.mxu0 0.0
    %2013 = vmatprep.subr.mxu0 0.0
    %2014 = vmatpush1.xpose.msra.mxu0 0.0
    %2015 = vmatprep.subr.mxu0 0.0
    %2016 = vmatpush1.xpose.msra.mxu0 0.0
    %2017 = vmatprep.subr.mxu0 0.0
    %2018 = vmatpush1.xpose.msra.mxu0 0.0
    %2019 = vmatprep.subr.mxu0 0.0
    %2020 = vmatpush1.xpose.msra.mxu0 0.0
    %2021 = vmatprep.subr.mxu0 0.0
    %2022 = vmatpush1.xpose.msra.mxu0 0.0
    %2023 = vmatprep.subr.mxu0 0.0
    %2024 = vmatpush1.xpose.msra.mxu0 0.0
    %2025 = vmatprep.subr.mxu0 0.0
    %2026 = vmatpush1.xpose.msra.mxu0 0.0
    %2027 = vmatprep.subr.mxu0 0.0
    %2028 = vmatpush1.xpose.msra.mxu0 0.0
    %2029 = vmatprep.subr.mxu0 0.0
    %2030 = vmatpush1.xpose.msra.mxu0 0.0
    %2031 = vmatprep.subr.mxu0 0.0
    %2032 = vmatpush1.xpose.msra.mxu0 0.0
    %2033 = vmatprep.subr.mxu0 0.0
    %2034 = vmatpush1.xpose.msra.mxu0 0.0
    %2035 = vmatprep.subr.mxu0 0.0
    %2036 = vmatpush1.xpose.msra.mxu0 0.0
    %2037 = vmatprep.subr.mxu0 0.0
    %2038 = vmatpush1.xpose.msra.mxu0 0.0
    %2039 = vmatprep.subr.mxu0 0.0
    %2040 = vmatpush1.xpose.msra.mxu0 0.0
    %2041 = vmatprep.subr.mxu0 0.0
    %2042 = vmatpush1.xpose.msra.mxu0 0.0
    %2043 = vmatprep.subr.mxu0 0.0
    %2044 = vmatpush1.xpose.msra.mxu0 0.0
    %2045 = vmatprep.subr.mxu0 0.0
    %2046 = vmatpush1.xpose.msra.mxu0 0.0
    %2047 = vmatprep.subr.mxu0 0.0
    %2048 = vmatpush1.xpose.msra.mxu0 0.0
    %2049 = vmatprep.subr.mxu0 0.0
    %2050 = vmatpush1.xpose.msra.mxu0 0.0
    %2051 = vmatprep.subr.mxu0 0.0
    %2052 = vmatpush1.xpose.msra.mxu0 0.0
    %2053 = vmatprep.subr.mxu0 0.0
    %2054 = vmatpush1.xpose.msra.mxu0 0.0
    %2055 = vmatprep.subr.mxu0 0.0
    %2056 = vmatpush1.xpose.msra.mxu0 0.0
    %2057 = vmatprep.subr.mxu0 0.0
    %2058 = vmatpush1.xpose.msra.mxu0 0.0
    %2059 = vmatprep.subr.mxu0 0.0
    %2060 = vmatpush1.xpose.msra.mxu0 0.0
    %2061 = vmatprep.subr.mxu0 0.0
    %2062 = vmatpush1.xpose.msra.mxu0 0.0
    %2063 = vmatprep.subr.mxu0 0.0
    %2064 = vmatpush1.xpose.msra.mxu0 0.0
    %2065 = vmatprep.subr.mxu0 0.0
    %2066 = vmatpush1.xpose.msra.mxu0 0.0
    %2067 = vmatprep.subr.mxu0 0.0
    %2068 = vmatpush1.xpose.msra.mxu0 0.0
    %2069 = vmatprep.mubr.f32.mxu0 0.0
    %2070 = vmatmul.mubr.f32.gmra.mrb[0].mxu0 %v1997
    %v2071 = vpop.f32.mrb[0].mxu0
    %v2072 = vadd.f32 0.0, %v2071
    %v2073 = vpop.f32.mrb[0].mxu0
    %2074 = vdwg.mxu0
    %v2076 = vsel %vm1995, %v756, 0
    %v2079 = vsel %vm1995, %v1204, 0
    %v2082 = vsel %vm1995, %v1272, 0
    %2084 = vmatprep.subr.mxu0 0.0
    %2085 = vmatpush1.xpose.msra.mxu0 %v2079
    %2086 = vmatprep.subr.mxu0 0.0
    %2087 = vmatpush1.xpose.msra.mxu0 %v2082
    %2088 = vmatprep.subr.mxu0 0.0
    %2089 = vmatpush1.xpose.msra.mxu0 0.0
    %2090 = vmatprep.subr.mxu0 0.0
    %2091 = vmatpush1.xpose.msra.mxu0 0.0
    %2092 = vmatprep.subr.mxu0 0.0
    %2093 = vmatpush1.xpose.msra.mxu0 0.0
    %2094 = vmatprep.subr.mxu0 0.0
    %2095 = vmatpush1.xpose.msra.mxu0 0.0
    %2096 = vmatprep.subr.mxu0 0.0
    %2097 = vmatpush1.xpose.msra.mxu0 0.0
    %2098 = vmatprep.subr.mxu0 0.0
    %2099 = vmatpush1.xpose.msra.mxu0 0.0
    %2100 = vmatprep.subr.mxu0 0.0
    %2101 = vmatpush1.xpose.msra.mxu0 0.0
    %2102 = vmatprep.subr.mxu0 0.0
    %2103 = vmatpush1.xpose.msra.mxu0 0.0
    %2104 = vmatprep.subr.mxu0 0.0
    %2105 = vmatpush1.xpose.msra.mxu0 0.0
    %2106 = vmatprep.subr.mxu0 0.0
    %2107 = vmatpush1.xpose.msra.mxu0 0.0
    %2108 = vmatprep.subr.mxu0 0.0
    %2109 = vmatpush1.xpose.msra.mxu0 0.0
    %2110 = vmatprep.subr.mxu0 0.0
    %2111 = vmatpush1.xpose.msra.mxu0 0.0
    %2112 = vmatprep.subr.mxu0 0.0
    %2113 = vmatpush1.xpose.msra.mxu0 0.0
    %2114 = vmatprep.subr.mxu0 0.0
    %2115 = vmatpush1.xpose.msra.mxu0 0.0
    %2116 = vmatprep.subr.mxu0 0.0
    %2117 = vmatpush1.xpose.msra.mxu0 0.0
    %2118 = vmatprep.subr.mxu0 0.0
    %2119 = vmatpush1.xpose.msra.mxu0 0.0
    %2120 = vmatprep.subr.mxu0 0.0
    %2121 = vmatpush1.xpose.msra.mxu0 0.0
    %2122 = vmatprep.subr.mxu0 0.0
    %2123 = vmatpush1.xpose.msra.mxu0 0.0
    %2124 = vmatprep.subr.mxu0 0.0
    %2125 = vmatpush1.xpose.msra.mxu0 0.0
    %2126 = vmatprep.subr.mxu0 0.0
    %2127 = vmatpush1.xpose.msra.mxu0 0.0
    %2128 = vmatprep.subr.mxu0 0.0
    %2129 = vmatpush1.xpose.msra.mxu0 0.0
    %2130 = vmatprep.subr.mxu0 0.0
    %2131 = vmatpush1.xpose.msra.mxu0 0.0
    %2132 = vmatprep.subr.mxu0 0.0
    %2133 = vmatpush1.xpose.msra.mxu0 0.0
    %2134 = vmatprep.subr.mxu0 0.0
    %2135 = vmatpush1.xpose.msra.mxu0 0.0
    %2136 = vmatprep.subr.mxu0 0.0
    %2137 = vmatpush1.xpose.msra.mxu0 0.0
    %2138 = vmatprep.subr.mxu0 0.0
    %2139 = vmatpush1.xpose.msra.mxu0 0.0
    %2140 = vmatprep.subr.mxu0 0.0
    %2141 = vmatpush1.xpose.msra.mxu0 0.0
    %2142 = vmatprep.subr.mxu0 0.0
    %2143 = vmatpush1.xpose.msra.mxu0 0.0
    %2144 = vmatprep.subr.mxu0 0.0
    %2145 = vmatpush1.xpose.msra.mxu0 0.0
    %2146 = vmatprep.subr.mxu0 0.0
    %2147 = vmatpush1.xpose.msra.mxu0 0.0
    %2148 = vmatprep.mubr.f32.mxu0 0.0
    %2149 = vmatmul.mubr.f32.gmra.mrb[0].mxu0 %v2076
    %v2150 = vpop.f32.mrb[0].mxu0
    %v2151 = vadd.f32 0.0, %v2150
    %v2152 = vpop.f32.mrb[0].mxu0
    %2153 = vdwg.mxu0
    %v2155 = vsel %vm1995, %v757, 0
    %v2158 = vsel %vm1995, %v1205, 0
    %v2161 = vsel %vm1995, %v1273, 0
    %2163 = vmatprep.subr.mxu0 0.0
    %2164 = vmatpush1.xpose.msra.mxu0 %v2158
    %2165 = vmatprep.subr.mxu0 0.0
    %2166 = vmatpush1.xpose.msra.mxu0 %v2161
    %2167 = vmatprep.subr.mxu0 0.0
    %2168 = vmatpush1.xpose.msra.mxu0 0.0
    %2169 = vmatprep.subr.mxu0 0.0
    %2170 = vmatpush1.xpose.msra.mxu0 0.0
    %2171 = vmatprep.subr.mxu0 0.0
    %2172 = vmatpush1.xpose.msra.mxu0 0.0
    %2173 = vmatprep.subr.mxu0 0.0
    %2174 = vmatpush1.xpose.msra.mxu0 0.0
    %2175 = vmatprep.subr.mxu0 0.0
    %2176 = vmatpush1.xpose.msra.mxu0 0.0
    %2177 = vmatprep.subr.mxu0 0.0
    %2178 = vmatpush1.xpose.msra.mxu0 0.0
    %2179 = vmatprep.subr.mxu0 0.0
    %2180 = vmatpush1.xpose.msra.mxu0 0.0
    %2181 = vmatprep.subr.mxu0 0.0
    %2182 = vmatpush1.xpose.msra.mxu0 0.0
    %2183 = vmatprep.subr.mxu0 0.0
    %2184 = vmatpush1.xpose.msra.mxu0 0.0
    %2185 = vmatprep.subr.mxu0 0.0
    %2186 = vmatpush1.xpose.msra.mxu0 0.0
    %2187 = vmatprep.subr.mxu0 0.0
    %2188 = vmatpush1.xpose.msra.mxu0 0.0
    %2189 = vmatprep.subr.mxu0 0.0
    %2190 = vmatpush1.xpose.msra.mxu0 0.0
    %2191 = vmatprep.subr.mxu0 0.0
    %2192 = vmatpush1.xpose.msra.mxu0 0.0
    %2193 = vmatprep.subr.mxu0 0.0
    %2194 = vmatpush1.xpose.msra.mxu0 0.0
    %2195 = vmatprep.subr.mxu0 0.0
    %2196 = vmatpush1.xpose.msra.mxu0 0.0
    %2197 = vmatprep.subr.mxu0 0.0
    %2198 = vmatpush1.xpose.msra.mxu0 0.0
    %2199 = vmatprep.subr.mxu0 0.0
    %2200 = vmatpush1.xpose.msra.mxu0 0.0
    %2201 = vmatprep.subr.mxu0 0.0
    %2202 = vmatpush1.xpose.msra.mxu0 0.0
    %2203 = vmatprep.subr.mxu0 0.0
    %2204 = vmatpush1.xpose.msra.mxu0 0.0
    %2205 = vmatprep.subr.mxu0 0.0
    %2206 = vmatpush1.xpose.msra.mxu0 0.0
    %2207 = vmatprep.subr.mxu0 0.0
    %2208 = vmatpush1.xpose.msra.mxu0 0.0
    %2209 = vmatprep.subr.mxu0 0.0
    %2210 = vmatpush1.xpose.msra.mxu0 0.0
    %2211 = vmatprep.subr.mxu0 0.0
    %2212 = vmatpush1.xpose.msra.mxu0 0.0
    %2213 = vmatprep.subr.mxu0 0.0
    %2214 = vmatpush1.xpose.msra.mxu0 0.0
    %2215 = vmatprep.subr.mxu0 0.0
    %2216 = vmatpush1.xpose.msra.mxu0 0.0
    %2217 = vmatprep.subr.mxu0 0.0
    %2218 = vmatpush1.xpose.msra.mxu0 0.0
    %2219 = vmatprep.subr.mxu0 0.0
    %2220 = vmatpush1.xpose.msra.mxu0 0.0
    %2221 = vmatprep.subr.mxu0 0.0
    %2222 = vmatpush1.xpose.msra.mxu0 0.0
    %2223 = vmatprep.subr.mxu0 0.0
    %2224 = vmatpush1.xpose.msra.mxu0 0.0
    %2225 = vmatprep.subr.mxu0 0.0
    %2226 = vmatpush1.xpose.msra.mxu0 0.0
    %2227 = vmatprep.mubr.f32.mxu0 0.0
    %2228 = vmatmul.mubr.f32.gmra.mrb[0].mxu0 %v2155
    %v2229 = vpop.f32.mrb[0].mxu0
    %v2230 = vadd.f32 0.0, %v2229
    %v2231 = vpop.f32.mrb[0].mxu0
    %2232 = vdwg.mxu0
    %v2234 = vsel %vm1995, %v758, 0
    %v2237 = vsel %vm1995, %v1206, 0
    %v2240 = vsel %vm1995, %v1274, 0
    %2242 = vmatprep.subr.mxu0 0.0
    %2243 = vmatpush1.xpose.msra.mxu0 %v2237
    %2244 = vmatprep.subr.mxu0 0.0
    %2245 = vmatpush1.xpose.msra.mxu0 %v2240
    %2246 = vmatprep.subr.mxu0 0.0
    %2247 = vmatpush1.xpose.msra.mxu0 0.0
    %2248 = vmatprep.subr.mxu0 0.0
    %2249 = vmatpush1.xpose.msra.mxu0 0.0
    %2250 = vmatprep.subr.mxu0 0.0
    %2251 = vmatpush1.xpose.msra.mxu0 0.0
    %2252 = vmatprep.subr.mxu0 0.0
    %2253 = vmatpush1.xpose.msra.mxu0 0.0
    %2254 = vmatprep.subr.mxu0 0.0
    %2255 = vmatpush1.xpose.msra.mxu0 0.0
    %2256 = vmatprep.subr.mxu0 0.0
    %2257 = vmatpush1.xpose.msra.mxu0 0.0
    %2258 = vmatprep.subr.mxu0 0.0
    %2259 = vmatpush1.xpose.msra.mxu0 0.0
    %2260 = vmatprep.subr.mxu0 0.0
    %2261 = vmatpush1.xpose.msra.mxu0 0.0
    %2262 = vmatprep.subr.mxu0 0.0
    %2263 = vmatpush1.xpose.msra.mxu0 0.0
    %2264 = vmatprep.subr.mxu0 0.0
    %2265 = vmatpush1.xpose.msra.mxu0 0.0
    %2266 = vmatprep.subr.mxu0 0.0
    %2267 = vmatpush1.xpose.msra.mxu0 0.0
    %2268 = vmatprep.subr.mxu0 0.0
    %2269 = vmatpush1.xpose.msra.mxu0 0.0
    %2270 = vmatprep.subr.mxu0 0.0
    %2271 = vmatpush1.xpose.msra.mxu0 0.0
    %2272 = vmatprep.subr.mxu0 0.0
    %2273 = vmatpush1.xpose.msra.mxu0 0.0
    %2274 = vmatprep.subr.mxu0 0.0
    %2275 = vmatpush1.xpose.msra.mxu0 0.0
    %2276 = vmatprep.subr.mxu0 0.0
    %2277 = vmatpush1.xpose.msra.mxu0 0.0
    %2278 = vmatprep.subr.mxu0 0.0
    %2279 = vmatpush1.xpose.msra.mxu0 0.0
    %2280 = vmatprep.subr.mxu0 0.0
    %2281 = vmatpush1.xpose.msra.mxu0 0.0
    %2282 = vmatprep.subr.mxu0 0.0
    %2283 = vmatpush1.xpose.msra.mxu0 0.0
    %2284 = vmatprep.subr.mxu0 0.0
    %2285 = vmatpush1.xpose.msra.mxu0 0.0
    %2286 = vmatprep.subr.mxu0 0.0
    %2287 = vmatpush1.xpose.msra.mxu0 0.0
    %2288 = vmatprep.subr.mxu0 0.0
    %2289 = vmatpush1.xpose.msra.mxu0 0.0
    %2290 = vmatprep.subr.mxu0 0.0
    %2291 = vmatpush1.xpose.msra.mxu0 0.0
    %2292 = vmatprep.subr.mxu0 0.0
    %2293 = vmatpush1.xpose.msra.mxu0 0.0
    %2294 = vmatprep.subr.mxu0 0.0
    %2295 = vmatpush1.xpose.msra.mxu0 0.0
    %2296 = vmatprep.subr.mxu0 0.0
    %2297 = vmatpush1.xpose.msra.mxu0 0.0
    %2298 = vmatprep.subr.mxu0 0.0
    %2299 = vmatpush1.xpose.msra.mxu0 0.0
    %2300 = vmatprep.subr.mxu0 0.0
    %2301 = vmatpush1.xpose.msra.mxu0 0.0
    %2302 = vmatprep.subr.mxu0 0.0
    %2303 = vmatpush1.xpose.msra.mxu0 0.0
    %2304 = vmatprep.subr.mxu0 0.0
    %2305 = vmatpush1.xpose.msra.mxu0 0.0
    %2306 = vmatprep.mubr.f32.mxu0 0.0
    %2307 = vmatmul.mubr.f32.gmra.mrb[0].mxu0 %v2234
    %v2308 = vpop.f32.mrb[0].mxu0
    %v2309 = vadd.f32 0.0, %v2308
    %v2310 = vpop.f32.mrb[0].mxu0
    %2311 = vdwg.mxu0
    %v2313 = vsel %vm1995, %v823, 0
    %v2316 = vsel %vm1995, %v1339, 0
    %v2319 = vsel %vm1995, %v1407, 0
    %2321 = vmatprep.subr.mxu0 0.0
    %2322 = vmatpush1.xpose.msra.mxu0 %v2316
    %2323 = vmatprep.subr.mxu0 0.0
    %2324 = vmatpush1.xpose.msra.mxu0 %v2319
    %2325 = vmatprep.subr.mxu0 0.0
    %2326 = vmatpush1.xpose.msra.mxu0 0.0
    %2327 = vmatprep.subr.mxu0 0.0
    %2328 = vmatpush1.xpose.msra.mxu0 0.0
    %2329 = vmatprep.subr.mxu0 0.0
    %2330 = vmatpush1.xpose.msra.mxu0 0.0
    %2331 = vmatprep.subr.mxu0 0.0
    %2332 = vmatpush1.xpose.msra.mxu0 0.0
    %2333 = vmatprep.subr.mxu0 0.0
    %2334 = vmatpush1.xpose.msra.mxu0 0.0
    %2335 = vmatprep.subr.mxu0 0.0
    %2336 = vmatpush1.xpose.msra.mxu0 0.0
    %2337 = vmatprep.subr.mxu0 0.0
    %2338 = vmatpush1.xpose.msra.mxu0 0.0
    %2339 = vmatprep.subr.mxu0 0.0
    %2340 = vmatpush1.xpose.msra.mxu0 0.0
    %2341 = vmatprep.subr.mxu0 0.0
    %2342 = vmatpush1.xpose.msra.mxu0 0.0
    %2343 = vmatprep.subr.mxu0 0.0
    %2344 = vmatpush1.xpose.msra.mxu0 0.0
    %2345 = vmatprep.subr.mxu0 0.0
    %2346 = vmatpush1.xpose.msra.mxu0 0.0
    %2347 = vmatprep.subr.mxu0 0.0
    %2348 = vmatpush1.xpose.msra.mxu0 0.0
    %2349 = vmatprep.subr.mxu0 0.0
    %2350 = vmatpush1.xpose.msra.mxu0 0.0
    %2351 = vmatprep.subr.mxu0 0.0
    %2352 = vmatpush1.xpose.msra.mxu0 0.0
    %2353 = vmatprep.subr.mxu0 0.0
    %2354 = vmatpush1.xpose.msra.mxu0 0.0
    %2355 = vmatprep.subr.mxu0 0.0
    %2356 = vmatpush1.xpose.msra.mxu0 0.0
    %2357 = vmatprep.subr.mxu0 0.0
    %2358 = vmatpush1.xpose.msra.mxu0 0.0
    %2359 = vmatprep.subr.mxu0 0.0
    %2360 = vmatpush1.xpose.msra.mxu0 0.0
    %2361 = vmatprep.subr.mxu0 0.0
    %2362 = vmatpush1.xpose.msra.mxu0 0.0
    %2363 = vmatprep.subr.mxu0 0.0
    %2364 = vmatpush1.xpose.msra.mxu0 0.0
    %2365 = vmatprep.subr.mxu0 0.0
    %2366 = vmatpush1.xpose.msra.mxu0 0.0
    %2367 = vmatprep.subr.mxu0 0.0
    %2368 = vmatpush1.xpose.msra.mxu0 0.0
    %2369 = vmatprep.subr.mxu0 0.0
    %2370 = vmatpush1.xpose.msra.mxu0 0.0
    %2371 = vmatprep.subr.mxu0 0.0
    %2372 = vmatpush1.xpose.msra.mxu0 0.0
    %2373 = vmatprep.subr.mxu0 0.0
    %2374 = vmatpush1.xpose.msra.mxu0 0.0
    %2375 = vmatprep.subr.mxu0 0.0
    %2376 = vmatpush1.xpose.msra.mxu0 0.0
    %2377 = vmatprep.subr.mxu0 0.0
    %2378 = vmatpush1.xpose.msra.mxu0 0.0
    %2379 = vmatprep.subr.mxu0 0.0
    %2380 = vmatpush1.xpose.msra.mxu0 0.0
    %2381 = vmatprep.subr.mxu0 0.0
    %2382 = vmatpush1.xpose.msra.mxu0 0.0
    %2383 = vmatprep.subr.mxu0 0.0
    %2384 = vmatpush1.xpose.msra.mxu0 0.0
    %2385 = vmatprep.mubr.f32.mxu0 0.0
    %2386 = vmatmul.mubr.f32.gmra.mrb[0].mxu0 %v2313
    %v2387 = vpop.f32.mrb[0].mxu0
    %v2388 = vadd.f32 0.0, %v2387
    %v2389 = vpop.f32.mrb[0].mxu0
    %2390 = vdwg.mxu0
    %v2392 = vsel %vm1995, %v824, 0
    %v2395 = vsel %vm1995, %v1340, 0
    %v2398 = vsel %vm1995, %v1408, 0
    %2400 = vmatprep.subr.mxu0 0.0
    %2401 = vmatpush1.xpose.msra.mxu0 %v2395
    %2402 = vmatprep.subr.mxu0 0.0
    %2403 = vmatpush1.xpose.msra.mxu0 %v2398
    %2404 = vmatprep.subr.mxu0 0.0
    %2405 = vmatpush1.xpose.msra.mxu0 0.0
    %2406 = vmatprep.subr.mxu0 0.0
    %2407 = vmatpush1.xpose.msra.mxu0 0.0
    %2408 = vmatprep.subr.mxu0 0.0
    %2409 = vmatpush1.xpose.msra.mxu0 0.0
    %2410 = vmatprep.subr.mxu0 0.0
    %2411 = vmatpush1.xpose.msra.mxu0 0.0
    %2412 = vmatprep.subr.mxu0 0.0
    %2413 = vmatpush1.xpose.msra.mxu0 0.0
    %2414 = vmatprep.subr.mxu0 0.0
    %2415 = vmatpush1.xpose.msra.mxu0 0.0
    %2416 = vmatprep.subr.mxu0 0.0
    %2417 = vmatpush1.xpose.msra.mxu0 0.0
    %2418 = vmatprep.subr.mxu0 0.0
    %2419 = vmatpush1.xpose.msra.mxu0 0.0
    %2420 = vmatprep.subr.mxu0 0.0
    %2421 = vmatpush1.xpose.msra.mxu0 0.0
    %2422 = vmatprep.subr.mxu0 0.0
    %2423 = vmatpush1.xpose.msra.mxu0 0.0
    %2424 = vmatprep.subr.mxu0 0.0
    %2425 = vmatpush1.xpose.msra.mxu0 0.0
    %2426 = vmatprep.subr.mxu0 0.0
    %2427 = vmatpush1.xpose.msra.mxu0 0.0
    %2428 = vmatprep.subr.mxu0 0.0
    %2429 = vmatpush1.xpose.msra.mxu0 0.0
    %2430 = vmatprep.subr.mxu0 0.0
    %2431 = vmatpush1.xpose.msra.mxu0 0.0
    %2432 = vmatprep.subr.mxu0 0.0
    %2433 = vmatpush1.xpose.msra.mxu0 0.0
    %2434 = vmatprep.subr.mxu0 0.0
    %2435 = vmatpush1.xpose.msra.mxu0 0.0
    %2436 = vmatprep.subr.mxu0 0.0
    %2437 = vmatpush1.xpose.msra.mxu0 0.0
    %2438 = vmatprep.subr.mxu0 0.0
    %2439 = vmatpush1.xpose.msra.mxu0 0.0
    %2440 = vmatprep.subr.mxu0 0.0
    %2441 = vmatpush1.xpose.msra.mxu0 0.0
    %2442 = vmatprep.subr.mxu0 0.0
    %2443 = vmatpush1.xpose.msra.mxu0 0.0
    %2444 = vmatprep.subr.mxu0 0.0
    %2445 = vmatpush1.xpose.msra.mxu0 0.0
    %2446 = vmatprep.subr.mxu0 0.0
    %2447 = vmatpush1.xpose.msra.mxu0 0.0
    %2448 = vmatprep.subr.mxu0 0.0
    %2449 = vmatpush1.xpose.msra.mxu0 0.0
    %2450 = vmatprep.subr.mxu0 0.0
    %2451 = vmatpush1.xpose.msra.mxu0 0.0
    %2452 = vmatprep.subr.mxu0 0.0
    %2453 = vmatpush1.xpose.msra.mxu0 0.0
    %2454 = vmatprep.subr.mxu0 0.0
    %2455 = vmatpush1.xpose.msra.mxu0 0.0
    %2456 = vmatprep.subr.mxu0 0.0
    %2457 = vmatpush1.xpose.msra.mxu0 0.0
    %2458 = vmatprep.subr.mxu0 0.0
    %2459 = vmatpush1.xpose.msra.mxu0 0.0
    %2460 = vmatprep.subr.mxu0 0.0
    %2461 = vmatpush1.xpose.msra.mxu0 0.0
    %2462 = vmatprep.subr.mxu0 0.0
    %2463 = vmatpush1.xpose.msra.mxu0 0.0
    %2464 = vmatprep.mubr.f32.mxu0 0.0
    %2465 = vmatmul.mubr.f32.gmra.mrb[0].mxu0 %v2392
    %v2466 = vpop.f32.mrb[0].mxu0
    %v2467 = vadd.f32 0.0, %v2466
    %v2468 = vpop.f32.mrb[0].mxu0
    %2469 = vdwg.mxu0
    %v2471 = vsel %vm1995, %v825, 0
    %v2474 = vsel %vm1995, %v1341, 0
    %v2477 = vsel %vm1995, %v1409, 0
    %2479 = vmatprep.subr.mxu0 0.0
    %2480 = vmatpush1.xpose.msra.mxu0 %v2474
    %2481 = vmatprep.subr.mxu0 0.0
    %2482 = vmatpush1.xpose.msra.mxu0 %v2477
    %2483 = vmatprep.subr.mxu0 0.0
    %2484 = vmatpush1.xpose.msra.mxu0 0.0
    %2485 = vmatprep.subr.mxu0 0.0
    %2486 = vmatpush1.xpose.msra.mxu0 0.0
    %2487 = vmatprep.subr.mxu0 0.0
    %2488 = vmatpush1.xpose.msra.mxu0 0.0
    %2489 = vmatprep.subr.mxu0 0.0
    %2490 = vmatpush1.xpose.msra.mxu0 0.0
    %2491 = vmatprep.subr.mxu0 0.0
    %2492 = vmatpush1.xpose.msra.mxu0 0.0
    %2493 = vmatprep.subr.mxu0 0.0
    %2494 = vmatpush1.xpose.msra.mxu0 0.0
    %2495 = vmatprep.subr.mxu0 0.0
    %2496 = vmatpush1.xpose.msra.mxu0 0.0
    %2497 = vmatprep.subr.mxu0 0.0
    %2498 = vmatpush1.xpose.msra.mxu0 0.0
    %2499 = vmatprep.subr.mxu0 0.0
    %2500 = vmatpush1.xpose.msra.mxu0 0.0
    %2501 = vmatprep.subr.mxu0 0.0
    %2502 = vmatpush1.xpose.msra.mxu0 0.0
    %2503 = vmatprep.subr.mxu0 0.0
    %2504 = vmatpush1.xpose.msra.mxu0 0.0
    %2505 = vmatprep.subr.mxu0 0.0
    %2506 = vmatpush1.xpose.msra.mxu0 0.0
    %2507 = vmatprep.subr.mxu0 0.0
    %2508 = vmatpush1.xpose.msra.mxu0 0.0
    %2509 = vmatprep.subr.mxu0 0.0
    %2510 = vmatpush1.xpose.msra.mxu0 0.0
    %2511 = vmatprep.subr.mxu0 0.0
    %2512 = vmatpush1.xpose.msra.mxu0 0.0
    %2513 = vmatprep.subr.mxu0 0.0
    %2514 = vmatpush1.xpose.msra.mxu0 0.0
    %2515 = vmatprep.subr.mxu0 0.0
    %2516 = vmatpush1.xpose.msra.mxu0 0.0
    %2517 = vmatprep.subr.mxu0 0.0
    %2518 = vmatpush1.xpose.msra.mxu0 0.0
    %2519 = vmatprep.subr.mxu0 0.0
    %2520 = vmatpush1.xpose.msra.mxu0 0.0
    %2521 = vmatprep.subr.mxu0 0.0
    %2522 = vmatpush1.xpose.msra.mxu0 0.0
    %2523 = vmatprep.subr.mxu0 0.0
    %2524 = vmatpush1.xpose.msra.mxu0 0.0
    %2525 = vmatprep.subr.mxu0 0.0
    %2526 = vmatpush1.xpose.msra.mxu0 0.0
    %2527 = vmatprep.subr.mxu0 0.0
    %2528 = vmatpush1.xpose.msra.mxu0 0.0
    %2529 = vmatprep.subr.mxu0 0.0
    %2530 = vmatpush1.xpose.msra.mxu0 0.0
    %2531 = vmatprep.subr.mxu0 0.0
    %2532 = vmatpush1.xpose.msra.mxu0 0.0
    %2533 = vmatprep.subr.mxu0 0.0
    %2534 = vmatpush1.xpose.msra.mxu0 0.0
    %2535 = vmatprep.subr.mxu0 0.0
    %2536 = vmatpush1.xpose.msra.mxu0 0.0
    %2537 = vmatprep.subr.mxu0 0.0
    %2538 = vmatpush1.xpose.msra.mxu0 0.0
    %2539 = vmatprep.subr.mxu0 0.0
    %2540 = vmatpush1.xpose.msra.mxu0 0.0
    %2541 = vmatprep.subr.mxu0 0.0
    %2542 = vmatpush1.xpose.msra.mxu0 0.0
    %2543 = vmatprep.mubr.f32.mxu0 0.0
    %2544 = vmatmul.mubr.f32.gmra.mrb[0].mxu0 %v2471
    %v2545 = vpop.f32.mrb[0].mxu0
    %v2546 = vadd.f32 0.0, %v2545
    %v2547 = vpop.f32.mrb[0].mxu0
    %2548 = vdwg.mxu0
    %v2550 = vsel %vm1995, %v826, 0
    %v2553 = vsel %vm1995, %v1342, 0
    %v2556 = vsel %vm1995, %v1410, 0
    %2558 = vmatprep.subr.mxu0 0.0
    %2559 = vmatpush1.xpose.msra.mxu0 %v2553
    %2560 = vmatprep.subr.mxu0 0.0
    %2561 = vmatpush1.xpose.msra.mxu0 %v2556
    %2562 = vmatprep.subr.mxu0 0.0
    %2563 = vmatpush1.xpose.msra.mxu0 0.0
    %2564 = vmatprep.subr.mxu0 0.0
    %2565 = vmatpush1.xpose.msra.mxu0 0.0
    %2566 = vmatprep.subr.mxu0 0.0
    %2567 = vmatpush1.xpose.msra.mxu0 0.0
    %2568 = vmatprep.subr.mxu0 0.0
    %2569 = vmatpush1.xpose.msra.mxu0 0.0
    %2570 = vmatprep.subr.mxu0 0.0
    %2571 = vmatpush1.xpose.msra.mxu0 0.0
    %2572 = vmatprep.subr.mxu0 0.0
    %2573 = vmatpush1.xpose.msra.mxu0 0.0
    %2574 = vmatprep.subr.mxu0 0.0
    %2575 = vmatpush1.xpose.msra.mxu0 0.0
    %2576 = vmatprep.subr.mxu0 0.0
    %2577 = vmatpush1.xpose.msra.mxu0 0.0
    %2578 = vmatprep.subr.mxu0 0.0
    %2579 = vmatpush1.xpose.msra.mxu0 0.0
    %2580 = vmatprep.subr.mxu0 0.0
    %2581 = vmatpush1.xpose.msra.mxu0 0.0
    %2582 = vmatprep.subr.mxu0 0.0
    %2583 = vmatpush1.xpose.msra.mxu0 0.0
    %2584 = vmatprep.subr.mxu0 0.0
    %2585 = vmatpush1.xpose.msra.mxu0 0.0
    %2586 = vmatprep.subr.mxu0 0.0
    %2587 = vmatpush1.xpose.msra.mxu0 0.0
    %2588 = vmatprep.subr.mxu0 0.0
    %2589 = vmatpush1.xpose.msra.mxu0 0.0
    %2590 = vmatprep.subr.mxu0 0.0
    %2591 = vmatpush1.xpose.msra.mxu0 0.0
    %2592 = vmatprep.subr.mxu0 0.0
    %2593 = vmatpush1.xpose.msra.mxu0 0.0
    %2594 = vmatprep.subr.mxu0 0.0
    %2595 = vmatpush1.xpose.msra.mxu0 0.0
    %2596 = vmatprep.subr.mxu0 0.0
    %2597 = vmatpush1.xpose.msra.mxu0 0.0
    %2598 = vmatprep.subr.mxu0 0.0
    %2599 = vmatpush1.xpose.msra.mxu0 0.0
    %2600 = vmatprep.subr.mxu0 0.0
    %2601 = vmatpush1.xpose.msra.mxu0 0.0
    %2602 = vmatprep.subr.mxu0 0.0
    %2603 = vmatpush1.xpose.msra.mxu0 0.0
    %2604 = vmatprep.subr.mxu0 0.0
    %2605 = vmatpush1.xpose.msra.mxu0 0.0
    %2606 = vmatprep.subr.mxu0 0.0
    %2607 = vmatpush1.xpose.msra.mxu0 0.0
    %2608 = vmatprep.subr.mxu0 0.0
    %2609 = vmatpush1.xpose.msra.mxu0 0.0
    %2610 = vmatprep.subr.mxu0 0.0
    %2611 = vmatpush1.xpose.msra.mxu0 0.0
    %2612 = vmatprep.subr.mxu0 0.0
    %2613 = vmatpush1.xpose.msra.mxu0 0.0
    %2614 = vmatprep.subr.mxu0 0.0
    %2615 = vmatpush1.xpose.msra.mxu0 0.0
    %2616 = vmatprep.subr.mxu0 0.0
    %2617 = vmatpush1.xpose.msra.mxu0 0.0
    %2618 = vmatprep.subr.mxu0 0.0
    %2619 = vmatpush1.xpose.msra.mxu0 0.0
    %2620 = vmatprep.subr.mxu0 0.0
    %2621 = vmatpush1.xpose.msra.mxu0 0.0
    %2622 = vmatprep.mubr.f32.mxu0 0.0
    %2623 = vmatmul.mubr.f32.gmra.mrb[0].mxu0 %v2550
    %v2624 = vpop.f32.mrb[0].mxu0
    %v2625 = vadd.f32 0.0, %v2624
    %v2626 = vpop.f32.mrb[0].mxu0
    %2627 = vdwg.mxu0
    %vm2628 = vcmask 130048
    %v2629 = vsel %vm2628, %v2072, -inf
    %2630 = vmax.xlane.f32.xlu0 %v2629
    %v2631 = vpop.xlane.xlu0 %2630
    %v2632 = vsel %vm2628, %v2151, -inf
    %2633 = vmax.xlane.f32.xlu0 %v2632
    %v2634 = vpop.xlane.xlu0 %2633
    %v2635 = vsel %vm2628, %v2230, -inf
    %2636 = vmax.xlane.f32.xlu0 %v2635
    %v2637 = vpop.xlane.xlu0 %2636
    %v2638 = vsel %vm2628, %v2309, -inf
    %2639 = vmax.xlane.f32.xlu0 %v2638
    %v2640 = vpop.xlane.xlu0 %2639
    %v2641 = vsel %vm2628, %v2388, -inf
    %2642 = vmax.xlane.f32.xlu0 %v2641
    %v2643 = vpop.xlane.xlu0 %2642
    %v2644 = vsel %vm2628, %v2467, -inf
    %2645 = vmax.xlane.f32.xlu0 %v2644
    %v2646 = vpop.xlane.xlu0 %2645
    %v2647 = vsel %vm2628, %v2546, -inf
    %2648 = vmax.xlane.f32.xlu0 %v2647
    %v2649 = vpop.xlane.xlu0 %2648
    %v2650 = vsel %vm2628, %v2625, -inf
    %2651 = vmax.xlane.f32.xlu0 %v2650
    %v2652 = vpop.xlane.xlu0 %2651
    %v2653 = vsub.f32 %v2072, %v2631
    %v2654 = vsub.f32 %v2151, %v2634
    %v2655 = vsub.f32 %v2230, %v2637
    %v2656 = vsub.f32 %v2309, %v2640
    %v2657 = vsub.f32 %v2388, %v2643
    %v2658 = vsub.f32 %v2467, %v2646
    %v2659 = vsub.f32 %v2546, %v2649
    %v2660 = vsub.f32 %v2625, %v2652
    %v2661 = vmul.f32 %v2653, 1.442695
    %v2662 = vpow.pop %v2661
    %v2663 = vmul.f32 %v2654, 1.442695
    %v2664 = vpow.pop %v2663
    %v2665 = vmul.f32 %v2655, 1.442695
    %v2666 = vpow.pop %v2665
    %v2667 = vmul.f32 %v2656, 1.442695
    %v2668 = vpow.pop %v2667
    %v2669 = vmul.f32 %v2657, 1.442695
    %v2670 = vpow.pop %v2669
    %v2671 = vmul.f32 %v2658, 1.442695
    %v2672 = vpow.pop %v2671
    %v2673 = vmul.f32 %v2659, 1.442695
    %v2674 = vpow.pop %v2673
    %v2675 = vmul.f32 %v2660, 1.442695
    %v2676 = vpow.pop %v2675
    %v2677 = vsel %vm2628, %v2662, 0.0
    %2678 = vadd.xlane.f32.xlu0 %v2677
    %v2679 = vpop.xlane.xlu0 %2678
    %v2680 = vsel %vm2628, %v2664, 0.0
    %2681 = vadd.xlane.f32.xlu0 %v2680
    %v2682 = vpop.xlane.xlu0 %2681
    %v2683 = vsel %vm2628, %v2666, 0.0
    %2684 = vadd.xlane.f32.xlu0 %v2683
    %v2685 = vpop.xlane.xlu0 %2684
    %v2686 = vsel %vm2628, %v2668, 0.0
    %2687 = vadd.xlane.f32.xlu0 %v2686
    %v2688 = vpop.xlane.xlu0 %2687
    %v2689 = vsel %vm2628, %v2670, 0.0
    %2690 = vadd.xlane.f32.xlu0 %v2689
    %v2691 = vpop.xlane.xlu0 %2690
    %v2692 = vsel %vm2628, %v2672, 0.0
    %2693 = vadd.xlane.f32.xlu0 %v2692
    %v2694 = vpop.xlane.xlu0 %2693
    %v2695 = vsel %vm2628, %v2674, 0.0
    %2696 = vadd.xlane.f32.xlu0 %v2695
    %v2697 = vpop.xlane.xlu0 %2696
    %v2698 = vsel %vm2628, %v2676, 0.0
    %2699 = vadd.xlane.f32.xlu0 %v2698
    %v2700 = vpop.xlane.xlu0 %2699
    %v2701 = vrcp.pop %v2679
    %v2702 = vmul.f32 %v2662, %v2701
    %v2703 = vrcp.pop %v2682
    %v2704 = vmul.f32 %v2664, %v2703
    %v2705 = vrcp.pop %v2685
    %v2706 = vmul.f32 %v2666, %v2705
    %v2707 = vrcp.pop %v2688
    %v2708 = vmul.f32 %v2668, %v2707
    %v2709 = vrcp.pop %v2691
    %v2710 = vmul.f32 %v2670, %v2709
    %v2711 = vrcp.pop %v2694
    %v2712 = vmul.f32 %v2672, %v2711
    %v2713 = vrcp.pop %v2697
    %v2714 = vmul.f32 %v2674, %v2713
    %v2715 = vrcp.pop %v2700
    %v2716 = vmul.f32 %v2676, %v2715
    %v2718 = vsel %vm2628, %v2702, 0
    %2720 = vmatprep.subr.mxu0 0.0
    %2721 = vmatpush1.msra.mxu0 %v1787
    %2722 = vmatprep.subr.mxu0 0.0
    %2723 = vmatpush1.msra.mxu0 %v1855
    %2724 = vmatprep.subr.mxu0 0.0
    %2725 = vmatpush1.msra.mxu0 0.0
    %2726 = vmatprep.subr.mxu0 0.0
    %2727 = vmatpush1.msra.mxu0 0.0
    %2728 = vmatprep.subr.mxu0 0.0
    %2729 = vmatpush1.msra.mxu0 0.0
    %2730 = vmatprep.subr.mxu0 0.0
    %2731 = vmatpush1.msra.mxu0 0.0
    %2732 = vmatprep.subr.mxu0 0.0
    %2733 = vmatpush1.msra.mxu0 0.0
    %2734 = vmatprep.subr.mxu0 0.0
    %2735 = vmatpush1.msra.mxu0 0.0
    %2736 = vmatprep.subr.mxu0 0.0
    %2737 = vmatpush1.msra.mxu0 0.0
    %2738 = vmatprep.subr.mxu0 0.0
    %2739 = vmatpush1.msra.mxu0 0.0
    %2740 = vmatprep.subr.mxu0 0.0
    %2741 = vmatpush1.msra.mxu0 0.0
    %2742 = vmatprep.subr.mxu0 0.0
    %2743 = vmatpush1.msra.mxu0 0.0
    %2744 = vmatprep.subr.mxu0 0.0
    %2745 = vmatpush1.msra.mxu0 0.0
    %2746 = vmatprep.subr.mxu0 0.0
    %2747 = vmatpush1.msra.mxu0 0.0
    %2748 = vmatprep.subr.mxu0 0.0
    %2749 = vmatpush1.msra.mxu0 0.0
    %2750 = vmatprep.subr.mxu0 0.0
    %2751 = vmatpush1.msra.mxu0 0.0
    %2752 = vmatprep.subr.mxu0 0.0
    %2753 = vmatpush1.msra.mxu0 0.0
    %2754 = vmatprep.subr.mxu0 0.0
    %2755 = vmatpush1.msra.mxu0 0.0
    %2756 = vmatprep.subr.mxu0 0.0
    %2757 = vmatpush1.msra.mxu0 0.0
    %2758 = vmatprep.subr.mxu0 0.0
    %2759 = vmatpush1.msra.mxu0 0.0
    %2760 = vmatprep.subr.mxu0 0.0
    %2761 = vmatpush1.msra.mxu0 0.0
    %2762 = vmatprep.subr.mxu0 0.0
    %2763 = vmatpush1.msra.mxu0 0.0
    %2764 = vmatprep.subr.mxu0 0.0
    %2765 = vmatpush1.msra.mxu0 0.0
    %2766 = vmatprep.subr.mxu0 0.0
    %2767 = vmatpush1.msra.mxu0 0.0
    %2768 = vmatprep.subr.mxu0 0.0
    %2769 = vmatpush1.msra.mxu0 0.0
    %2770 = vmatprep.subr.mxu0 0.0
    %2771 = vmatpush1.msra.mxu0 0.0
    %2772 = vmatprep.subr.mxu0 0.0
    %2773 = vmatpush1.msra.mxu0 0.0
    %2774 = vmatprep.subr.mxu0 0.0
    %2775 = vmatpush1.msra.mxu0 0.0
    %2776 = vmatprep.subr.mxu0 0.0
    %2777 = vmatpush1.msra.mxu0 0.0
    %2778 = vmatprep.subr.mxu0 0.0
    %2779 = vmatpush1.msra.mxu0 0.0
    %2780 = vmatprep.subr.mxu0 0.0
    %2781 = vmatpush1.msra.mxu0 0.0
    %2782 = vmatprep.subr.mxu0 0.0
    %2783 = vmatpush1.msra.mxu0 0.0
    %2784 = vmatprep.mubr.f32.mxu0 0.0
    %2785 = vmatmul.mubr.f32.gmra.mrb[0].mxu0 %v2718
    %v2786 = vpop.f32.mrb[0].mxu0
    %v2787 = vadd.f32 0.0, %v2786
    %v2788 = vpop.f32.mrb[0].mxu0
    %2789 = vdwg.mxu0
    %v2791 = vsel %vm2628, %v2704, 0
    %2793 = vmatprep.subr.mxu0 0.0
    %2794 = vmatpush1.msra.mxu0 %v1788
    %2795 = vmatprep.subr.mxu0 0.0
    %2796 = vmatpush1.msra.mxu0 %v1856
    %2797 = vmatprep.subr.mxu0 0.0
    %2798 = vmatpush1.msra.mxu0 0.0
    %2799 = vmatprep.subr.mxu0 0.0
    %2800 = vmatpush1.msra.mxu0 0.0
    %2801 = vmatprep.subr.mxu0 0.0
    %2802 = vmatpush1.msra.mxu0 0.0
    %2803 = vmatprep.subr.mxu0 0.0
    %2804 = vmatpush1.msra.mxu0 0.0
    %2805 = vmatprep.subr.mxu0 0.0
    %2806 = vmatpush1.msra.mxu0 0.0
    %2807 = vmatprep.subr.mxu0 0.0
    %2808 = vmatpush1.msra.mxu0 0.0
    %2809 = vmatprep.subr.mxu0 0.0
    %2810 = vmatpush1.msra.mxu0 0.0
    %2811 = vmatprep.subr.mxu0 0.0
    %2812 = vmatpush1.msra.mxu0 0.0
    %2813 = vmatprep.subr.mxu0 0.0
    %2814 = vmatpush1.msra.mxu0 0.0
    %2815 = vmatprep.subr.mxu0 0.0
    %2816 = vmatpush1.msra.mxu0 0.0
    %2817 = vmatprep.subr.mxu0 0.0
    %2818 = vmatpush1.msra.mxu0 0.0
    %2819 = vmatprep.subr.mxu0 0.0
    %2820 = vmatpush1.msra.mxu0 0.0
    %2821 = vmatprep.subr.mxu0 0.0
    %2822 = vmatpush1.msra.mxu0 0.0
    %2823 = vmatprep.subr.mxu0 0.0
    %2824 = vmatpush1.msra.mxu0 0.0
    %2825 = vmatprep.subr.mxu0 0.0
    %2826 = vmatpush1.msra.mxu0 0.0
    %2827 = vmatprep.subr.mxu0 0.0
    %2828 = vmatpush1.msra.mxu0 0.0
    %2829 = vmatprep.subr.mxu0 0.0
    %2830 = vmatpush1.msra.mxu0 0.0
    %2831 = vmatprep.subr.mxu0 0.0
    %2832 = vmatpush1.msra.mxu0 0.0
    %2833 = vmatprep.subr.mxu0 0.0
    %2834 = vmatpush1.msra.mxu0 0.0
    %2835 = vmatprep.subr.mxu0 0.0
    %2836 = vmatpush1.msra.mxu0 0.0
    %2837 = vmatprep.subr.mxu0 0.0
    %2838 = vmatpush1.msra.mxu0 0.0
    %2839 = vmatprep.subr.mxu0 0.0
    %2840 = vmatpush1.msra.mxu0 0.0
    %2841 = vmatprep.subr.mxu0 0.0
    %2842 = vmatpush1.msra.mxu0 0.0
    %2843 = vmatprep.subr.mxu0 0.0
    %2844 = vmatpush1.msra.mxu0 0.0
    %2845 = vmatprep.subr.mxu0 0.0
    %2846 = vmatpush1.msra.mxu0 0.0
    %2847 = vmatprep.subr.mxu0 0.0
    %2848 = vmatpush1.msra.mxu0 0.0
    %2849 = vmatprep.subr.mxu0 0.0
    %2850 = vmatpush1.msra.mxu0 0.0
    %2851 = vmatprep.subr.mxu0 0.0
    %2852 = vmatpush1.msra.mxu0 0.0
    %2853 = vmatprep.subr.mxu0 0.0
    %2854 = vmatpush1.msra.mxu0 0.0
    %2855 = vmatprep.subr.mxu0 0.0
    %2856 = vmatpush1.msra.mxu0 0.0
    %2857 = vmatprep.mubr.f32.mxu0 0.0
    %2858 = vmatmul.mubr.f32.gmra.mrb[0].mxu0 %v2791
    %v2859 = vpop.f32.mrb[0].mxu0
    %v2860 = vadd.f32 0.0, %v2859
    %v2861 = vpop.f32.mrb[0].mxu0
    %2862 = vdwg.mxu0
    %v2864 = vsel %vm2628, %v2706, 0
    %2866 = vmatprep.subr.mxu0 0.0
    %2867 = vmatpush1.msra.mxu0 %v1789
    %2868 = vmatprep.subr.mxu0 0.0
    %2869 = vmatpush1.msra.mxu0 %v1857
    %2870 = vmatprep.subr.mxu0 0.0
    %2871 = vmatpush1.msra.mxu0 0.0
    %2872 = vmatprep.subr.mxu0 0.0
    %2873 = vmatpush1.msra.mxu0 0.0
    %2874 = vmatprep.subr.mxu0 0.0
    %2875 = vmatpush1.msra.mxu0 0.0
    %2876 = vmatprep.subr.mxu0 0.0
    %2877 = vmatpush1.msra.mxu0 0.0
    %2878 = vmatprep.subr.mxu0 0.0
    %2879 = vmatpush1.msra.mxu0 0.0
    %2880 = vmatprep.subr.mxu0 0.0
    %2881 = vmatpush1.msra.mxu0 0.0
    %2882 = vmatprep.subr.mxu0 0.0
    %2883 = vmatpush1.msra.mxu0 0.0
    %2884 = vmatprep.subr.mxu0 0.0
    %2885 = vmatpush1.msra.mxu0 0.0
    %2886 = vmatprep.subr.mxu0 0.0
    %2887 = vmatpush1.msra.mxu0 0.0
    %2888 = vmatprep.subr.mxu0 0.0
    %2889 = vmatpush1.msra.mxu0 0.0
    %2890 = vmatprep.subr.mxu0 0.0
    %2891 = vmatpush1.msra.mxu0 0.0
    %2892 = vmatprep.subr.mxu0 0.0
    %2893 = vmatpush1.msra.mxu0 0.0
    %2894 = vmatprep.subr.mxu0 0.0
    %2895 = vmatpush1.msra.mxu0 0.0
    %2896 = vmatprep.subr.mxu0 0.0
    %2897 = vmatpush1.msra.mxu0 0.0
    %2898 = vmatprep.subr.mxu0 0.0
    %2899 = vmatpush1.msra.mxu0 0.0
    %2900 = vmatprep.subr.mxu0 0.0
    %2901 = vmatpush1.msra.mxu0 0.0
    %2902 = vmatprep.subr.mxu0 0.0
    %2903 = vmatpush1.msra.mxu0 0.0
    %2904 = vmatprep.subr.mxu0 0.0
    %2905 = vmatpush1.msra.mxu0 0.0
    %2906 = vmatprep.subr.mxu0 0.0
    %2907 = vmatpush1.msra.mxu0 0.0
    %2908 = vmatprep.subr.mxu0 0.0
    %2909 = vmatpush1.msra.mxu0 0.0
    %2910 = vmatprep.subr.mxu0 0.0
    %2911 = vmatpush1.msra.mxu0 0.0
    %2912 = vmatprep.subr.mxu0 0.0
    %2913 = vmatpush1.msra.mxu0 0.0
    %2914 = vmatprep.subr.mxu0 0.0
    %2915 = vmatpush1.msra.mxu0 0.0
    %2916 = vmatprep.subr.mxu0 0.0
    %2917 = vmatpush1.msra.mxu0 0.0
    %2918 = vmatprep.subr.mxu0 0.0
    %2919 = vmatpush1.msra.mxu0 0.0
    %2920 = vmatprep.subr.mxu0 0.0
    %2921 = vmatpush1.msra.mxu0 0.0
    %2922 = vmatprep.subr.mxu0 0.0
    %2923 = vmatpush1.msra.mxu0 0.0
    %2924 = vmatprep.subr.mxu0 0.0
    %2925 = vmatpush1.msra.mxu0 0.0
    %2926 = vmatprep.subr.mxu0 0.0
    %2927 = vmatpush1.msra.mxu0 0.0
    %2928 = vmatprep.subr.mxu0 0.0
    %2929 = vmatpush1.msra.mxu0 0.0
    %2930 = vmatprep.mubr.f32.mxu0 0.0
    %2931 = vmatmul.mubr.f32.gmra.mrb[0].mxu0 %v2864
    %v2932 = vpop.f32.mrb[0].mxu0
    %v2933 = vadd.f32 0.0, %v2932
    %v2934 = vpop.f32.mrb[0].mxu0
    %2935 = vdwg.mxu0
    %v2937 = vsel %vm2628, %v2708, 0
    %2939 = vmatprep.subr.mxu0 0.0
    %2940 = vmatpush1.msra.mxu0 %v1790
    %2941 = vmatprep.subr.mxu0 0.0
    %2942 = vmatpush1.msra.mxu0 %v1858
    %2943 = vmatprep.subr.mxu0 0.0
    %2944 = vmatpush1.msra.mxu0 0.0
    %2945 = vmatprep.subr.mxu0 0.0
    %2946 = vmatpush1.msra.mxu0 0.0
    %2947 = vmatprep.subr.mxu0 0.0
    %2948 = vmatpush1.msra.mxu0 0.0
    %2949 = vmatprep.subr.mxu0 0.0
    %2950 = vmatpush1.msra.mxu0 0.0
    %2951 = vmatprep.subr.mxu0 0.0
    %2952 = vmatpush1.msra.mxu0 0.0
    %2953 = vmatprep.subr.mxu0 0.0
    %2954 = vmatpush1.msra.mxu0 0.0
    %2955 = vmatprep.subr.mxu0 0.0
    %2956 = vmatpush1.msra.mxu0 0.0
    %2957 = vmatprep.subr.mxu0 0.0
    %2958 = vmatpush1.msra.mxu0 0.0
    %2959 = vmatprep.subr.mxu0 0.0
    %2960 = vmatpush1.msra.mxu0 0.0
    %2961 = vmatprep.subr.mxu0 0.0
    %2962 = vmatpush1.msra.mxu0 0.0
    %2963 = vmatprep.subr.mxu0 0.0
    %2964 = vmatpush1.msra.mxu0 0.0
    %2965 = vmatprep.subr.mxu0 0.0
    %2966 = vmatpush1.msra.mxu0 0.0
    %2967 = vmatprep.subr.mxu0 0.0
    %2968 = vmatpush1.msra.mxu0 0.0
    %2969 = vmatprep.subr.mxu0 0.0
    %2970 = vmatpush1.msra.mxu0 0.0
    %2971 = vmatprep.subr.mxu0 0.0
    %2972 = vmatpush1.msra.mxu0 0.0
    %2973 = vmatprep.subr.mxu0 0.0
    %2974 = vmatpush1.msra.mxu0 0.0
    %2975 = vmatprep.subr.mxu0 0.0
    %2976 = vmatpush1.msra.mxu0 0.0
    %2977 = vmatprep.subr.mxu0 0.0
    %2978 = vmatpush1.msra.mxu0 0.0
    %2979 = vmatprep.subr.mxu0 0.0
    %2980 = vmatpush1.msra.mxu0 0.0
    %2981 = vmatprep.subr.mxu0 0.0
    %2982 = vmatpush1.msra.mxu0 0.0
    %2983 = vmatprep.subr.mxu0 0.0
    %2984 = vmatpush1.msra.mxu0 0.0
    %2985 = vmatprep.subr.mxu0 0.0
    %2986 = vmatpush1.msra.mxu0 0.0
    %2987 = vmatprep.subr.mxu0 0.0
    %2988 = vmatpush1.msra.mxu0 0.0
    %2989 = vmatprep.subr.mxu0 0.0
    %2990 = vmatpush1.msra.mxu0 0.0
    %2991 = vmatprep.subr.mxu0 0.0
    %2992 = vmatpush1.msra.mxu0 0.0
    %2993 = vmatprep.subr.mxu0 0.0
    %2994 = vmatpush1.msra.mxu0 0.0
    %2995 = vmatprep.subr.mxu0 0.0
    %2996 = vmatpush1.msra.mxu0 0.0
    %2997 = vmatprep.subr.mxu0 0.0
    %2998 = vmatpush1.msra.mxu0 0.0
    %2999 = vmatprep.subr.mxu0 0.0
    %3000 = vmatpush1.msra.mxu0 0.0
    %3001 = vmatprep.subr.mxu0 0.0
    %3002 = vmatpush1.msra.mxu0 0.0
    %3003 = vmatprep.mubr.f32.mxu0 0.0
    %3004 = vmatmul.mubr.f32.gmra.mrb[0].mxu0 %v2937
    %v3005 = vpop.f32.mrb[0].mxu0
    %v3006 = vadd.f32 0.0, %v3005
    %v3007 = vpop.f32.mrb[0].mxu0
    %3008 = vdwg.mxu0
    %v3010 = vsel %vm2628, %v2710, 0
    %3012 = vmatprep.subr.mxu0 0.0
    %3013 = vmatpush1.msra.mxu0 %v1923
    %3014 = vmatprep.subr.mxu0 0.0
    %3015 = vmatpush1.msra.mxu0 %v1991
    %3016 = vmatprep.subr.mxu0 0.0
    %3017 = vmatpush1.msra.mxu0 0.0
    %3018 = vmatprep.subr.mxu0 0.0
    %3019 = vmatpush1.msra.mxu0 0.0
    %3020 = vmatprep.subr.mxu0 0.0
    %3021 = vmatpush1.msra.mxu0 0.0
    %3022 = vmatprep.subr.mxu0 0.0
    %3023 = vmatpush1.msra.mxu0 0.0
    %3024 = vmatprep.subr.mxu0 0.0
    %3025 = vmatpush1.msra.mxu0 0.0
    %3026 = vmatprep.subr.mxu0 0.0
    %3027 = vmatpush1.msra.mxu0 0.0
    %3028 = vmatprep.subr.mxu0 0.0
    %3029 = vmatpush1.msra.mxu0 0.0
    %3030 = vmatprep.subr.mxu0 0.0
    %3031 = vmatpush1.msra.mxu0 0.0
    %3032 = vmatprep.subr.mxu0 0.0
    %3033 = vmatpush1.msra.mxu0 0.0
    %3034 = vmatprep.subr.mxu0 0.0
    %3035 = vmatpush1.msra.mxu0 0.0
    %3036 = vmatprep.subr.mxu0 0.0
    %3037 = vmatpush1.msra.mxu0 0.0
    %3038 = vmatprep.subr.mxu0 0.0
    %3039 = vmatpush1.msra.mxu0 0.0
    %3040 = vmatprep.subr.mxu0 0.0
    %3041 = vmatpush1.msra.mxu0 0.0
    %3042 = vmatprep.subr.mxu0 0.0
    %3043 = vmatpush1.msra.mxu0 0.0
    %3044 = vmatprep.subr.mxu0 0.0
    %3045 = vmatpush1.msra.mxu0 0.0
    %3046 = vmatprep.subr.mxu0 0.0
    %3047 = vmatpush1.msra.mxu0 0.0
    %3048 = vmatprep.subr.mxu0 0.0
    %3049 = vmatpush1.msra.mxu0 0.0
    %3050 = vmatprep.subr.mxu0 0.0
    %3051 = vmatpush1.msra.mxu0 0.0
    %3052 = vmatprep.subr.mxu0 0.0
    %3053 = vmatpush1.msra.mxu0 0.0
    %3054 = vmatprep.subr.mxu0 0.0
    %3055 = vmatpush1.msra.mxu0 0.0
    %3056 = vmatprep.subr.mxu0 0.0
    %3057 = vmatpush1.msra.mxu0 0.0
    %3058 = vmatprep.subr.mxu0 0.0
    %3059 = vmatpush1.msra.mxu0 0.0
    %3060 = vmatprep.subr.mxu0 0.0
    %3061 = vmatpush1.msra.mxu0 0.0
    %3062 = vmatprep.subr.mxu0 0.0
    %3063 = vmatpush1.msra.mxu0 0.0
    %3064 = vmatprep.subr.mxu0 0.0
    %3065 = vmatpush1.msra.mxu0 0.0
    %3066 = vmatprep.subr.mxu0 0.0
    %3067 = vmatpush1.msra.mxu0 0.0
    %3068 = vmatprep.subr.mxu0 0.0
    %3069 = vmatpush1.msra.mxu0 0.0
    %3070 = vmatprep.subr.mxu0 0.0
    %3071 = vmatpush1.msra.mxu0 0.0
    %3072 = vmatprep.subr.mxu0 0.0
    %3073 = vmatpush1.msra.mxu0 0.0
    %3074 = vmatprep.subr.mxu0 0.0
    %3075 = vmatpush1.msra.mxu0 0.0
    %3076 = vmatprep.mubr.f32.mxu0 0.0
    %3077 = vmatmul.mubr.f32.gmra.mrb[0].mxu0 %v3010
    %v3078 = vpop.f32.mrb[0].mxu0
    %v3079 = vadd.f32 0.0, %v3078
    %v3080 = vpop.f32.mrb[0].mxu0
    %3081 = vdwg.mxu0
    %v3083 = vsel %vm2628, %v2712, 0
    %3085 = vmatprep.subr.mxu0 0.0
    %3086 = vmatpush1.msra.mxu0 %v1924
    %3087 = vmatprep.subr.mxu0 0.0
    %3088 = vmatpush1.msra.mxu0 %v1992
    %3089 = vmatprep.subr.mxu0 0.0
    %3090 = vmatpush1.msra.mxu0 0.0
    %3091 = vmatprep.subr.mxu0 0.0
    %3092 = vmatpush1.msra.mxu0 0.0
    %3093 = vmatprep.subr.mxu0 0.0
    %3094 = vmatpush1.msra.mxu0 0.0
    %3095 = vmatprep.subr.mxu0 0.0
    %3096 = vmatpush1.msra.mxu0 0.0
    %3097 = vmatprep.subr.mxu0 0.0
    %3098 = vmatpush1.msra.mxu0 0.0
    %3099 = vmatprep.subr.mxu0 0.0
    %3100 = vmatpush1.msra.mxu0 0.0
    %3101 = vmatprep.subr.mxu0 0.0
    %3102 = vmatpush1.msra.mxu0 0.0
    %3103 = vmatprep.subr.mxu0 0.0
    %3104 = vmatpush1.msra.mxu0 0.0
    %3105 = vmatprep.subr.mxu0 0.0
    %3106 = vmatpush1.msra.mxu0 0.0
    %3107 = vmatprep.subr.mxu0 0.0
    %3108 = vmatpush1.msra.mxu0 0.0
    %3109 = vmatprep.subr.mxu0 0.0
    %3110 = vmatpush1.msra.mxu0 0.0
    %3111 = vmatprep.subr.mxu0 0.0
    %3112 = vmatpush1.msra.mxu0 0.0
    %3113 = vmatprep.subr.mxu0 0.0
    %3114 = vmatpush1.msra.mxu0 0.0
    %3115 = vmatprep.subr.mxu0 0.0
    %3116 = vmatpush1.msra.mxu0 0.0
    %3117 = vmatprep.subr.mxu0 0.0
    %3118 = vmatpush1.msra.mxu0 0.0
    %3119 = vmatprep.subr.mxu0 0.0
    %3120 = vmatpush1.msra.mxu0 0.0
    %3121 = vmatprep.subr.mxu0 0.0
    %3122 = vmatpush1.msra.mxu0 0.0
    %3123 = vmatprep.subr.mxu0 0.0
    %3124 = vmatpush1.msra.mxu0 0.0
    %3125 = vmatprep.subr.mxu0 0.0
    %3126 = vmatpush1.msra.mxu0 0.0
    %3127 = vmatprep.subr.mxu0 0.0
    %3128 = vmatpush1.msra.mxu0 0.0
    %3129 = vmatprep.subr.mxu0 0.0
    %3130 = vmatpush1.msra.mxu0 0.0
    %3131 = vmatprep.subr.mxu0 0.0
    %3132 = vmatpush1.msra.mxu0 0.0
    %3133 = vmatprep.subr.mxu0 0.0
    %3134 = vmatpush1.msra.mxu0 0.0
    %3135 = vmatprep.subr.mxu0 0.0
    %3136 = vmatpush1.msra.mxu0 0.0
    %3137 = vmatprep.subr.mxu0 0.0
    %3138 = vmatpush1.msra.mxu0 0.0
    %3139 = vmatprep.subr.mxu0 0.0
    %3140 = vmatpush1.msra.mxu0 0.0
    %3141 = vmatprep.subr.mxu0 0.0
    %3142 = vmatpush1.msra.mxu0 0.0
    %3143 = vmatprep.subr.mxu0 0.0
    %3144 = vmatpush1.msra.mxu0 0.0
    %3145 = vmatprep.subr.mxu0 0.0
    %3146 = vmatpush1.msra.mxu0 0.0
    %3147 = vmatprep.subr.mxu0 0.0
    %3148 = vmatpush1.msra.mxu0 0.0
    %3149 = vmatprep.mubr.f32.mxu0 0.0
    %3150 = vmatmul.mubr.f32.gmra.mrb[0].mxu0 %v3083
    %v3151 = vpop.f32.mrb[0].mxu0
    %v3152 = vadd.f32 0.0, %v3151
    %v3153 = vpop.f32.mrb[0].mxu0
    %3154 = vdwg.mxu0
    %v3156 = vsel %vm2628, %v2714, 0
    %3158 = vmatprep.subr.mxu0 0.0
    %3159 = vmatpush1.msra.mxu0 %v1925
    %3160 = vmatprep.subr.mxu0 0.0
    %3161 = vmatpush1.msra.mxu0 %v1993
    %3162 = vmatprep.subr.mxu0 0.0
    %3163 = vmatpush1.msra.mxu0 0.0
    %3164 = vmatprep.subr.mxu0 0.0
    %3165 = vmatpush1.msra.mxu0 0.0
    %3166 = vmatprep.subr.mxu0 0.0
    %3167 = vmatpush1.msra.mxu0 0.0
    %3168 = vmatprep.subr.mxu0 0.0
    %3169 = vmatpush1.msra.mxu0 0.0
    %3170 = vmatprep.subr.mxu0 0.0
    %3171 = vmatpush1.msra.mxu0 0.0
    %3172 = vmatprep.subr.mxu0 0.0
    %3173 = vmatpush1.msra.mxu0 0.0
    %3174 = vmatprep.subr.mxu0 0.0
    %3175 = vmatpush1.msra.mxu0 0.0
    %3176 = vmatprep.subr.mxu0 0.0
    %3177 = vmatpush1.msra.mxu0 0.0
    %3178 = vmatprep.subr.mxu0 0.0
    %3179 = vmatpush1.msra.mxu0 0.0
    %3180 = vmatprep.subr.mxu0 0.0
    %3181 = vmatpush1.msra.mxu0 0.0
    %3182 = vmatprep.subr.mxu0 0.0
    %3183 = vmatpush1.msra.mxu0 0.0
    %3184 = vmatprep.subr.mxu0 0.0
    %3185 = vmatpush1.msra.mxu0 0.0
    %3186 = vmatprep.subr.mxu0 0.0
    %3187 = vmatpush1.msra.mxu0 0.0
    %3188 = vmatprep.subr.mxu0 0.0
    %3189 = vmatpush1.msra.mxu0 0.0
    %3190 = vmatprep.subr.mxu0 0.0
    %3191 = vmatpush1.msra.mxu0 0.0
    %3192 = vmatprep.subr.mxu0 0.0
    %3193 = vmatpush1.msra.mxu0 0.0
    %3194 = vmatprep.subr.mxu0 0.0
    %3195 = vmatpush1.msra.mxu0 0.0
    %3196 = vmatprep.subr.mxu0 0.0
    %3197 = vmatpush1.msra.mxu0 0.0
    %3198 = vmatprep.subr.mxu0 0.0
    %3199 = vmatpush1.msra.mxu0 0.0
    %3200 = vmatprep.subr.mxu0 0.0
    %3201 = vmatpush1.msra.mxu0 0.0
    %3202 = vmatprep.subr.mxu0 0.0
    %3203 = vmatpush1.msra.mxu0 0.0
    %3204 = vmatprep.subr.mxu0 0.0
    %3205 = vmatpush1.msra.mxu0 0.0
    %3206 = vmatprep.subr.mxu0 0.0
    %3207 = vmatpush1.msra.mxu0 0.0
    %3208 = vmatprep.subr.mxu0 0.0
    %3209 = vmatpush1.msra.mxu0 0.0
    %3210 = vmatprep.subr.mxu0 0.0
    %3211 = vmatpush1.msra.mxu0 0.0
    %3212 = vmatprep.subr.mxu0 0.0
    %3213 = vmatpush1.msra.mxu0 0.0
    %3214 = vmatprep.subr.mxu0 0.0
    %3215 = vmatpush1.msra.mxu0 0.0
    %3216 = vmatprep.subr.mxu0 0.0
    %3217 = vmatpush1.msra.mxu0 0.0
    %3218 = vmatprep.subr.mxu0 0.0
    %3219 = vmatpush1.msra.mxu0 0.0
    %3220 = vmatprep.subr.mxu0 0.0
    %3221 = vmatpush1.msra.mxu0 0.0
    %3222 = vmatprep.mubr.f32.mxu0 0.0
    %3223 = vmatmul.mubr.f32.gmra.mrb[0].mxu0 %v3156
    %v3224 = vpop.f32.mrb[0].mxu0
    %v3225 = vadd.f32 0.0, %v3224
    %v3226 = vpop.f32.mrb[0].mxu0
    %3227 = vdwg.mxu0
    %v3229 = vsel %vm2628, %v2716, 0
    %3231 = vmatprep.subr.mxu0 0.0
    %3232 = vmatpush1.msra.mxu0 %v1926
    %3233 = vmatprep.subr.mxu0 0.0
    %3234 = vmatpush1.msra.mxu0 %v1994
    %3235 = vmatprep.subr.mxu0 0.0
    %3236 = vmatpush1.msra.mxu0 0.0
    %3237 = vmatprep.subr.mxu0 0.0
    %3238 = vmatpush1.msra.mxu0 0.0
    %3239 = vmatprep.subr.mxu0 0.0
    %3240 = vmatpush1.msra.mxu0 0.0
    %3241 = vmatprep.subr.mxu0 0.0
    %3242 = vmatpush1.msra.mxu0 0.0
    %3243 = vmatprep.subr.mxu0 0.0
    %3244 = vmatpush1.msra.mxu0 0.0
    %3245 = vmatprep.subr.mxu0 0.0
    %3246 = vmatpush1.msra.mxu0 0.0
    %3247 = vmatprep.subr.mxu0 0.0
    %3248 = vmatpush1.msra.mxu0 0.0
    %3249 = vmatprep.subr.mxu0 0.0
    %3250 = vmatpush1.msra.mxu0 0.0
    %3251 = vmatprep.subr.mxu0 0.0
    %3252 = vmatpush1.msra.mxu0 0.0
    %3253 = vmatprep.subr.mxu0 0.0
    %3254 = vmatpush1.msra.mxu0 0.0
    %3255 = vmatprep.subr.mxu0 0.0
    %3256 = vmatpush1.msra.mxu0 0.0
    %3257 = vmatprep.subr.mxu0 0.0
    %3258 = vmatpush1.msra.mxu0 0.0
    %3259 = vmatprep.subr.mxu0 0.0
    %3260 = vmatpush1.msra.mxu0 0.0
    %3261 = vmatprep.subr.mxu0 0.0
    %3262 = vmatpush1.msra.mxu0 0.0
    %3263 = vmatprep.subr.mxu0 0.0
    %3264 = vmatpush1.msra.mxu0 0.0
    %3265 = vmatprep.subr.mxu0 0.0
    %3266 = vmatpush1.msra.mxu0 0.0
    %3267 = vmatprep.subr.mxu0 0.0
    %3268 = vmatpush1.msra.mxu0 0.0
    %3269 = vmatprep.subr.mxu0 0.0
    %3270 = vmatpush1.msra.mxu0 0.0
    %3271 = vmatprep.subr.mxu0 0.0
    %3272 = vmatpush1.msra.mxu0 0.0
    %3273 = vmatprep.subr.mxu0 0.0
    %3274 = vmatpush1.msra.mxu0 0.0
    %3275 = vmatprep.subr.mxu0 0.0
    %3276 = vmatpush1.msra.mxu0 0.0
    %3277 = vmatprep.subr.mxu0 0.0
    %3278 = vmatpush1.msra.mxu0 0.0
    %3279 = vmatprep.subr.mxu0 0.0
    %3280 = vmatpush1.msra.mxu0 0.0
    %3281 = vmatprep.subr.mxu0 0.0
    %3282 = vmatpush1.msra.mxu0 0.0
    %3283 = vmatprep.subr.mxu0 0.0
    %3284 = vmatpush1.msra.mxu0 0.0
    %3285 = vmatprep.subr.mxu0 0.0
    %3286 = vmatpush1.msra.mxu0 0.0
    %3287 = vmatprep.subr.mxu0 0.0
    %3288 = vmatpush1.msra.mxu0 0.0
    %3289 = vmatprep.subr.mxu0 0.0
    %3290 = vmatpush1.msra.mxu0 0.0
    %3291 = vmatprep.subr.mxu0 0.0
    %3292 = vmatpush1.msra.mxu0 0.0
    %3293 = vmatprep.subr.mxu0 0.0
    %3294 = vmatpush1.msra.mxu0 0.0
    %3295 = vmatprep.mubr.f32.mxu0 0.0
    %3296 = vmatmul.mubr.f32.gmra.mrb[0].mxu0 %v3229
    %v3297 = vpop.f32.mrb[0].mxu0
    %v3298 = vadd.f32 0.0, %v3297
    %v3299 = vpop.f32.mrb[0].mxu0
    %3300 = vdwg.mxu0
    %v3301 = vcombine.low %v2787, %v2933
    %v3302 = vcombine.high %v2787, %v2933
    %v3304 = vunpack.c.l.s4 1983009808
    %v3305 = vunpack.c.0.s8 %v3304
    %v3306 = vlaneseq
    %v3307 = vshrl.u32 %v3306, 7
    %v3308 = vsub.s32 %v3305, %v3307
    %v3309 = vrot.slane %v3301, %v3308
    %v3311 = vunpack.c.l.s4 1983009808
    %v3312 = vunpack.c.0.s8 %v3311
    %v3313 = vlaneseq
    %v3314 = vshrl.u32 %v3313, 7
    %v3315 = vsub.s32 %v3312, %v3314
    %v3316 = vrot.slane %v3302, %v3315
    %v3317 = vcombine.low %v2860, %v3006
    %v3318 = vcombine.high %v2860, %v3006
    %v3320 = vunpack.c.l.s4 1983009808
    %v3321 = vunpack.c.0.s8 %v3320
    %v3322 = vlaneseq
    %v3323 = vshrl.u32 %v3322, 7
    %v3324 = vsub.s32 %v3321, %v3323
    %v3325 = vrot.slane %v3317, %v3324
    %v3327 = vunpack.c.l.s4 1983009808
    %v3328 = vunpack.c.0.s8 %v3327
    %v3329 = vlaneseq
    %v3330 = vshrl.u32 %v3329, 7
    %v3331 = vsub.s32 %v3328, %v3330
    %v3332 = vrot.slane %v3318, %v3331
    %v3333 = vcombine.low %v3309, %v3325
    %v3334 = vcombine.high %v3309, %v3325
    %v3336 = vunpack.c.l.s4 1934713408
    %v3337 = vunpack.c.0.s8 %v3336
    %v3338 = vlaneseq
    %v3339 = vshrl.u32 %v3338, 7
    %v3340 = vsub.s32 %v3337, %v3339
    %v3341 = vrot.slane %v3333, %v3340
    %v3343 = vunpack.c.l.s4 1934713408
    %v3344 = vunpack.c.0.s8 %v3343
    %v3345 = vlaneseq
    %v3346 = vshrl.u32 %v3345, 7
    %v3347 = vsub.s32 %v3344, %v3346
    %v3348 = vrot.slane %v3334, %v3347
    %v3349 = vcombine.low %v3316, %v3332
    %v3350 = vcombine.high %v3316, %v3332
    %v3352 = vunpack.c.l.s4 1934713408
    %v3353 = vunpack.c.0.s8 %v3352
    %v3354 = vlaneseq
    %v3355 = vshrl.u32 %v3354, 7
    %v3356 = vsub.s32 %v3353, %v3355
    %v3357 = vrot.slane %v3349, %v3356
    %v3359 = vunpack.c.l.s4 1934713408
    %v3360 = vunpack.c.0.s8 %v3359
    %v3361 = vlaneseq
    %v3362 = vshrl.u32 %v3361, 7
    %v3363 = vsub.s32 %v3360, %v3362
    %v3364 = vrot.slane %v3350, %v3363
    %v3365 = vcombine.high %v3341, 0.0
    %v3366 = vcombine.high %v3348, 0.0
    %v3367 = vcombine.high %v3357, 0.0
    %v3368 = vcombine.high %v3364, 0.0
    %v3369 = vcombine.low %v3079, %v3225
    %v3370 = vcombine.high %v3079, %v3225
    %v3372 = vunpack.c.l.s4 1983009808
    %v3373 = vunpack.c.0.s8 %v3372
    %v3374 = vlaneseq
    %v3375 = vshrl.u32 %v3374, 7
    %v3376 = vsub.s32 %v3373, %v3375
    %v3377 = vrot.slane %v3369, %v3376
    %v3379 = vunpack.c.l.s4 1983009808
    %v3380 = vunpack.c.0.s8 %v3379
    %v3381 = vlaneseq
    %v3382 = vshrl.u32 %v3381, 7
    %v3383 = vsub.s32 %v3380, %v3382
    %v3384 = vrot.slane %v3370, %v3383
    %v3385 = vcombine.low %v3152, %v3298
    %v3386 = vcombine.high %v3152, %v3298
    %v3388 = vunpack.c.l.s4 1983009808
    %v3389 = vunpack.c.0.s8 %v3388
    %v3390 = vlaneseq
    %v3391 = vshrl.u32 %v3390, 7
    %v3392 = vsub.s32 %v3389, %v3391
    %v3393 = vrot.slane %v3385, %v3392
    %v3395 = vunpack.c.l.s4 1983009808
    %v3396 = vunpack.c.0.s8 %v3395
    %v3397 = vlaneseq
    %v3398 = vshrl.u32 %v3397, 7
    %v3399 = vsub.s32 %v3396, %v3398
    %v3400 = vrot.slane %v3386, %v3399
    %v3401 = vcombine.low %v3377, %v3393
    %v3402 = vcombine.high %v3377, %v3393
    %v3404 = vunpack.c.l.s4 1934713408
    %v3405 = vunpack.c.0.s8 %v3404
    %v3406 = vlaneseq
    %v3407 = vshrl.u32 %v3406, 7
    %v3408 = vsub.s32 %v3405, %v3407
    %v3409 = vrot.slane %v3401, %v3408
    %v3411 = vunpack.c.l.s4 1934713408
    %v3412 = vunpack.c.0.s8 %v3411
    %v3413 = vlaneseq
    %v3414 = vshrl.u32 %v3413, 7
    %v3415 = vsub.s32 %v3412, %v3414
    %v3416 = vrot.slane %v3402, %v3415
    %v3417 = vcombine.low %v3384, %v3400
    %v3418 = vcombine.high %v3384, %v3400
    %v3420 = vunpack.c.l.s4 1934713408
    %v3421 = vunpack.c.0.s8 %v3420
    %v3422 = vlaneseq
    %v3423 = vshrl.u32 %v3422, 7
    %v3424 = vsub.s32 %v3421, %v3423
    %v3425 = vrot.slane %v3417, %v3424
    %v3427 = vunpack.c.l.s4 1934713408
    %v3428 = vunpack.c.0.s8 %v3427
    %v3429 = vlaneseq
    %v3430 = vshrl.u32 %v3429, 7
    %v3431 = vsub.s32 %v3428, %v3430
    %v3432 = vrot.slane %v3418, %v3431
    %v3433 = vcombine.high %v3409, 0.0
    %v3434 = vcombine.high %v3416, 0.0
    %v3435 = vcombine.high %v3425, 0.0
    %v3436 = vcombine.high %v3432, 0.0
    %v3437 = vcombine.low %v3341, %v3348
    %v3439 = vunpack.c.l.s4 1983009808
    %v3440 = vunpack.c.0.s8 %v3439
    %v3441 = vlaneseq
    %v3442 = vshrl.u32 %v3441, 7
    %v3443 = vsub.s32 %v3440, %v3442
    %v3444 = vrot.slane %v3437, %v3443
    %v3445 = vcombine.low %v3365, %v3366
    %v3447 = vunpack.c.l.s4 1983009808
    %v3448 = vunpack.c.0.s8 %v3447
    %v3449 = vlaneseq
    %v3450 = vshrl.u32 %v3449, 7
    %v3451 = vsub.s32 %v3448, %v3450
    %v3452 = vrot.slane %v3445, %v3451
    %v3453 = vcombine.low %v3357, %v3364
    %v3455 = vunpack.c.l.s4 1983009808
    %v3456 = vunpack.c.0.s8 %v3455
    %v3457 = vlaneseq
    %v3458 = vshrl.u32 %v3457, 7
    %v3459 = vsub.s32 %v3456, %v3458
    %v3460 = vrot.slane %v3453, %v3459
    %v3461 = vcombine.low %v3367, %v3368
    %v3463 = vunpack.c.l.s4 1983009808
    %v3464 = vunpack.c.0.s8 %v3463
    %v3465 = vlaneseq
    %v3466 = vshrl.u32 %v3465, 7
    %v3467 = vsub.s32 %v3464, %v3466
    %v3468 = vrot.slane %v3461, %v3467
    %v3469 = vcombine.low %v3444, %v3452
    %v3470 = vcombine.high %v3444, %v3452
    %v3472 = vunpack.c.l.s4 1934713408
    %v3473 = vunpack.c.0.s8 %v3472
    %v3474 = vlaneseq
    %v3475 = vshrl.u32 %v3474, 7
    %v3476 = vsub.s32 %v3473, %v3475
    %v3477 = vrot.slane %v3469, %v3476
    %v3479 = vunpack.c.l.s4 1934713408
    %v3480 = vunpack.c.0.s8 %v3479
    %v3481 = vlaneseq
    %v3482 = vshrl.u32 %v3481, 7
    %v3483 = vsub.s32 %v3480, %v3482
    %v3484 = vrot.slane %v3470, %v3483
    %v3485 = vcombine.low %v3460, %v3468
    %v3486 = vcombine.high %v3460, %v3468
    %v3488 = vunpack.c.l.s4 1934713408
    %v3489 = vunpack.c.0.s8 %v3488
    %v3490 = vlaneseq
    %v3491 = vshrl.u32 %v3490, 7
    %v3492 = vsub.s32 %v3489, %v3491
    %v3493 = vrot.slane %v3485, %v3492
    %v3495 = vunpack.c.l.s4 1934713408
    %v3496 = vunpack.c.0.s8 %v3495
    %v3497 = vlaneseq
    %v3498 = vshrl.u32 %v3497, 7
    %v3499 = vsub.s32 %v3496, %v3498
    %v3500 = vrot.slane %v3486, %v3499
    %v3501 = vcombine.low %v3477, %v3493
    %v3502 = vcombine.high %v3477, %v3493
    %v3503 = vcombine.low %v3484, %v3500
    %v3504 = vcombine.high %v3484, %v3500
    %v3505 = vcombine.low %v3409, %v3416
    %v3507 = vunpack.c.l.s4 1983009808
    %v3508 = vunpack.c.0.s8 %v3507
    %v3509 = vlaneseq
    %v3510 = vshrl.u32 %v3509, 7
    %v3511 = vsub.s32 %v3508, %v3510
    %v3512 = vrot.slane %v3505, %v3511
    %v3513 = vcombine.low %v3433, %v3434
    %v3515 = vunpack.c.l.s4 1983009808
    %v3516 = vunpack.c.0.s8 %v3515
    %v3517 = vlaneseq
    %v3518 = vshrl.u32 %v3517, 7
    %v3519 = vsub.s32 %v3516, %v3518
    %v3520 = vrot.slane %v3513, %v3519
    %v3521 = vcombine.low %v3425, %v3432
    %v3523 = vunpack.c.l.s4 1983009808
    %v3524 = vunpack.c.0.s8 %v3523
    %v3525 = vlaneseq
    %v3526 = vshrl.u32 %v3525, 7
    %v3527 = vsub.s32 %v3524, %v3526
    %v3528 = vrot.slane %v3521, %v3527
    %v3529 = vcombine.low %v3435, %v3436
    %v3531 = vunpack.c.l.s4 1983009808
    %v3532 = vunpack.c.0.s8 %v3531
    %v3533 = vlaneseq
    %v3534 = vshrl.u32 %v3533, 7
    %v3535 = vsub.s32 %v3532, %v3534
    %v3536 = vrot.slane %v3529, %v3535
    %v3537 = vcombine.low %v3512, %v3520
    %v3538 = vcombine.high %v3512, %v3520
    %v3540 = vunpack.c.l.s4 1934713408
    %v3541 = vunpack.c.0.s8 %v3540
    %v3542 = vlaneseq
    %v3543 = vshrl.u32 %v3542, 7
    %v3544 = vsub.s32 %v3541, %v3543
    %v3545 = vrot.slane %v3537, %v3544
    %v3547 = vunpack.c.l.s4 1934713408
    %v3548 = vunpack.c.0.s8 %v3547
    %v3549 = vlaneseq
    %v3550 = vshrl.u32 %v3549, 7
    %v3551 = vsub.s32 %v3548, %v3550
    %v3552 = vrot.slane %v3538, %v3551
    %v3553 = vcombine.low %v3528, %v3536
    %v3554 = vcombine.high %v3528, %v3536
    %v3556 = vunpack.c.l.s4 1934713408
    %v3557 = vunpack.c.0.s8 %v3556
    %v3558 = vlaneseq
    %v3559 = vshrl.u32 %v3558, 7
    %v3560 = vsub.s32 %v3557, %v3559
    %v3561 = vrot.slane %v3553, %v3560
    %v3563 = vunpack.c.l.s4 1934713408
    %v3564 = vunpack.c.0.s8 %v3563
    %v3565 = vlaneseq
    %v3566 = vshrl.u32 %v3565, 7
    %v3567 = vsub.s32 %v3564, %v3566
    %v3568 = vrot.slane %v3554, %v3567
    %v3569 = vcombine.low %v3545, %v3561
    %v3570 = vcombine.high %v3545, %v3561
    %v3571 = vcombine.low %v3552, %v3568
    %v3572 = vcombine.high %v3552, %v3568
    %3575 = vrot.lane.b32.xlu0 %v3502, 8
    %v3576 = vpop.permute.xlu0 %3575
    %3577 = vrot.lane.b32.xlu0 %v3570, 8
    %v3578 = vpop.permute.xlu0 %3577
    %3583 = vrot.lane.b32.xlu0 %v3503, 16
    %v3584 = vpop.permute.xlu0 %3583
    %3585 = vrot.lane.b32.xlu0 %v3571, 16
    %v3586 = vpop.permute.xlu0 %3585
    %3591 = vrot.lane.b32.xlu0 %v3504, 24
    %v3592 = vpop.permute.xlu0 %3591
    %3593 = vrot.lane.b32.xlu0 %v3572, 24
    %v3594 = vpop.permute.xlu0 %3593
    %v3597 = vsel %vm1995, %v3501, %v3576
    %v3598 = vsel %vm1995, %v3569, %v3578
    %v3599 = vsel %vm2628, %v3597, %v3584
    %v3600 = vsel %vm2628, %v3598, %v3586
    %vm3601 = vcmask 195584
    %v3602 = vsel %vm3601, %v3599, %v3592
    %v3603 = vsel %vm3601, %v3600, %v3594
    %v3604 = vld [vmem:[#allocation11] sm:$0xff]
    %v3605 = vld [vmem:[#allocation11 + $0x8] sm:$0xff]
    %v3606 = vld [vmem:[#allocation11 + $0x10] sm:$0xff]
    %v3607 = vld [vmem:[#allocation11 + $0x18] sm:$0xff]
    %v3608 = vld [vmem:[#allocation13] sm:$0x1]
    %v3610 = vlaneseq
    %v3611 = vshrl.u32 %v3610, 7
    %v3612 = vsub.s32 0, %v3611
    %v3613 = vrot.slane %v3608, %v3612
    %v3616 = vsel %vm235, %v3602, 0
    %v3619 = vsel %vm235, %v3603, 0
    %3621 = vmatprep.subr.mxu0 0.0
    %3622 = vmatpush1.msra.mxu0 %v3604
    %3623 = vmatprep.subr.mxu0 0.0
    %3624 = vmatpush1.msra.mxu0 %v3605
    %3625 = vmatprep.subr.mxu0 0.0
    %3626 = vmatpush1.msra.mxu0 %v3606
    %3627 = vmatprep.subr.mxu0 0.0
    %3628 = vmatpush1.msra.mxu0 %v3607
    %3629 = vmatprep.subr.mxu0 0.0
    %3630 = vmatpush1.msra.mxu0 0.0
    %3631 = vmatprep.subr.mxu0 0.0
    %3632 = vmatpush1.msra.mxu0 0.0
    %3633 = vmatprep.subr.mxu0 0.0
    %3634 = vmatpush1.msra.mxu0 0.0
    %3635 = vmatprep.subr.mxu0 0.0
    %3636 = vmatpush1.msra.mxu0 0.0
    %3637 = vmatprep.subr.mxu0 0.0
    %3638 = vmatpush1.msra.mxu0 0.0
    %3639 = vmatprep.subr.mxu0 0.0
    %3640 = vmatpush1.msra.mxu0 0.0
    %3641 = vmatprep.subr.mxu0 0.0
    %3642 = vmatpush1.msra.mxu0 0.0
    %3643 = vmatprep.subr.mxu0 0.0
    %3644 = vmatpush1.msra.mxu0 0.0
    %3645 = vmatprep.subr.mxu0 0.0
    %3646 = vmatpush1.msra.mxu0 0.0
    %3647 = vmatprep.subr.mxu0 0.0
    %3648 = vmatpush1.msra.mxu0 0.0
    %3649 = vmatprep.subr.mxu0 0.0
    %3650 = vmatpush1.msra.mxu0 0.0
    %3651 = vmatprep.subr.mxu0 0.0
    %3652 = vmatpush1.msra.mxu0 0.0
    %3653 = vmatprep.subr.mxu0 0.0
    %3654 = vmatpush1.msra.mxu0 0.0
    %3655 = vmatprep.subr.mxu0 0.0
    %3656 = vmatpush1.msra.mxu0 0.0
    %3657 = vmatprep.subr.mxu0 0.0
    %3658 = vmatpush1.msra.mxu0 0.0
    %3659 = vmatprep.subr.mxu0 0.0
    %3660 = vmatpush1.msra.mxu0 0.0
    %3661 = vmatprep.subr.mxu0 0.0
    %3662 = vmatpush1.msra.mxu0 0.0
    %3663 = vmatprep.subr.mxu0 0.0
    %3664 = vmatpush1.msra.mxu0 0.0
    %3665 = vmatprep.subr.mxu0 0.0
    %3666 = vmatpush1.msra.mxu0 0.0
    %3667 = vmatprep.subr.mxu0 0.0
    %3668 = vmatpush1.msra.mxu0 0.0
    %3669 = vmatprep.subr.mxu0 0.0
    %3670 = vmatpush1.msra.mxu0 0.0
    %3671 = vmatprep.subr.mxu0 0.0
    %3672 = vmatpush1.msra.mxu0 0.0
    %3673 = vmatprep.subr.mxu0 0.0
    %3674 = vmatpush1.msra.mxu0 0.0
    %3675 = vmatprep.subr.mxu0 0.0
    %3676 = vmatpush1.msra.mxu0 0.0
    %3677 = vmatprep.subr.mxu0 0.0
    %3678 = vmatpush1.msra.mxu0 0.0
    %3679 = vmatprep.subr.mxu0 0.0
    %3680 = vmatpush1.msra.mxu0 0.0
    %3681 = vmatprep.subr.mxu0 0.0
    %3682 = vmatpush1.msra.mxu0 0.0
    %3683 = vmatprep.subr.mxu0 0.0
    %3684 = vmatpush1.msra.mxu0 0.0
    %3685 = vmatprep.mubr.f32.mxu0 0.0
    %3686 = vmatmul.mubr.f32.gmra.mrb[0].mxu0 %v3616
    %v3687 = vpop.f32.mrb[0].mxu0
    %v3688 = vadd.f32 %v3613, %v3687
    %v3689 = vpop.f32.mrb[0].mxu0
    %3690 = vmatprep.mubr.f32.mxu0 0.0
    %3691 = vmatmul.mubr.f32.gmra.mrb[0].mxu0 %v3619
    %v3692 = vpop.f32.mrb[0].mxu0
    %v3693 = vadd.f32 %v3613, %v3692
    %v3694 = vpop.f32.mrb[0].mxu0
    %3695 = vdwg.mxu0
    %v3696 = vld [vmem:[#allocation17] sm:$0xff]
    %v3697 = vld [vmem:[#allocation17 + $0x8] sm:$0xff]
    %v3698 = vadd.f32 %v3696, %v3688
    %v3699 = vadd.f32 %v3697, %v3693
    %v3700 = vsel %vm235, %v3698, 0.0
    %3701 = vadd.xlane.f32.xlu0 %v3700
    %v3702 = vpop.xlane.xlu0 %3701
    %v3703 = vsel %vm235, %v3699, 0.0
    %3704 = vadd.xlane.f32.xlu0 %v3703
    %v3705 = vpop.xlane.xlu0 %3704
    %v3706 = vrcp.pop 32.0
    %v3707 = vmul.f32 %v3702, %v3706
    %v3708 = vmul.f32 %v3705, %v3706
    %v3709 = vsub.f32 %v3698, %v3707
    %v3710 = vsub.f32 %v3699, %v3708
    %v3711 = vmul.f32 %v3709, %v3709
    %v3712 = vmul.f32 %v3710, %v3710
    %v3713 = vsel %vm235, %v3711, 0.0
    %3714 = vadd.xlane.f32.xlu0 %v3713
    %v3715 = vpop.xlane.xlu0 %3714
    %v3716 = vsel %vm235, %v3712, 0.0
    %3717 = vadd.xlane.f32.xlu0 %v3716
    %v3718 = vpop.xlane.xlu0 %3717
    %v3719 = vmul.f32 %v3715, %v3706
    %v3720 = vmul.f32 %v3718, %v3706
    %v3721 = vadd.f32 %v3719, 1e-05
    %v3722 = vadd.f32 %v3720, 1e-05
    %v3723 = vrsqrt.pop %v3721
    %v3724 = vrsqrt.pop %v3722
    %v3725 = vmul.f32 %v3709, %v3723
    %v3726 = vmul.f32 %v3710, %v3724
    %v3728 = vlaneseq
    %v3729 = vshrl.u32 %v3728, 7
    %v3730 = vsub.s32 0, %v3729
    %v3731 = vrot.slane %v204, %v3730
    %v3733 = vmul.f32 %v3725, %v3731
    %v3734 = vmul.f32 %v3726, %v3731
    %v3736 = vlaneseq
    %v3737 = vshrl.u32 %v3736, 7
    %v3738 = vsub.s32 0, %v3737
    %v3739 = vrot.slane %v205, %v3738
    %v3741 = vadd.f32 %v3733, %v3739
    %v3742 = vadd.f32 %v3734, %v3739
    %3743 = vst.msk [vmem:[#allocation22] sm:$0xff] %vm235, %v3741
    %3744 = vst.msk [vmem:[#allocation22 + $0x8] sm:$0xff] %vm235, %v3742
    // Predicated region
    $region110: #{tpu_custom_call.1} parent=1 // pred_check
      _
    $region111: #{tpu_custom_call.1} parent=1 // pred_check_branch
      %3746 = sbr.rel (0) target = $region113
    $region112: #{tpu_custom_call.1} parent=1 // pred_region
      %s3748 = ssub.s32 256, 256
      %3749 = vsyncadd [#allocation4], %s3748
      %s3750 = sshll.u32 [#allocation22], 4
      %s3751 = int_to_ptr.vmem [resolvable:$true] %s3750
      %3756 = dma.vmem_to_hbm [thread:$0]  %s3751, 256, %s15, [#allocation4], 128, 128, 8
    $region113: #{tpu_custom_call.1} parent=1 // pred_fallthru
      _
    // Predicated region
    $region114: #{tpu_custom_call.1} parent=1 // pred_check
      _
    $region115: #{tpu_custom_call.1} parent=1 // pred_check_branch
      %3758 = sbr.rel (0) target = $region117
    $region116: #{tpu_custom_call.1} parent=1 // pred_region
      %3759 = dma.done [#allocation4], 256
    $region117: #{tpu_custom_call.1} parent=1 // pred_fallthru
      _
    %3760 = vsyncpa [#allocation3], 1
    %3761 = vsyncpa [#allocation6], 1
    %3762 = vsyncpa [#allocation9], 1
    %3763 = vsyncpa [#allocation12], 1
    %3764 = vsyncpa [#allocation15], 1
    %3765 = vsyncpa [#allocation18], 1
    %3766 = vsyncpa [#allocation21], 1
    %3767 = vsyncpa [#allocation4], 1

</llo_original>
